<compile_context>
chip_gen: v7x
topology: tpu7x:2x2x1
jax: 0.10.0
libtpu: 0.0.40
codegen_flags: <defaults>
</compile_context>

<pallas_src>
import functools

import jax
import jax.numpy as jnp
from jax.experimental import pallas as pl
from jax.experimental.pallas import tpu as pltpu


_CPAD = 128   # conv outputs are stored lane-dense (128 channels, zero padded)


def _round_up(x, m):
    return (x + m - 1) // m * m


def _pick_tm(m, tm_max=256):
    """M tile: minimize padded rows, prefer >=2 tiles (megacore), 16-aligned."""
    best = None
    for tm in (16, 32, 64, 128, 256):
        if tm > tm_max:
            break
        mp = _round_up(m, tm)
        key = (mp, 0 if mp // tm >= 2 else 1, -tm)
        if best is None or key < best[0]:
            best = (key, tm, mp)
    return best[1], best[2]


def _vmem_limit(nbytes):
    """Per-call scoped-VMEM limit sized from the real block footprint."""
    return int(min(max(nbytes + (2 << 20), 4 << 20), 48 << 20))


# ----------------------------------------------------------------------------
# Kernel 1: tiled (X @ W) + b with fused ReLU (used for conv1 / conv2).
#   grid = (M_tiles, K_tiles); reduction axis last & "arbitrary", M "parallel".
#   bf16 MXU operands, f32 VMEM accumulator, bf16 lane-dense output.
# ----------------------------------------------------------------------------
def _mm_bias_kernel(x_ref, w_ref, b_ref, o_ref, acc_ref, *, relu):
    k = pl.program_id(1)

    @pl.when(k == 0)
    def _():
        acc_ref[...] = jnp.zeros_like(acc_ref)

    acc_ref[...] += jnp.dot(x_ref[...], w_ref[...],
                            preferred_element_type=jnp.float32)

    @pl.when(k == pl.num_programs(1) - 1)
    def _():
        acc = acc_ref[...] + b_ref[...]
        if relu:
            acc = jnp.maximum(acc, 0.0)
        o_ref[...] = acc.astype(o_ref.dtype)


def matmul_bias(x, w, b, *, relu, out_dtype=jnp.bfloat16, tm_max=256,
                tk_max=1024):
    """x (M,K) bf16, w (K,N) bf16 (N % 128 == 0), b (N,) f32 -> (M,N)."""
    M, K = x.shape
    Kw, N = w.shape
    assert K == Kw and N % 128 == 0, (K, Kw, N)

    tm, Mp = _pick_tm(M, tm_max)
    Kp = _round_up(K, 128)
    tk = Kp if Kp <= tk_max else 512
    Kp = _round_up(K, tk)
    gm, gk = Mp // tm, Kp // tk

    x = x.astype(jnp.bfloat16)
    if (Mp, Kp) != (M, K):
        x = jnp.pad(x, ((0, Mp - M), (0, Kp - K)))
    if Kp != K:
        w = jnp.pad(w, ((0, Kp - K), (0, 0)))
    b2 = b.reshape(1, N).astype(jnp.float32)

    out_bytes = jnp.dtype(out_dtype).itemsize
    vmem = _vmem_limit(2 * (tm * tk * 2 + tk * N * 2 + tm * N * out_bytes)
                       + tm * N * 4 + N * 4)

    out = pl.pallas_call(
        functools.partial(_mm_bias_kernel, relu=relu),
        out_shape=jax.ShapeDtypeStruct((Mp, N), out_dtype),
        grid=(gm, gk),
        in_specs=[
            pl.BlockSpec((tm, tk), lambda i, k: (i, k)),
            pl.BlockSpec((tk, N), lambda i, k: (k, 0)),
            pl.BlockSpec((1, N), lambda i, k: (0, 0)),
        ],
        out_specs=pl.BlockSpec((tm, N), lambda i, k: (i, 0)),
        scratch_shapes=[pltpu.VMEM((tm, N), jnp.float32)],
        compiler_params=pltpu.CompilerParams(
            dimension_semantics=("parallel", "arbitrary"),
            vmem_limit_bytes=vmem),
    )(x, w, b2)
    return out if Mp == M else out[:M]


# ----------------------------------------------------------------------------
# Kernel 2: conv3 + both head MLPs fused into one call.
#   Grid = (batch_tiles, conv3_spatial_positions).  For each spatial position p
#   we compute conv3 there (relu((N,K)@(K,64)+b3)) and accumulate its
#   contribution to the fused 1024-wide policy|value stem into a resident f32
#   accumulator; at the last p we apply b1/ReLU and the block-diagonal output
#   heads, producing one lane-dense (N,128) output (policy | value | zeros).
# ----------------------------------------------------------------------------
def _conv3_head_kernel(x_ref, w3_ref, b3_ref, w1_ref, b1_ref, w2_ref, b2_ref,
                       o_ref, acc_ref):
    p = pl.program_id(1)

    @pl.when(p == 0)
    def _():
        acc_ref[...] = jnp.zeros_like(acc_ref)

    # conv3 at this spatial position: (tm, Kp) @ (Kp, 64) + bias, ReLU.
    c3 = jnp.dot(x_ref[...], w3_ref[...], preferred_element_type=jnp.float32)
    c3 = jnp.maximum(c3 + b3_ref[...], 0.0)
    # Accumulate this position's slice of the fused policy|value stem.
    acc_ref[...] += jnp.dot(c3.astype(jnp.bfloat16), w1_ref[...],
                            preferred_element_type=jnp.float32)

    @pl.when(p == pl.num_programs(1) - 1)
    def _():
        h = jnp.maximum(acc_ref[...] + b1_ref[...], 0.0)
        o_ref[...] = (jnp.dot(h.astype(jnp.bfloat16), w2_ref[...],
                              preferred_element_type=jnp.float32)
                      + b2_ref[...])


def conv3_and_heads(patches, w3, b3, w1, b1, w2, b2, *, tm_max=256):
    """patches (P, N, K) bf16 spatial-major conv3 patches; w3 (K, C3) bf16;
    w1 (P, C3, H) bf16; w2 (H, NO) bf16; biases f32.  Returns (N, NO) f32."""
    P, N, K = patches.shape
    Kw, C3 = w3.shape
    Pw, C3w, H = w1.shape
    Hw, NO = w2.shape
    assert K == Kw and P == Pw and C3 == C3w and H == Hw
    assert H % 128 == 0 and NO % 128 == 0 and C3 % 8 == 0

    tm, Np = _pick_tm(N, tm_max)
    Kp = _round_up(K, 128)
    if (Np, Kp) != (N, K):
        patches = jnp.pad(patches, ((0, 0), (0, Np - N), (0, Kp - K)))
    if Kp != K:
        w3 = jnp.pad(w3, ((0, Kp - K), (0, 0)))
    gm = Np // tm

    b3_2 = b3.reshape(1, C3).astype(jnp.float32)
    b1_2 = b1.reshape(1, H).astype(jnp.float32)
    b2_2 = b2.reshape(1, NO).astype(jnp.float32)

    vmem = _vmem_limit(2 * (tm * Kp * 2 + C3 * H * 2 + tm * NO * 4)
                       + Kp * C3 * 2 + H * NO * 2 + tm * H * 4
                       + (C3 + H + NO) * 4)

    out = pl.pallas_call(
        _conv3_head_kernel,
        out_shape=jax.ShapeDtypeStruct((Np, NO), jnp.float32),
        grid=(gm, P),
        in_specs=[
            pl.BlockSpec((None, tm, Kp), lambda i, p: (p, i, 0)),
            pl.BlockSpec((Kp, C3), lambda i, p: (0, 0)),
            pl.BlockSpec((1, C3), lambda i, p: (0, 0)),
            pl.BlockSpec((None, C3, H), lambda i, p: (p, 0, 0)),
            pl.BlockSpec((1, H), lambda i, p: (0, 0)),
            pl.BlockSpec((H, NO), lambda i, p: (0, 0)),
            pl.BlockSpec((1, NO), lambda i, p: (0, 0)),
        ],
        out_specs=pl.BlockSpec((tm, NO), lambda i, p: (i, 0)),
        scratch_shapes=[pltpu.VMEM((tm, H), jnp.float32)],
        compiler_params=pltpu.CompilerParams(
            dimension_semantics=("parallel", "arbitrary"),
            vmem_limit_bytes=vmem),
    )(patches, w3, b3_2, w1, b1_2, w2, b2_2)
    return out if Np == N else out[:N]


# ----------------------------------------------------------------------------
# im2col in channels-last layout (pure XLA data-layout glue, bf16, no compute).
# Patch column order is (kh, kw, c) to match the weight prep below.
# ----------------------------------------------------------------------------
def _im2col_nhwc(x, kh, kw, stride):
    """(N,H,W,C) -> (N*Ho*Wo, kh*kw*C) with rows ordered (n, ho, wo)."""
    N, H, W, C = x.shape
    Ho = (H - kh) // stride + 1
    Wo = (W - kw) // stride + 1
    cols = []
    for i in range(kh):
        for j in range(kw):
            cols.append(x[:, i:i + stride * Ho:stride, j:j + stride * Wo:stride, :])
    col = jnp.stack(cols, axis=3)                      # (N, Ho, Wo, kh*kw, C)
    return col.reshape(N * Ho * Wo, kh * kw * C), Ho, Wo


def _im2col_spatial_major(x, kh, kw, stride):
    """(N,H,W,C) -> (Ho*Wo, N, kh*kw*C): spatial position outermost so the
    fused conv3+head kernel can reduce over positions on its grid axis."""
    N, H, W, C = x.shape
    Ho = (H - kh) // stride + 1
    Wo = (W - kw) // stride + 1
    cols = []
    for i in range(kh):
        for j in range(kw):
            cols.append(x[:, i:i + stride * Ho:stride, j:j + stride * Wo:stride, :])
    col = jnp.stack(cols, axis=3)                      # (N, Ho, Wo, kh*kw, C)
    col = jnp.transpose(col, (1, 2, 0, 3, 4))          # (Ho, Wo, N, kh*kw, C)
    return col.reshape(Ho * Wo, N, kh * kw * C), Ho, Wo


# ----------------------------------------------------------------------------
# Parameter init (PyTorch-default-like) + one-time TPU-layout preparation.
# ----------------------------------------------------------------------------
def _init_conv(key, out_c, in_c, kh, kw):
    k1, k2 = jax.random.split(key)
    bound = 1.0 / float(in_c * kh * kw) ** 0.5
    w = jax.random.uniform(k1, (out_c, in_c, kh, kw), jnp.float32, -bound, bound)
    b = jax.random.uniform(k2, (out_c,), jnp.float32, -bound, bound)
    return w, b


def _init_linear(key, fan_out, fan_in):
    k1, k2 = jax.random.split(key)
    bound = 1.0 / float(fan_in) ** 0.5
    w = jax.random.uniform(k1, (fan_out, fan_in), jnp.float32, -bound, bound)
    b = jax.random.uniform(k2, (fan_out,), jnp.float32, -bound, bound)
    return w, b


def conv_out_hw(input_shape):
    _, H, W = input_shape
    h1, w1 = (H - 8) // 4 + 1, (W - 8) // 4 + 1
    h2, w2 = (h1 - 4) // 2 + 1, (w1 - 4) // 2 + 1
    return h2 - 2, w2 - 2


def init_params(key, input_shape, n_actions):
    C, _, _ = input_shape
    ks = jax.random.split(key, 7)
    params = {}
    params["c1w"], params["c1b"] = _init_conv(ks[0], 32, C, 8, 8)
    params["c2w"], params["c2b"] = _init_conv(ks[1], 64, 32, 4, 4)
    params["c3w"], params["c3b"] = _init_conv(ks[2], 64, 64, 3, 3)
    h3, w3 = conv_out_hw(input_shape)
    conv_out = 64 * h3 * w3
    params["p1w"], params["p1b"] = _init_linear(ks[3], 512, conv_out)
    params["p2w"], params["p2b"] = _init_linear(ks[4], n_actions, 512)
    params["v1w"], params["v1b"] = _init_linear(ks[5], 512, conv_out)
    params["v2w"], params["v2b"] = _init_linear(ks[6], 1, 512)
    return params


def _conv_weight_nhwc(w, out_c_pad=None):
    """PyTorch (OutC, C, kh, kw) -> (kh*kw*C, out_c_pad) bf16 matrix."""
    out_c, c, kh, kw = w.shape
    wk = jnp.transpose(w, (2, 3, 1, 0))                 # (kh, kw, C, OutC)
    if out_c_pad is not None and out_c_pad != out_c:
        wk = jnp.pad(wk, ((0, 0), (0, 0), (0, 0), (0, out_c_pad - out_c)))
        out_c = out_c_pad
    return wk.reshape(kh * kw * c, out_c).astype(jnp.bfloat16)


def prepare_params(params, input_shape, n_actions):
    """One-time transforms: fold /256, channels-last layout, head fusion."""
    h3, w3 = conv_out_hw(input_shape)
    P = h3 * w3
    assert n_actions + 1 <= 128, "packed head assumes n_actions + 1 <= 128"

    pp = {}
    # conv1: fold the x/256 input scaling into the weights; lane-dense output.
    pp["c1w"] = _conv_weight_nhwc(params["c1w"] * (1.0 / 256.0), _CPAD)
    pp["c1b"] = jnp.pad(params["c1b"], (0, _CPAD - 32)).astype(jnp.float32)
    # conv2: K = 4*4*32 = 512 (consumer slices conv1's 32 real channels).
    pp["c2w"] = _conv_weight_nhwc(params["c2w"], _CPAD)
    pp["c2b"] = jnp.pad(params["c2b"], (0, _CPAD - 64)).astype(jnp.float32)
    # conv3 lives inside the fused head kernel: real 64-wide output, no pad.
    pp["c3w"] = _conv_weight_nhwc(params["c3w"])        # (576, 64)
    pp["c3b"] = params["c3b"].astype(jnp.float32)

    # Fused policy|value stem reshaped per conv3 spatial position:
    # (P, 64, 1024).  This permutes PyTorch's (c, h, w) flatten order once at
    # init so the kernel never reorders activations.
    def stem(w_):                                        # (512, 64*h3*w3)
        return jnp.transpose(w_.reshape(512, 64, h3, w3), (2, 3, 1, 0))

    s = jnp.concatenate([stem(params["p1w"]), stem(params["v1w"])], axis=-1)
    pp["w1"] = s.reshape(P, 64, 1024).astype(jnp.bfloat16)
    pp["b1"] = jnp.concatenate([params["p1b"], params["v1b"]]).astype(jnp.float32)

    # Block-diagonal output heads packed into one lane-dense 128-wide output:
    # cols [0:n_actions] = policy logits, col [n_actions] = value, rest zero.
    out_pad = 128
    w2m = jnp.zeros((1024, out_pad), jnp.float32)
    w2m = w2m.at[:512, :n_actions].set(params["p2w"].T)
    w2m = w2m.at[512:, n_actions:n_actions + 1].set(params["v2w"].T)
    pp["w2"] = w2m.astype(jnp.bfloat16)
    b2v = jnp.zeros((out_pad,), jnp.float32)
    b2v = b2v.at[:n_actions].set(params["p2b"])
    b2v = b2v.at[n_actions].set(params["v2b"][0])
    pp["b2"] = b2v
    return pp


# ----------------------------------------------------------------------------
# Forward pass (== AtariA2C.forward)
# ----------------------------------------------------------------------------
def atari_a2c_forward(pp, x, *, n_actions):
    # NCHW -> NHWC once; bf16 activations end-to-end (Atari frames 0..255 are
    # exact in bf16; the /256 scaling is folded into conv1's weights).
    h = jnp.transpose(x, (0, 2, 3, 1)).astype(jnp.bfloat16)
    N = h.shape[0]

    # conv1: 8x8 stride 4  (K = 8*8*C)
    patches, H1, W1 = _im2col_nhwc(h, 8, 8, 4)
    h = matmul_bias(patches, pp["c1w"], pp["c1b"], relu=True)
    h = h.reshape(N, H1, W1, _CPAD)[..., :32]       # drop zero-padded channels

    # conv2: 4x4 stride 2  (K = 4*4*32 = 512)
    patches, H2, W2 = _im2col_nhwc(h, 4, 4, 2)
    h = matmul_bias(patches, pp["c2w"], pp["c2b"], relu=True)
    h = h.reshape(N, H2, W2, _CPAD)[..., :64]

    # conv3 (3x3 stride 1) + both head MLPs, fused in a single pallas_call.
    patches, _, _ = _im2col_spatial_major(h, 3, 3, 1)
    out = conv3_and_heads(patches, pp["c3w"], pp["c3b"],
                          pp["w1"], pp["b1"], pp["w2"], pp["b2"])
    policy = out[:, :n_actions]
    value = out[:, n_actions:n_actions + 1]
    return policy, value


# ----------------------------------------------------------------------------
# Pure-JAX reference (PyTorch semantics) for a correctness cross-check.
# ----------------------------------------------------------------------------
def _reference_forward(params, x):
    h = x.astype(jnp.float32) / 256.0
    for wn, bn, s in (("c1w", "c1b", 4), ("c2w", "c2b", 2), ("c3w", "c3b", 1)):
        h = jax.lax.conv_general_dilated(
            h, params[wn], window_strides=(s, s), padding="VALID",
            dimension_numbers=("NCHW", "OIHW", "NCHW"))
        h = jnp.maximum(h + params[bn][None, :, None, None], 0.0)
    flat = h.reshape(h.shape[0], -1)
    p = jnp.maximum(flat @ params["p1w"].T + params["p1b"], 0.0)
    policy = p @ params["p2w"].T + params["p2b"]
    v = jnp.maximum(flat @ params["v1w"].T + params["v1b"], 0.0)
    value = v @ params["v2w"].T + params["v2b"]
    return policy, value


if __name__ == "__main__":
    # Small shapes consistent with the module: batch=2, 4 frames, 36x36 spatial
    # (smallest size valid for the 8/4 -> 4/2 -> 3/1 conv stack), 6 actions.
    batch, input_shape, n_actions = 2, (4, 36, 36), 6

    key = jax.random.PRNGKey(0)
    kparam, kx = jax.random.split(key)
    params = init_params(kparam, input_shape, n_actions)
    pp = prepare_params(params, input_shape, n_actions)

    # uint8-style Atari frames (the model divides by 256 internally).
    x = jax.random.randint(kx, (batch,) + input_shape, 0, 256, dtype=jnp.int32)
    x = x.astype(jnp.float32)

    fwd = jax.jit(functools.partial(atari_a2c_forward, n_actions=n_actions))
    policy, value = fwd(pp, x)
    jax.block_until_ready((policy, value))

    assert policy.shape == (batch, n_actions) and policy.dtype == jnp.float32
    assert value.shape == (batch, 1) and value.dtype == jnp.float32

    # Numerical cross-check against the f32 reference (bf16 activation tol).
    ref_p, ref_v = jax.jit(_reference_forward)(params, x)
    assert jnp.allclose(policy, ref_p, atol=5e-2, rtol=5e-2), (
        float(jnp.max(jnp.abs(policy - ref_p))))
    assert jnp.allclose(value, ref_v, atol=5e-2, rtol=5e-2), (
        float(jnp.max(jnp.abs(value - ref_v))))

    print("KERNEL_OK")
</pallas_src>

<mosaic_0001>
module attributes {stable_mosaic.version = 11 : i64} {
  func.func @_mm_bias_kernel(%arg0: i32, %arg1: i32, %arg2: memref<64x256xbf16, #tpu.memory_space<vmem>>, %arg3: memref<256x128xbf16, #tpu.memory_space<vmem>>, %arg4: memref<1x128xf32, #tpu.memory_space<vmem>>, %arg5: memref<64x128xbf16, #tpu.memory_space<vmem>>, %arg6: memref<64x128xf32, #tpu.memory_space<vmem>>) attributes {dimension_semantics = [#tpu.dimension_semantics<parallel>, #tpu.dimension_semantics<arbitrary>], iteration_bounds = array<i64: 2, 1>, scalar_prefetch = 0 : i64, scratch_operands = 1 : i64, tpu.core_type = #tpu.core_type<tc>, window_params = [{transform_indices = @transform_0, window_bounds = array<i64: 64, 256>}, {transform_indices = @transform_1, window_bounds = array<i64: 256, 128>}, {pipeline_mode = #tpu.pipeline_mode<synchronous>, transform_indices = @transform_2, window_bounds = array<i64: 1, 128>}, {transform_indices = @transform_3, window_bounds = array<i64: 64, 128>}]} {
    %c0_i32 = arith.constant 0 : i32
    %0 = arith.cmpi eq, %arg1, %c0_i32 : i32
    %1 = arith.extui %0 : i1 to i32
    %c0_i32_0 = arith.constant 0 : i32
    %2 = arith.cmpi ne, %1, %c0_i32_0 : i32
    scf.if %2 {
      %cst_10 = arith.constant 0.000000e+00 : f32
      %12 = vector.broadcast %cst_10 : f32 to vector<64x128xf32>
      %c0_11 = arith.constant 0 : index
      %c0_12 = arith.constant 0 : index
      %13 = vector.load %arg6[%c0_11, %c0_12] : memref<64x128xf32, #tpu.memory_space<vmem>>, vector<64x128xf32>
      tpu.vector_store %arg6[%c0_11, %c0_12], %12 {strides = array<i32>} : memref<64x128xf32, #tpu.memory_space<vmem>>, vector<64x128xf32>,
    } else {
    }
    %c0 = arith.constant 0 : index
    %c0_1 = arith.constant 0 : index
    %3 = vector.load %arg6[%c0, %c0_1] : memref<64x128xf32, #tpu.memory_space<vmem>>, vector<64x128xf32>
    %c0_2 = arith.constant 0 : index
    %c0_3 = arith.constant 0 : index
    %4 = vector.load %arg2[%c0_2, %c0_3] : memref<64x256xbf16, #tpu.memory_space<vmem>>, vector<64x256xbf16>
    %c0_4 = arith.constant 0 : index
    %c0_5 = arith.constant 0 : index
    %5 = vector.load %arg3[%c0_4, %c0_5] : memref<256x128xbf16, #tpu.memory_space<vmem>>, vector<256x128xbf16>
    %cst = arith.constant dense<0.000000e+00> : vector<64x128xf32>
    %6 = tpu.matmul %4, %5, %cst {dimension_numbers = #tpu.dot_dimension_numbers<[1], [0], [0], [1], [0, 0, 1, 1], [], []>} : vector<64x256xbf16>, vector<256x128xbf16>, vector<64x128xf32> -> vector<64x128xf32>
    %7 = arith.addf %3, %6 : vector<64x128xf32>
    %c0_6 = arith.constant 0 : index
    %c0_7 = arith.constant 0 : index
    %8 = vector.load %arg6[%c0_6, %c0_7] : memref<64x128xf32, #tpu.memory_space<vmem>>, vector<64x128xf32>
    tpu.vector_store %arg6[%c0_6, %c0_7], %7 {strides = array<i32>} : memref<64x128xf32, #tpu.memory_space<vmem>>, vector<64x128xf32>,
    %c0_i32_8 = arith.constant 0 : i32
    %9 = arith.cmpi eq, %arg1, %c0_i32_8 : i32
    %10 = arith.extui %9 : i1 to i32
    %c0_i32_9 = arith.constant 0 : i32
    %11 = arith.cmpi ne, %10, %c0_i32_9 : i32
    scf.if %11 {
      %c0_10 = arith.constant 0 : index
      %c0_11 = arith.constant 0 : index
      %12 = vector.load %arg6[%c0_10, %c0_11] : memref<64x128xf32, #tpu.memory_space<vmem>>, vector<64x128xf32>
      %c0_12 = arith.constant 0 : index
      %c0_13 = arith.constant 0 : index
      %13 = vector.load %arg4[%c0_12, %c0_13] : memref<1x128xf32, #tpu.memory_space<vmem>>, vector<1x128xf32>
      %14 = vector.broadcast %13 : vector<1x128xf32> to vector<64x128xf32>
      %15 = arith.addf %12, %14 : vector<64x128xf32>
      %cst_14 = arith.constant 0.000000e+00 : f32
      %16 = vector.broadcast %cst_14 : f32 to vector<64x128xf32>
      %17 = arith.maximumf %15, %16 : vector<64x128xf32>
      %18 = arith.truncf %17 : vector<64x128xf32> to vector<64x128xbf16>
      %c0_15 = arith.constant 0 : index
      %c0_16 = arith.constant 0 : index
      %19 = vector.load %arg5[%c0_15, %c0_16] : memref<64x128xbf16, #tpu.memory_space<vmem>>, vector<64x128xbf16>
      tpu.vector_store %arg5[%c0_15, %c0_16], %18 {strides = array<i32>} : memref<64x128xbf16, #tpu.memory_space<vmem>>, vector<64x128xbf16>,
    } else {
    }
    return
  }
  func.func @transform_0(%arg0: i32, %arg1: i32) -> (i32, i32) {
    %c0_i32 = arith.constant 0 : i32
    return %arg0, %arg1 : i32, i32
  }
  func.func @transform_1(%arg0: i32, %arg1: i32) -> (i32, i32) {
    %c0_i32 = arith.constant 0 : i32
    %c0_i32_0 = arith.constant 0 : i32
    return %arg1, %c0_i32 : i32, i32
  }
  func.func @transform_2(%arg0: i32, %arg1: i32) -> (i32, i32) {
    %c0_i32 = arith.constant 0 : i32
    %c0_i32_0 = arith.constant 0 : i32
    %c0_i32_1 = arith.constant 0 : i32
    return %c0_i32, %c0_i32_0 : i32, i32
  }
  func.func @transform_3(%arg0: i32, %arg1: i32) -> (i32, i32) {
    %c0_i32 = arith.constant 0 : i32
    %c0_i32_0 = arith.constant 0 : i32
    return %arg0, %c0_i32 : i32, i32
  }
}

module attributes {stable_mosaic.version = 11 : i64} {
  func.func @_mm_bias_kernel(%arg0: i32, %arg1: i32, %arg2: memref<16x512xbf16, #tpu.memory_space<vmem>>, %arg3: memref<512x128xbf16, #tpu.memory_space<vmem>>, %arg4: memref<1x128xf32, #tpu.memory_space<vmem>>, %arg5: memref<16x128xbf16, #tpu.memory_space<vmem>>, %arg6: memref<16x128xf32, #tpu.memory_space<vmem>>) attributes {dimension_semantics = [#tpu.dimension_semantics<parallel>, #tpu.dimension_semantics<arbitrary>], iteration_bounds = array<i64: 2, 1>, scalar_prefetch = 0 : i64, scratch_operands = 1 : i64, tpu.core_type = #tpu.core_type<tc>, window_params = [{transform_indices = @transform_0, window_bounds = array<i64: 16, 512>}, {transform_indices = @transform_1, window_bounds = array<i64: 512, 128>}, {pipeline_mode = #tpu.pipeline_mode<synchronous>, transform_indices = @transform_2, window_bounds = array<i64: 1, 128>}, {transform_indices = @transform_3, window_bounds = array<i64: 16, 128>}]} {
    %c0_i32 = arith.constant 0 : i32
    %0 = arith.cmpi eq, %arg1, %c0_i32 : i32
    %1 = arith.extui %0 : i1 to i32
    %c0_i32_0 = arith.constant 0 : i32
    %2 = arith.cmpi ne, %1, %c0_i32_0 : i32
    scf.if %2 {
      %cst_10 = arith.constant 0.000000e+00 : f32
      %12 = vector.broadcast %cst_10 : f32 to vector<16x128xf32>
      %c0_11 = arith.constant 0 : index
      %c0_12 = arith.constant 0 : index
      %13 = vector.load %arg6[%c0_11, %c0_12] : memref<16x128xf32, #tpu.memory_space<vmem>>, vector<16x128xf32>
      tpu.vector_store %arg6[%c0_11, %c0_12], %12 {strides = array<i32>} : memref<16x128xf32, #tpu.memory_space<vmem>>, vector<16x128xf32>,
    } else {
    }
    %c0 = arith.constant 0 : index
    %c0_1 = arith.constant 0 : index
    %3 = vector.load %arg6[%c0, %c0_1] : memref<16x128xf32, #tpu.memory_space<vmem>>, vector<16x128xf32>
    %c0_2 = arith.constant 0 : index
    %c0_3 = arith.constant 0 : index
    %4 = vector.load %arg2[%c0_2, %c0_3] : memref<16x512xbf16, #tpu.memory_space<vmem>>, vector<16x512xbf16>
    %c0_4 = arith.constant 0 : index
    %c0_5 = arith.constant 0 : index
    %5 = vector.load %arg3[%c0_4, %c0_5] : memref<512x128xbf16, #tpu.memory_space<vmem>>, vector<512x128xbf16>
    %cst = arith.constant dense<0.000000e+00> : vector<16x128xf32>
    %6 = tpu.matmul %4, %5, %cst {dimension_numbers = #tpu.dot_dimension_numbers<[1], [0], [0], [1], [0, 0, 1, 1], [], []>} : vector<16x512xbf16>, vector<512x128xbf16>, vector<16x128xf32> -> vector<16x128xf32>
    %7 = arith.addf %3, %6 : vector<16x128xf32>
    %c0_6 = arith.constant 0 : index
    %c0_7 = arith.constant 0 : index
    %8 = vector.load %arg6[%c0_6, %c0_7] : memref<16x128xf32, #tpu.memory_space<vmem>>, vector<16x128xf32>
    tpu.vector_store %arg6[%c0_6, %c0_7], %7 {strides = array<i32>} : memref<16x128xf32, #tpu.memory_space<vmem>>, vector<16x128xf32>,
    %c0_i32_8 = arith.constant 0 : i32
    %9 = arith.cmpi eq, %arg1, %c0_i32_8 : i32
    %10 = arith.extui %9 : i1 to i32
    %c0_i32_9 = arith.constant 0 : i32
    %11 = arith.cmpi ne, %10, %c0_i32_9 : i32
    scf.if %11 {
      %c0_10 = arith.constant 0 : index
      %c0_11 = arith.constant 0 : index
      %12 = vector.load %arg6[%c0_10, %c0_11] : memref<16x128xf32, #tpu.memory_space<vmem>>, vector<16x128xf32>
      %c0_12 = arith.constant 0 : index
      %c0_13 = arith.constant 0 : index
      %13 = vector.load %arg4[%c0_12, %c0_13] : memref<1x128xf32, #tpu.memory_space<vmem>>, vector<1x128xf32>
      %14 = vector.broadcast %13 : vector<1x128xf32> to vector<16x128xf32>
      %15 = arith.addf %12, %14 : vector<16x128xf32>
      %cst_14 = arith.constant 0.000000e+00 : f32
      %16 = vector.broadcast %cst_14 : f32 to vector<16x128xf32>
      %17 = arith.maximumf %15, %16 : vector<16x128xf32>
      %18 = arith.truncf %17 : vector<16x128xf32> to vector<16x128xbf16>
      %c0_15 = arith.constant 0 : index
      %c0_16 = arith.constant 0 : index
      %19 = vector.load %arg5[%c0_15, %c0_16] : memref<16x128xbf16, #tpu.memory_space<vmem>>, vector<16x128xbf16>
      tpu.vector_store %arg5[%c0_15, %c0_16], %18 {strides = array<i32>} : memref<16x128xbf16, #tpu.memory_space<vmem>>, vector<16x128xbf16>,
    } else {
    }
    return
  }
  func.func @transform_0(%arg0: i32, %arg1: i32) -> (i32, i32) {
    %c0_i32 = arith.constant 0 : i32
    return %arg0, %arg1 : i32, i32
  }
  func.func @transform_1(%arg0: i32, %arg1: i32) -> (i32, i32) {
    %c0_i32 = arith.constant 0 : i32
    %c0_i32_0 = arith.constant 0 : i32
    return %arg1, %c0_i32 : i32, i32
  }
  func.func @transform_2(%arg0: i32, %arg1: i32) -> (i32, i32) {
    %c0_i32 = arith.constant 0 : i32
    %c0_i32_0 = arith.constant 0 : i32
    %c0_i32_1 = arith.constant 0 : i32
    return %c0_i32, %c0_i32_0 : i32, i32
  }
  func.func @transform_3(%arg0: i32, %arg1: i32) -> (i32, i32) {
    %c0_i32 = arith.constant 0 : i32
    %c0_i32_0 = arith.constant 0 : i32
    return %arg0, %c0_i32 : i32, i32
  }
}

module attributes {stable_mosaic.version = 11 : i64} {
  func.func @_conv3_head_kernel(%arg0: i32, %arg1: i32, %arg2: memref<1x16x640xbf16, #tpu.memory_space<vmem>>, %arg3: memref<640x64xbf16, #tpu.memory_space<vmem>>, %arg4: memref<1x64xf32, #tpu.memory_space<vmem>>, %arg5: memref<1x64x1024xbf16, #tpu.memory_space<vmem>>, %arg6: memref<1x1024xf32, #tpu.memory_space<vmem>>, %arg7: memref<1024x128xbf16, #tpu.memory_space<vmem>>, %arg8: memref<1x128xf32, #tpu.memory_space<vmem>>, %arg9: memref<16x128xf32, #tpu.memory_space<vmem>>, %arg10: memref<16x1024xf32, #tpu.memory_space<vmem>>) attributes {dimension_semantics = [#tpu.dimension_semantics<parallel>, #tpu.dimension_semantics<arbitrary>], iteration_bounds = array<i64: 1, 1>, scalar_prefetch = 0 : i64, scratch_operands = 1 : i64, tpu.core_type = #tpu.core_type<tc>, window_params = [{transform_indices = @transform_0, window_bounds = array<i64: 1, 16, 640>}, {pipeline_mode = #tpu.pipeline_mode<synchronous>, transform_indices = @transform_1, window_bounds = array<i64: 640, 64>}, {pipeline_mode = #tpu.pipeline_mode<synchronous>, transform_indices = @transform_2, window_bounds = array<i64: 1, 64>}, {transform_indices = @transform_3, window_bounds = array<i64: 1, 64, 1024>}, {pipeline_mode = #tpu.pipeline_mode<synchronous>, transform_indices = @transform_4, window_bounds = array<i64: 1, 1024>}, {pipeline_mode = #tpu.pipeline_mode<synchronous>, transform_indices = @transform_5, window_bounds = array<i64: 1024, 128>}, {pipeline_mode = #tpu.pipeline_mode<synchronous>, transform_indices = @transform_6, window_bounds = array<i64: 1, 128>}, {transform_indices = @transform_7, window_bounds = array<i64: 16, 128>}]} {
    %c0_i32 = arith.constant 0 : i32
    %0 = arith.cmpi eq, %arg1, %c0_i32 : i32
    %1 = arith.extui %0 : i1 to i32
    %c0_i32_0 = arith.constant 0 : i32
    %2 = arith.cmpi ne, %1, %c0_i32_0 : i32
    scf.if %2 {
      %cst_18 = arith.constant 0.000000e+00 : f32
      %22 = vector.broadcast %cst_18 : f32 to vector<16x1024xf32>
      %c0_19 = arith.constant 0 : index
      %c0_20 = arith.constant 0 : index
      %23 = vector.load %arg10[%c0_19, %c0_20] : memref<16x1024xf32, #tpu.memory_space<vmem>>, vector<16x1024xf32>
      tpu.vector_store %arg10[%c0_19, %c0_20], %22 {strides = array<i32>} : memref<16x1024xf32, #tpu.memory_space<vmem>>, vector<16x1024xf32>,
    } else {
    }
    %c0 = arith.constant 0 : index
    %c0_1 = arith.constant 0 : index
    %c0_2 = arith.constant 0 : index
    %3 = vector.load %arg2[%c0, %c0_1, %c0_2] : memref<1x16x640xbf16, #tpu.memory_space<vmem>>, vector<1x16x640xbf16>
    %4 = vector.shape_cast %3 : vector<1x16x640xbf16> to vector<16x640xbf16>
    %c0_3 = arith.constant 0 : index
    %c0_4 = arith.constant 0 : index
    %5 = vector.load %arg3[%c0_3, %c0_4] : memref<640x64xbf16, #tpu.memory_space<vmem>>, vector<640x64xbf16>
    %cst = arith.constant dense<0.000000e+00> : vector<16x64xf32>
    %6 = tpu.matmul %4, %5, %cst {dimension_numbers = #tpu.dot_dimension_numbers<[1], [0], [0], [1], [0, 0, 1, 1], [], []>} : vector<16x640xbf16>, vector<640x64xbf16>, vector<16x64xf32> -> vector<16x64xf32>
    %c0_5 = arith.constant 0 : index
    %c0_6 = arith.constant 0 : index
    %7 = vector.load %arg4[%c0_5, %c0_6] : memref<1x64xf32, #tpu.memory_space<vmem>>, vector<1x64xf32>
    %8 = vector.broadcast %7 : vector<1x64xf32> to vector<16x64xf32>
    %9 = arith.addf %6, %8 : vector<16x64xf32>
    %cst_7 = arith.constant 0.000000e+00 : f32
    %10 = vector.broadcast %cst_7 : f32 to vector<16x64xf32>
    %11 = arith.maximumf %9, %10 : vector<16x64xf32>
    %c0_8 = arith.constant 0 : index
    %c0_9 = arith.constant 0 : index
    %12 = vector.load %arg10[%c0_8, %c0_9] : memref<16x1024xf32, #tpu.memory_space<vmem>>, vector<16x1024xf32>
    %13 = arith.truncf %11 : vector<16x64xf32> to vector<16x64xbf16>
    %c0_10 = arith.constant 0 : index
    %c0_11 = arith.constant 0 : index
    %c0_12 = arith.constant 0 : index
    %14 = vector.load %arg5[%c0_10, %c0_11, %c0_12] : memref<1x64x1024xbf16, #tpu.memory_space<vmem>>, vector<1x64x1024xbf16>
    %15 = vector.shape_cast %14 : vector<1x64x1024xbf16> to vector<64x1024xbf16>
    %cst_13 = arith.constant dense<0.000000e+00> : vector<16x1024xf32>
    %16 = tpu.matmul %13, %15, %cst_13 {dimension_numbers = #tpu.dot_dimension_numbers<[1], [0], [0], [1], [0, 0, 1, 1], [], []>} : vector<16x64xbf16>, vector<64x1024xbf16>, vector<16x1024xf32> -> vector<16x1024xf32>
    %17 = arith.addf %12, %16 : vector<16x1024xf32>
    %c0_14 = arith.constant 0 : index
    %c0_15 = arith.constant 0 : index
    %18 = vector.load %arg10[%c0_14, %c0_15] : memref<16x1024xf32, #tpu.memory_space<vmem>>, vector<16x1024xf32>
    tpu.vector_store %arg10[%c0_14, %c0_15], %17 {strides = array<i32>} : memref<16x1024xf32, #tpu.memory_space<vmem>>, vector<16x1024xf32>,
    %c0_i32_16 = arith.constant 0 : i32
    %19 = arith.cmpi eq, %arg1, %c0_i32_16 : i32
    %20 = arith.extui %19 : i1 to i32
    %c0_i32_17 = arith.constant 0 : i32
    %21 = arith.cmpi ne, %20, %c0_i32_17 : i32
    scf.if %21 {
      %c0_18 = arith.constant 0 : index
      %c0_19 = arith.constant 0 : index
      %22 = vector.load %arg10[%c0_18, %c0_19] : memref<16x1024xf32, #tpu.memory_space<vmem>>, vector<16x1024xf32>
      %c0_20 = arith.constant 0 : index
      %c0_21 = arith.constant 0 : index
      %23 = vector.load %arg6[%c0_20, %c0_21] : memref<1x1024xf32, #tpu.memory_space<vmem>>, vector<1x1024xf32>
      %24 = vector.broadcast %23 : vector<1x1024xf32> to vector<16x1024xf32>
      %25 = arith.addf %22, %24 : vector<16x1024xf32>
      %cst_22 = arith.constant 0.000000e+00 : f32
      %26 = vector.broadcast %cst_22 : f32 to vector<16x1024xf32>
      %27 = arith.maximumf %25, %26 : vector<16x1024xf32>
      %28 = arith.truncf %27 : vector<16x1024xf32> to vector<16x1024xbf16>
      %c0_23 = arith.constant 0 : index
      %c0_24 = arith.constant 0 : index
      %29 = vector.load %arg7[%c0_23, %c0_24] : memref<1024x128xbf16, #tpu.memory_space<vmem>>, vector<1024x128xbf16>
      %cst_25 = arith.constant dense<0.000000e+00> : vector<16x128xf32>
      %30 = tpu.matmul %28, %29, %cst_25 {dimension_numbers = #tpu.dot_dimension_numbers<[1], [0], [0], [1], [0, 0, 1, 1], [], []>} : vector<16x1024xbf16>, vector<1024x128xbf16>, vector<16x128xf32> -> vector<16x128xf32>
      %c0_26 = arith.constant 0 : index
      %c0_27 = arith.constant 0 : index
      %31 = vector.load %arg8[%c0_26, %c0_27] : memref<1x128xf32, #tpu.memory_space<vmem>>, vector<1x128xf32>
      %32 = vector.broadcast %31 : vector<1x128xf32> to vector<16x128xf32>
      %33 = arith.addf %30, %32 : vector<16x128xf32>
      %c0_28 = arith.constant 0 : index
      %c0_29 = arith.constant 0 : index
      %34 = vector.load %arg9[%c0_28, %c0_29] : memref<16x128xf32, #tpu.memory_space<vmem>>, vector<16x128xf32>
      tpu.vector_store %arg9[%c0_28, %c0_29], %33 {strides = array<i32>} : memref<16x128xf32, #tpu.memory_space<vmem>>, vector<16x128xf32>,
    } else {
    }
    return
  }
  func.func @transform_0(%arg0: i32, %arg1: i32) -> (i32, i32, i32) {
    %c0_i32 = arith.constant 0 : i32
    %c0_i32_0 = arith.constant 0 : i32
    return %arg1, %arg0, %c0_i32 : i32, i32, i32
  }
  func.func @transform_1(%arg0: i32, %arg1: i32) -> (i32, i32) {
    %c0_i32 = arith.constant 0 : i32
    %c0_i32_0 = arith.constant 0 : i32
    %c0_i32_1 = arith.constant 0 : i32
    return %c0_i32, %c0_i32_0 : i32, i32
  }
  func.func @transform_2(%arg0: i32, %arg1: i32) -> (i32, i32) {
    %c0_i32 = arith.constant 0 : i32
    %c0_i32_0 = arith.constant 0 : i32
    %c0_i32_1 = arith.constant 0 : i32
    return %c0_i32, %c0_i32_0 : i32, i32
  }
  func.func @transform_3(%arg0: i32, %arg1: i32) -> (i32, i32, i32) {
    %c0_i32 = arith.constant 0 : i32
    %c0_i32_0 = arith.constant 0 : i32
    %c0_i32_1 = arith.constant 0 : i32
    return %arg1, %c0_i32, %c0_i32_0 : i32, i32, i32
  }
  func.func @transform_4(%arg0: i32, %arg1: i32) -> (i32, i32) {
    %c0_i32 = arith.constant 0 : i32
    %c0_i32_0 = arith.constant 0 : i32
    %c0_i32_1 = arith.constant 0 : i32
    return %c0_i32, %c0_i32_0 : i32, i32
  }
  func.func @transform_5(%arg0: i32, %arg1: i32) -> (i32, i32) {
    %c0_i32 = arith.constant 0 : i32
    %c0_i32_0 = arith.constant 0 : i32
    %c0_i32_1 = arith.constant 0 : i32
    return %c0_i32, %c0_i32_0 : i32, i32
  }
  func.func @transform_6(%arg0: i32, %arg1: i32) -> (i32, i32) {
    %c0_i32 = arith.constant 0 : i32
    %c0_i32_0 = arith.constant 0 : i32
    %c0_i32_1 = arith.constant 0 : i32
    return %c0_i32, %c0_i32_0 : i32, i32
  }
  func.func @transform_7(%arg0: i32, %arg1: i32) -> (i32, i32) {
    %c0_i32 = arith.constant 0 : i32
    %c0_i32_0 = arith.constant 0 : i32
    return %arg0, %c0_i32 : i32, i32
  }
}

</mosaic_0001>

<llo_original>
// kernel: atari_a2c_forward.3
$region0: #{atari_a2c_forward.3}
  #allocation0 [shape = 'u32[]', space=smem, size = 0x4, offset = 0x4, fixed_abs, tag = 'smem constant byte address 0x4 - core index']
  #allocation1 [shape = 'u32[144,128]{1,0:T(1,128)}', space=vmem, size = 0x12000, scoped, tag = 'internal scratch']
  #allocation2 [shape = 'f32[64,128]{1,0:T(8,128)}', space=vmem, size = 0x8000, scoped, tag = 'scratch operand']
  %s0 = inlined_call_operand.vmem [shape: bf16[128,256], index: 0, kind: input, shape index: {}]
  %s1 = inlined_call_operand.vmem [shape: bf16[256,128], index: 1, kind: input, shape index: {}]
  %s2 = inlined_call_operand.vmem [shape: f32[1,128], index: 2, kind: input, shape index: {}]
  %s3 = inlined_call_operand.vmem [shape: bf16[128,128], index: 3, kind: output, shape index: {}]
  %s4 = sld [smem:[#allocation0]]
  $region53: #{atari_a2c_forward.3} parent=0
    _
  %s6 = ssub.s32 1, %s4
  %s7 = scalar_select 0, %s6, %s4
  loop: start=0, step=1, limit=4
  $region2: #{atari_a2c_forward.3} parent=0 // loop_pre_header
    _
  $region3: #{atari_a2c_forward.3} parent=0 // loop_header
    %s9 = sphi 0, %s13
    %p10 = scmp.ge.s32.totalorder %s9, 4
    %s16 = sphi 0, %s28
    %s17 = sphi 0, %s24
    %s18 = sphi 0, %s16
    %s19 = sphi 0, %s17
    %s20 = sphi 0, %s18
    %s21 = sphi 0, %s19
    %s33 = sphi 0, %s35
    %s36 = sphi 0, %s33
    %s37 = sphi 0, %s36
    %s53 = sphi 0, %s37
    %s59 = sphi 0, %s61
    %s62 = sphi 0, %s59
    %s63 = sphi 0, %s62
    %s79 = sphi 0, %s63
    %s83 = sphi 0, %s83
    %s85 = sphi 0, %s83
    %s86 = sphi 0, %s85
    %s100 = sphi 0, %s86
    %s106 = sphi 0, %s108
    %s109 = sphi 0, %s106
    %s110 = sphi 0, %s109
    %s126 = sphi 0, %s110
  $region4: #{atari_a2c_forward.3} parent=0 // loop_header_branch
    %12 = sbr.rel (%p10) target = $region8
  $region5: #{atari_a2c_forward.3} parent=0 // loop_body
    %s14 = ssub.s32 %s9, 1
    %s15 = ssub.s32 %s9, 2
    %s22 = sadd.s32 1, %s17
    %p23 = scmp.ge.s32.totalorder %s22, 1
    %s24 = scalar_select %p23, 0, %s22
    %s25 = sadd.s32 1, %s16
    %s26 = scalar_select %p23, %s25, %s16
    %p27 = scmp.ge.s32.totalorder %s26, 2
    %s28 = scalar_select %p27, 0, %s26
    %s29 = ssub.s32 %s16, %s28
    %s30 = ssub.s32 %s17, %s24
    %s31 = sor.u32 %s29, %s30
    %p32 = scmp.eq.s32.totalorder %s31, 0
    %s34 = sadd.s32 %s33, 1
    %s35 = scalar_select %p32, %s33, %s34
    %p38 = pneg %p32
    %p39 = scmp.eq.s32.totalorder %s9, 1
    %p40 = por %p38, %p39
    %p41 = scmp.ne.s32.totalorder %s33, %s36
    %p42 = scmp.eq.s32.totalorder %s9, 0
    %p43 = por %p41, %p42
    %p44 = scmp.ne.s32.totalorder %s33, %s36
    %p45 = scmp.eq.s32.totalorder %s14, 1
    %p46 = por %p44, %p45
    %p47 = scmp.ne.s32.totalorder %s36, %s37
    %p48 = scmp.eq.s32.totalorder %s14, 0
    %p49 = por %p47, %p48
    %p50 = scmp.ne.s32.totalorder %s36, %s37
    %p51 = scmp.eq.s32.totalorder %s15, 1
    %p52 = por %p50, %p51
    %p54 = scmp.ne.s32.totalorder %s37, %s53
    %p55 = scmp.eq.s32.totalorder %s15, 0
    %p56 = por %p54, %p55
    %s57 = ssub.s32 %s17, %s24
    %p58 = scmp.eq.s32.totalorder %s57, 0
    %s60 = sadd.s32 %s59, 1
    %s61 = scalar_select %p58, %s59, %s60
    %p64 = pneg %p58
    %p65 = scmp.eq.s32.totalorder %s9, 1
    %p66 = por %p64, %p65
    %p67 = scmp.ne.s32.totalorder %s59, %s62
    %p68 = scmp.eq.s32.totalorder %s9, 0
    %p69 = por %p67, %p68
    %p70 = scmp.ne.s32.totalorder %s59, %s62
    %p71 = scmp.eq.s32.totalorder %s14, 1
    %p72 = por %p70, %p71
    %p73 = scmp.ne.s32.totalorder %s62, %s63
    %p74 = scmp.eq.s32.totalorder %s14, 0
    %p75 = por %p73, %p74
    %p76 = scmp.ne.s32.totalorder %s62, %s63
    %p77 = scmp.eq.s32.totalorder %s15, 1
    %p78 = por %p76, %p77
    %p80 = scmp.ne.s32.totalorder %s63, %s79
    %p81 = scmp.eq.s32.totalorder %s15, 0
    %p82 = por %p80, %p81
    %s84 = sadd.s32 %s83, 1
    %p87 = scmp.eq.s32.totalorder %s9, 1
    %p88 = scmp.ne.s32.totalorder %s83, %s85
    %p89 = scmp.eq.s32.totalorder %s9, 0
    %p90 = por %p88, %p89
    %p91 = scmp.ne.s32.totalorder %s83, %s85
    %p92 = scmp.eq.s32.totalorder %s14, 1
    %p93 = por %p91, %p92
    %p94 = scmp.ne.s32.totalorder %s85, %s86
    %p95 = scmp.eq.s32.totalorder %s14, 0
    %p96 = por %p94, %p95
    %p97 = scmp.ne.s32.totalorder %s85, %s86
    %p98 = scmp.eq.s32.totalorder %s15, 1
    %p99 = por %p97, %p98
    %p101 = scmp.ne.s32.totalorder %s86, %s100
    %p102 = scmp.eq.s32.totalorder %s15, 0
    %p103 = por %p101, %p102
    %s104 = ssub.s32 %s16, %s28
    %p105 = scmp.eq.s32.totalorder %s104, 0
    %s107 = sadd.s32 %s106, 1
    %s108 = scalar_select %p105, %s106, %s107
    %p111 = pneg %p105
    %p112 = scmp.eq.s32.totalorder %s9, 1
    %p113 = por %p111, %p112
    %p114 = scmp.ne.s32.totalorder %s106, %s109
    %p115 = scmp.eq.s32.totalorder %s9, 0
    %p116 = por %p114, %p115
    %p117 = scmp.ne.s32.totalorder %s106, %s109
    %p118 = scmp.eq.s32.totalorder %s14, 1
    %p119 = por %p117, %p118
    %p120 = scmp.ne.s32.totalorder %s109, %s110
    %p121 = scmp.eq.s32.totalorder %s14, 0
    %p122 = por %p120, %p121
    %p123 = scmp.ne.s32.totalorder %s109, %s110
    %p124 = scmp.eq.s32.totalorder %s15, 1
    %p125 = por %p123, %p124
    %p127 = scmp.ne.s32.totalorder %s110, %s126
    %p128 = scmp.eq.s32.totalorder %s15, 0
    %p129 = por %p127, %p128
    %p130 = scmp.le.s32.totalorder 1, %s9
    %p131 = scmp.lt.s32.totalorder %s9, 3
    %p132 = pnand %p130, %p131
    %p133 = pneg %p132
    // Predicated region
    $region9: #{atari_a2c_forward.3} parent=5 // pred_check
      _
    $region10: #{atari_a2c_forward.3} parent=5 // pred_check_branch
      %135 = sbr.rel (%p132) target = $region12
    $region11: #{atari_a2c_forward.3} parent=5 // pred_region
      %s136 = ssub.s32 %s9, 1
      // Predicated region
      $region13: #{atari_a2c_forward.3} parent=11 // pred_check
        %p137 = pneg %p75
      $region14: #{atari_a2c_forward.3} parent=11 // pred_check_branch
        %139 = sbr.rel (%p137) target = $region16
      $region15: #{atari_a2c_forward.3} parent=11 // pred_region
        %s140 = smul.u32 32, %s19
        %p141 = scmp.lt.s32.totalorder %s140, 31
        %s142 = scalar_select %p141, %s140, 31
        %s143 = smul.addr %s142, 4
        %s144 = scalar_lea.vmem %s1, %s143
        %s145 = smul.u32 32, %s19
      $region16: #{atari_a2c_forward.3} parent=11 // pred_fallthru
        _
      // Predicated region
      $region17: #{atari_a2c_forward.3} parent=11 // pred_check
        %p146 = pneg %p96
      $region18: #{atari_a2c_forward.3} parent=11 // pred_check_branch
        %148 = sbr.rel (%p146) target = $region20
      $region19: #{atari_a2c_forward.3} parent=11 // pred_region
        _
      $region20: #{atari_a2c_forward.3} parent=11 // pred_fallthru
        _
    $region12: #{atari_a2c_forward.3} parent=5 // pred_fallthru
      _
    %p149 = scmp.lt.s32.totalorder %s9, 2
    // Predicated region
    $region21: #{atari_a2c_forward.3} parent=5 // pred_check
      %p150 = pneg %p149
    $region22: #{atari_a2c_forward.3} parent=5 // pred_check_branch
      %152 = sbr.rel (%p150) target = $region24
    $region23: #{atari_a2c_forward.3} parent=5 // pred_region
      // Predicated region
      $region25: #{atari_a2c_forward.3} parent=23 // pred_check
        %p153 = pneg %p43
      $region26: #{atari_a2c_forward.3} parent=23 // pred_check_branch
        %155 = sbr.rel (%p153) target = $region28
      $region27: #{atari_a2c_forward.3} parent=23 // pred_region
        %s156 = smul.u32 8, %s16
        %s157 = smul.u32 2, %s17
        %p158 = scmp.lt.s32.totalorder %s156, 15
        %s159 = scalar_select %p158, %s156, 15
        %p160 = scmp.lt.s32.totalorder %s157, 1
        %s161 = scalar_select %p160, %s157, 1
        %s162 = smul.addr %s159, 2
        %s163 = sadd.s32 %s161, %s162
        %s164 = smul.addr %s163, 4
        %s165 = scalar_lea.vmem %s0, %s164
        %s166 = smul.u32 8, %s16
        %s167 = smul.u32 2, %s17
      $region28: #{atari_a2c_forward.3} parent=23 // pred_fallthru
        _
    $region24: #{atari_a2c_forward.3} parent=5 // pred_fallthru
      _
    %p168 = scmp.le.s32.totalorder 1, %s9
    %p169 = scmp.lt.s32.totalorder %s9, 3
    %p170 = pnand %p168, %p169
    %p171 = pneg %p170
    // Predicated region
    $region29: #{atari_a2c_forward.3} parent=5 // pred_check
      _
    $region30: #{atari_a2c_forward.3} parent=5 // pred_check_branch
      %173 = sbr.rel (%p170) target = $region32
    $region31: #{atari_a2c_forward.3} parent=5 // pred_region
      %s174 = ssub.s32 %s9, 1
      %s175 = smul.u32 8, %s18
      %s176 = smul.u32 2, %s19
      %p177 = scmp.lt.s32.totalorder %s175, 15
      %s178 = scalar_select %p177, %s175, 15
      %p179 = scmp.lt.s32.totalorder %s176, 1
      %s180 = scalar_select %p179, %s176, 1
      %s181 = smul.addr %s178, 2
      %s182 = sadd.s32 %s180, %s181
      %s183 = smul.addr %s182, 4
      %s184 = scalar_lea.vmem %s0, %s183
      %p185 = pneg %p49
      %p186 = pneg %p46
      %s187 = smul.u32 32, %s19
      %p188 = scmp.lt.s32.totalorder %s187, 31
      %s189 = scalar_select %p188, %s187, 31
      %s190 = smul.addr %s189, 4
      %s191 = scalar_lea.vmem %s1, %s190
      %p192 = pneg %p75
      %p193 = pneg %p72
      %p194 = pneg %p96
      %p195 = pneg %p93
      %p196 = pneg %p122
      %p197 = pneg %p119
      %s198 = smul.u32 8, %s18
      %p199 = scmp.lt.s32.totalorder %s198, 15
      %s200 = scalar_select %p199, %s198, 15
      %s201 = smul.addr %s200, 4
      %s202 = scalar_lea.vmem %s3, %s201
      %s203 = smul.u32 8, %s18
      %s204 = smul.u32 2, %s19
      %p205 = scmp.lt.s32.totalorder %s203, 15
      %s206 = scalar_select %p205, %s203, 15
      %p207 = scmp.lt.s32.totalorder %s204, 1
      %s208 = scalar_select %p207, %s204, 1
      %s209 = smul.addr %s206, 2
      %s210 = sadd.s32 %s208, %s209
      %s211 = smul.addr %s210, 4
      %s212 = scalar_lea.vmem %s0, %s211
      %s213 = smul.u32 8, %s18
      %s214 = smul.u32 2, %s19
      %s215 = smul.u32 32, %s19
      %p216 = scmp.lt.s32.totalorder %s215, 31
      %s217 = scalar_select %p216, %s215, 31
      %s218 = smul.addr %s217, 4
      %s219 = scalar_lea.vmem %s1, %s218
      %s220 = smul.u32 32, %s19
      %s221 = smul.u32 8, %s18
      %p222 = scmp.lt.s32.totalorder %s221, 15
      %s223 = scalar_select %p222, %s221, 15
      %s224 = smul.addr %s223, 4
      %s225 = scalar_lea.vmem %s3, %s224
      %s226 = smul.u32 8, %s18
      %p228 = scmp.eq.s32.totalorder %s19, 0
      // Predicated region
      $region33: #{atari_a2c_forward.3} parent=31 // pred_check
        %p229 = pneg %p228
      $region34: #{atari_a2c_forward.3} parent=31 // pred_check_branch
        %231 = sbr.rel (%p229) target = $region36
      $region35: #{atari_a2c_forward.3} parent=31 // pred_region
        %232 = vst [vmem:[#allocation2] sm:$0xff] 0.0
        %233 = vst [vmem:[#allocation2 + $0x8] sm:$0xff] 0.0
        %234 = vst [vmem:[#allocation2 + $0x10] sm:$0xff] 0.0
        %235 = vst [vmem:[#allocation2 + $0x18] sm:$0xff] 0.0
        %236 = vst [vmem:[#allocation2 + $0x20] sm:$0xff] 0.0
        %237 = vst [vmem:[#allocation2 + $0x28] sm:$0xff] 0.0
        %238 = vst [vmem:[#allocation2 + $0x30] sm:$0xff] 0.0
        %239 = vst [vmem:[#allocation2 + $0x38] sm:$0xff] 0.0
      $region36: #{atari_a2c_forward.3} parent=31 // pred_fallthru
        _
      %v240 = vld [vmem:[#allocation2] sm:$0xff]
      %v241 = vld [vmem:[#allocation2 + $0x8] sm:$0xff]
      %v242 = vld [vmem:[#allocation2 + $0x10] sm:$0xff]
      %v243 = vld [vmem:[#allocation2 + $0x18] sm:$0xff]
      %v244 = vld [vmem:[#allocation2 + $0x20] sm:$0xff]
      %v245 = vld [vmem:[#allocation2 + $0x28] sm:$0xff]
      %v246 = vld [vmem:[#allocation2 + $0x30] sm:$0xff]
      %v247 = vld [vmem:[#allocation2 + $0x38] sm:$0xff]
      %v248 = vld [vmem:[%s212] sm:$0xff]
      %v249 = vld [vmem:[%s212 + $0x8] sm:$0xff]
      %v250 = vld [vmem:[%s212 + $0x10] sm:$0xff]
      %v251 = vld [vmem:[%s212 + $0x18] sm:$0xff]
      %v252 = vld [vmem:[%s212 + $0x20] sm:$0xff]
      %v253 = vld [vmem:[%s212 + $0x28] sm:$0xff]
      %v254 = vld [vmem:[%s212 + $0x30] sm:$0xff]
      %v255 = vld [vmem:[%s212 + $0x38] sm:$0xff]
      %v256 = vld [vmem:[%s219] sm:$0xf]
      %v257 = vld [vmem:[%s219 + $0x4] sm:$0xf]
      %v258 = vld [vmem:[%s219 + $0x8] sm:$0xf]
      %v259 = vld [vmem:[%s219 + $0xc] sm:$0xf]
      %v260 = vld [vmem:[%s219 + $0x10] sm:$0xf]
      %v261 = vld [vmem:[%s219 + $0x14] sm:$0xf]
      %v262 = vld [vmem:[%s219 + $0x18] sm:$0xf]
      %v263 = vld [vmem:[%s219 + $0x1c] sm:$0xf]
      %v264 = vld [vmem:[%s219 + $0x20] sm:$0xf]
      %v265 = vld [vmem:[%s219 + $0x24] sm:$0xf]
      %v266 = vld [vmem:[%s219 + $0x28] sm:$0xf]
      %v267 = vld [vmem:[%s219 + $0x2c] sm:$0xf]
      %v268 = vld [vmem:[%s219 + $0x30] sm:$0xf]
      %v269 = vld [vmem:[%s219 + $0x34] sm:$0xf]
      %v270 = vld [vmem:[%s219 + $0x38] sm:$0xf]
      %v271 = vld [vmem:[%s219 + $0x3c] sm:$0xf]
      %v272 = vld [vmem:[%s219 + $0x40] sm:$0xf]
      %v273 = vld [vmem:[%s219 + $0x44] sm:$0xf]
      %v274 = vld [vmem:[%s219 + $0x48] sm:$0xf]
      %v275 = vld [vmem:[%s219 + $0x4c] sm:$0xf]
      %v276 = vld [vmem:[%s219 + $0x50] sm:$0xf]
      %v277 = vld [vmem:[%s219 + $0x54] sm:$0xf]
      %v278 = vld [vmem:[%s219 + $0x58] sm:$0xf]
      %v279 = vld [vmem:[%s219 + $0x5c] sm:$0xf]
      %v280 = vld [vmem:[%s219 + $0x60] sm:$0xf]
      %v281 = vld [vmem:[%s219 + $0x64] sm:$0xf]
      %v282 = vld [vmem:[%s219 + $0x68] sm:$0xf]
      %v283 = vld [vmem:[%s219 + $0x6c] sm:$0xf]
      %v284 = vld [vmem:[%s219 + $0x70] sm:$0xf]
      %v285 = vld [vmem:[%s219 + $0x74] sm:$0xf]
      %v286 = vld [vmem:[%s219 + $0x78] sm:$0xf]
      %v287 = vld [vmem:[%s219 + $0x7c] sm:$0xf]
      %v296 = vunpack.c.l.b16 %v248
      %v297 = vunpack.c.h.b16 %v248
      %v298 = vunpack.c.l.b16 %v249
      %v299 = vunpack.c.h.b16 %v249
      %v300 = vunpack.c.l.b16 %v250
      %v301 = vunpack.c.h.b16 %v250
      %v302 = vunpack.c.l.b16 %v251
      %v303 = vunpack.c.h.b16 %v251
      %v304 = vunpack.c.l.b16 %v252
      %v305 = vunpack.c.h.b16 %v252
      %v306 = vunpack.c.l.b16 %v253
      %v307 = vunpack.c.h.b16 %v253
      %v308 = vunpack.c.l.b16 %v254
      %v309 = vunpack.c.h.b16 %v254
      %v310 = vunpack.c.l.b16 %v255
      %v311 = vunpack.c.h.b16 %v255
      %v312 = vpack.c.b16 %v298, %v296
      %v313 = vpack.c.b16 %v299, %v297
      %v314 = vpack.c.b16 %v302, %v300
      %v315 = vpack.c.b16 %v303, %v301
      %v316 = vpack.c.b16 %v306, %v304
      %v317 = vpack.c.b16 %v307, %v305
      %v318 = vpack.c.b16 %v310, %v308
      %v319 = vpack.c.b16 %v311, %v309
      %v360 = vunpack.c.l.b16 %v256
      %v361 = vunpack.c.l.b16 %v257
      %v362 = vunpack.c.l.b16 %v258
      %v363 = vunpack.c.l.b16 %v259
      %v364 = vunpack.c.l.b16 %v260
      %v365 = vunpack.c.l.b16 %v261
      %v366 = vunpack.c.l.b16 %v262
      %v367 = vunpack.c.l.b16 %v263
      %v368 = vunpack.c.l.b16 %v264
      %v369 = vunpack.c.l.b16 %v265
      %v370 = vunpack.c.l.b16 %v266
      %v371 = vunpack.c.l.b16 %v267
      %v372 = vunpack.c.l.b16 %v268
      %v373 = vunpack.c.l.b16 %v269
      %v374 = vunpack.c.l.b16 %v270
      %v375 = vunpack.c.l.b16 %v271
      %v376 = vunpack.c.l.b16 %v272
      %v377 = vunpack.c.l.b16 %v273
      %v378 = vunpack.c.l.b16 %v274
      %v379 = vunpack.c.l.b16 %v275
      %v380 = vunpack.c.l.b16 %v276
      %v381 = vunpack.c.l.b16 %v277
      %v382 = vunpack.c.l.b16 %v278
      %v383 = vunpack.c.l.b16 %v279
      %v384 = vunpack.c.l.b16 %v280
      %v385 = vunpack.c.l.b16 %v281
      %v386 = vunpack.c.l.b16 %v282
      %v387 = vunpack.c.l.b16 %v283
      %v388 = vunpack.c.l.b16 %v284
      %v389 = vunpack.c.l.b16 %v285
      %v390 = vunpack.c.l.b16 %v286
      %v391 = vunpack.c.l.b16 %v287
      %v392 = vpack.c.b16 %v361, %v360
      %v393 = vpack.c.b16 %v363, %v362
      %v394 = vpack.c.b16 %v365, %v364
      %v395 = vpack.c.b16 %v367, %v366
      %v396 = vpack.c.b16 %v369, %v368
      %v397 = vpack.c.b16 %v371, %v370
      %v398 = vpack.c.b16 %v373, %v372
      %v399 = vpack.c.b16 %v375, %v374
      %v400 = vpack.c.b16 %v377, %v376
      %v401 = vpack.c.b16 %v379, %v378
      %v402 = vpack.c.b16 %v381, %v380
      %v403 = vpack.c.b16 %v383, %v382
      %v404 = vpack.c.b16 %v385, %v384
      %v405 = vpack.c.b16 %v387, %v386
      %v406 = vpack.c.b16 %v389, %v388
      %v407 = vpack.c.b16 %v391, %v390
      %424 = vmatprep.subr.bf16.mxu0 0
      %425 = vmatpush1.bf16.msra.mxu0 %v392
      %426 = vmatprep.subr.bf16.mxu0 0
      %427 = vmatpush1.bf16.msra.mxu0 %v393
      %428 = vmatprep.subr.bf16.mxu0 0
      %429 = vmatpush1.bf16.msra.mxu0 %v394
      %430 = vmatprep.subr.bf16.mxu0 0
      %431 = vmatpush1.bf16.msra.mxu0 %v395
      %432 = vmatprep.subr.bf16.mxu0 0
      %433 = vmatpush1.bf16.msra.mxu0 %v396
      %434 = vmatprep.subr.bf16.mxu0 0
      %435 = vmatpush1.bf16.msra.mxu0 %v397
      %436 = vmatprep.subr.bf16.mxu0 0
      %437 = vmatpush1.bf16.msra.mxu0 %v398
      %438 = vmatprep.subr.bf16.mxu0 0
      %439 = vmatpush1.bf16.msra.mxu0 %v399
      %440 = vmatprep.subr.bf16.mxu0 0
      %441 = vmatpush1.bf16.msra.mxu0 %v400
      %442 = vmatprep.subr.bf16.mxu0 0
      %443 = vmatpush1.bf16.msra.mxu0 %v401
      %444 = vmatprep.subr.bf16.mxu0 0
      %445 = vmatpush1.bf16.msra.mxu0 %v402
      %446 = vmatprep.subr.bf16.mxu0 0
      %447 = vmatpush1.bf16.msra.mxu0 %v403
      %448 = vmatprep.subr.bf16.mxu0 0
      %449 = vmatpush1.bf16.msra.mxu0 %v404
      %450 = vmatprep.subr.bf16.mxu0 0
      %451 = vmatpush1.bf16.msra.mxu0 %v405
      %452 = vmatprep.subr.bf16.mxu0 0
      %453 = vmatpush1.bf16.msra.mxu0 %v406
      %454 = vmatprep.subr.bf16.mxu0 0
      %455 = vmatpush1.bf16.msra.mxu0 %v407
      %456 = vmatprep.mubr.bf16.mxu0 %v313
      %457 = vmatmul.mubr.bf16.gmra.mrb[0].mxu0 %v312
      %v458 = vpop.f32.mrb[0].mxu0
      %v459 = vadd.f32 0.0, %v458
      %v460 = vpop.f32.mrb[0].mxu0
      %v461 = vpop.f32.mrb[0].mxu0
      %v462 = vadd.f32 0.0, %v461
      %v463 = vpop.f32.mrb[0].mxu0
      %464 = vmatprep.mubr.bf16.mxu0 %v315
      %465 = vmatmul.mubr.bf16.gmra.mrb[0].mxu0 %v314
      %v466 = vpop.f32.mrb[0].mxu0
      %v467 = vadd.f32 0.0, %v466
      %v468 = vpop.f32.mrb[0].mxu0
      %v469 = vpop.f32.mrb[0].mxu0
      %v470 = vadd.f32 0.0, %v469
      %v471 = vpop.f32.mrb[0].mxu0
      %472 = vmatprep.mubr.bf16.mxu0 %v317
      %473 = vmatmul.mubr.bf16.gmra.mrb[0].mxu0 %v316
      %v474 = vpop.f32.mrb[0].mxu0
      %v475 = vadd.f32 0.0, %v474
      %v476 = vpop.f32.mrb[0].mxu0
      %v477 = vpop.f32.mrb[0].mxu0
      %v478 = vadd.f32 0.0, %v477
      %v479 = vpop.f32.mrb[0].mxu0
      %480 = vmatprep.mubr.bf16.mxu0 %v319
      %481 = vmatmul.mubr.bf16.gmra.mrb[0].mxu0 %v318
      %v482 = vpop.f32.mrb[0].mxu0
      %v483 = vadd.f32 0.0, %v482
      %v484 = vpop.f32.mrb[0].mxu0
      %v485 = vpop.f32.mrb[0].mxu0
      %v486 = vadd.f32 0.0, %v485
      %v487 = vpop.f32.mrb[0].mxu0
      %488 = vdwg.mxu0
      %v489 = vadd.f32 %v240, %v459
      %v490 = vadd.f32 %v241, %v462
      %v491 = vadd.f32 %v242, %v467
      %v492 = vadd.f32 %v243, %v470
      %v493 = vadd.f32 %v244, %v475
      %v494 = vadd.f32 %v245, %v478
      %v495 = vadd.f32 %v246, %v483
      %v496 = vadd.f32 %v247, %v486
      %497 = vst [vmem:[#allocation2] sm:$0xff] %v489
      %498 = vst [vmem:[#allocation2 + $0x8] sm:$0xff] %v490
      %499 = vst [vmem:[#allocation2 + $0x10] sm:$0xff] %v491
      %500 = vst [vmem:[#allocation2 + $0x18] sm:$0xff] %v492
      %501 = vst [vmem:[#allocation2 + $0x20] sm:$0xff] %v493
      %502 = vst [vmem:[#allocation2 + $0x28] sm:$0xff] %v494
      %503 = vst [vmem:[#allocation2 + $0x30] sm:$0xff] %v495
      %504 = vst [vmem:[#allocation2 + $0x38] sm:$0xff] %v496
      // Predicated region
      $region37: #{atari_a2c_forward.3} parent=31 // pred_check
        %p505 = pneg %p228
      $region38: #{atari_a2c_forward.3} parent=31 // pred_check_branch
        %507 = sbr.rel (%p505) target = $region40
      $region39: #{atari_a2c_forward.3} parent=31 // pred_region
        %v508 = vld [vmem:[#allocation2] sm:$0xff]
        %v509 = vld [vmem:[#allocation2 + $0x8] sm:$0xff]
        %v510 = vld [vmem:[#allocation2 + $0x10] sm:$0xff]
        %v511 = vld [vmem:[#allocation2 + $0x18] sm:$0xff]
        %v512 = vld [vmem:[#allocation2 + $0x20] sm:$0xff]
        %v513 = vld [vmem:[#allocation2 + $0x28] sm:$0xff]
        %v514 = vld [vmem:[#allocation2 + $0x30] sm:$0xff]
        %v515 = vld [vmem:[#allocation2 + $0x38] sm:$0xff]
        %v516 = vld [vmem:[%s2] sm:$0x1]
        %v518 = vlaneseq
        %v519 = vshrl.u32 %v518, 7
        %v520 = vsub.s32 0, %v519
        %v521 = vrot.slane %v516, %v520
        %v523 = vadd.f32 %v508, %v521
        %v524 = vadd.f32 %v509, %v521
        %v525 = vadd.f32 %v510, %v521
        %v526 = vadd.f32 %v511, %v521
        %v527 = vadd.f32 %v512, %v521
        %v528 = vadd.f32 %v513, %v521
        %v529 = vadd.f32 %v514, %v521
        %v530 = vadd.f32 %v515, %v521
        %v531 = vmax.f32 %v523, 0.0
        %v532 = vmax.f32 %v524, 0.0
        %v533 = vmax.f32 %v525, 0.0
        %v534 = vmax.f32 %v526, 0.0
        %v535 = vmax.f32 %v527, 0.0
        %v536 = vmax.f32 %v528, 0.0
        %v537 = vmax.f32 %v529, 0.0
        %v538 = vmax.f32 %v530, 0.0
        %v539 = vpack.c.bf16 %v532, %v531
        %v540 = vpack.c.bf16 %v534, %v533
        %v541 = vpack.c.bf16 %v536, %v535
        %v542 = vpack.c.bf16 %v538, %v537
        %v547 = vunpack.c.l.b16 %v539
        %v548 = vunpack.c.h.b16 %v539
        %v549 = vunpack.c.l.b16 %v540
        %v550 = vunpack.c.h.b16 %v540
        %v551 = vunpack.c.l.b16 %v541
        %v552 = vunpack.c.h.b16 %v541
        %v553 = vunpack.c.l.b16 %v542
        %v554 = vunpack.c.h.b16 %v542
        %v555 = vpack.c.b16 %v547, %v547
        %v556 = vpack.c.b16 %v548, %v548
        %v557 = vpack.c.b16 %v549, %v549
        %v558 = vpack.c.b16 %v550, %v550
        %v559 = vpack.c.b16 %v551, %v551
        %v560 = vpack.c.b16 %v552, %v552
        %v561 = vpack.c.b16 %v553, %v553
        %v562 = vpack.c.b16 %v554, %v554
        %571 = vst [vmem:[%s225] sm:$0xf] %v555
        %572 = vst [vmem:[%s225 + $0x4] sm:$0xf] %v556
        %573 = vst [vmem:[%s225 + $0x8] sm:$0xf] %v557
        %574 = vst [vmem:[%s225 + $0xc] sm:$0xf] %v558
        %575 = vst [vmem:[%s225 + $0x10] sm:$0xf] %v559
        %576 = vst [vmem:[%s225 + $0x14] sm:$0xf] %v560
        %577 = vst [vmem:[%s225 + $0x18] sm:$0xf] %v561
        %578 = vst [vmem:[%s225 + $0x1c] sm:$0xf] %v562
      $region40: #{atari_a2c_forward.3} parent=31 // pred_fallthru
        _
      %s579 = smul.u32 8, %s18
      %p580 = scmp.lt.s32.totalorder %s579, 15
      %s581 = scalar_select %p580, %s579, 15
      %s582 = smul.addr %s581, 4
      %s583 = scalar_lea.vmem %s3, %s582
      // Predicated region
      $region41: #{atari_a2c_forward.3} parent=31 // pred_check
        %p584 = pneg %p119
      $region42: #{atari_a2c_forward.3} parent=31 // pred_check_branch
        %586 = sbr.rel (%p584) target = $region44
      $region43: #{atari_a2c_forward.3} parent=31 // pred_region
        %s587 = smul.u32 8, %s18
      $region44: #{atari_a2c_forward.3} parent=31 // pred_fallthru
        _
    $region32: #{atari_a2c_forward.3} parent=5 // pred_fallthru
      _
    %p588 = scmp.le.s32.totalorder 2, %s9
    // Predicated region
    $region45: #{atari_a2c_forward.3} parent=5 // pred_check
      %p589 = pneg %p588
    $region46: #{atari_a2c_forward.3} parent=5 // pred_check_branch
      %591 = sbr.rel (%p589) target = $region48
    $region47: #{atari_a2c_forward.3} parent=5 // pred_region
      %s592 = ssub.s32 %s9, 2
      // Predicated region
      $region49: #{atari_a2c_forward.3} parent=47 // pred_check
        %p593 = pneg %p125
      $region50: #{atari_a2c_forward.3} parent=47 // pred_check_branch
        %595 = sbr.rel (%p593) target = $region52
      $region51: #{atari_a2c_forward.3} parent=47 // pred_region
        %s596 = smul.u32 8, %s20
        %p597 = scmp.lt.s32.totalorder %s596, 15
        %s598 = scalar_select %p597, %s596, 15
        %s599 = smul.addr %s598, 4
        %s600 = scalar_lea.vmem %s3, %s599
      $region52: #{atari_a2c_forward.3} parent=47 // pred_fallthru
        _
    $region48: #{atari_a2c_forward.3} parent=5 // pred_fallthru
      _
  $region6: #{atari_a2c_forward.3} parent=0 // loop_footer
    %s13 = sadd.s32 1, %s9
  $region7: #{atari_a2c_forward.3} parent=0 // loop_footer_branch
    %8 = sbr.rel target = $region3
  $region8: #{atari_a2c_forward.3} parent=0 // loop_exit
    _

// kernel: atari_a2c_forward.4
$region0: #{atari_a2c_forward.4}
  #allocation0 [shape = 'u32[]', space=smem, size = 0x4, offset = 0x4, fixed_abs, tag = 'smem constant byte address 0x4 - core index']
  #allocation1 [shape = 'u32[144,128]{1,0:T(1,128)}', space=vmem, size = 0x12000, scoped, tag = 'internal scratch']
  #allocation2 [shape = 'f32[16,128]{1,0:T(8,128)}', space=vmem, size = 0x2000, scoped, tag = 'scratch operand']
  %s0 = inlined_call_operand.vmem [shape: bf16[32,512], index: 0, kind: input, shape index: {}]
  %s1 = inlined_call_operand.vmem [shape: bf16[512,128], index: 1, kind: input, shape index: {}]
  %s2 = inlined_call_operand.vmem [shape: f32[1,128], index: 2, kind: input, shape index: {}]
  %s3 = inlined_call_operand.vmem [shape: bf16[32,128], index: 3, kind: output, shape index: {}]
  %s4 = sld [smem:[#allocation0]]
  $region53: #{atari_a2c_forward.4} parent=0
    _
  %s6 = ssub.s32 1, %s4
  %s7 = scalar_select 0, %s6, %s4
  loop: start=0, step=1, limit=4
  $region2: #{atari_a2c_forward.4} parent=0 // loop_pre_header
    _
  $region3: #{atari_a2c_forward.4} parent=0 // loop_header
    %s9 = sphi 0, %s13
    %p10 = scmp.ge.s32.totalorder %s9, 4
    %s16 = sphi 0, %s28
    %s17 = sphi 0, %s24
    %s18 = sphi 0, %s16
    %s19 = sphi 0, %s17
    %s20 = sphi 0, %s18
    %s21 = sphi 0, %s19
    %s33 = sphi 0, %s35
    %s36 = sphi 0, %s33
    %s37 = sphi 0, %s36
    %s53 = sphi 0, %s37
    %s59 = sphi 0, %s61
    %s62 = sphi 0, %s59
    %s63 = sphi 0, %s62
    %s79 = sphi 0, %s63
    %s83 = sphi 0, %s83
    %s85 = sphi 0, %s83
    %s86 = sphi 0, %s85
    %s100 = sphi 0, %s86
    %s106 = sphi 0, %s108
    %s109 = sphi 0, %s106
    %s110 = sphi 0, %s109
    %s126 = sphi 0, %s110
  $region4: #{atari_a2c_forward.4} parent=0 // loop_header_branch
    %12 = sbr.rel (%p10) target = $region8
  $region5: #{atari_a2c_forward.4} parent=0 // loop_body
    %s14 = ssub.s32 %s9, 1
    %s15 = ssub.s32 %s9, 2
    %s22 = sadd.s32 1, %s17
    %p23 = scmp.ge.s32.totalorder %s22, 1
    %s24 = scalar_select %p23, 0, %s22
    %s25 = sadd.s32 1, %s16
    %s26 = scalar_select %p23, %s25, %s16
    %p27 = scmp.ge.s32.totalorder %s26, 2
    %s28 = scalar_select %p27, 0, %s26
    %s29 = ssub.s32 %s16, %s28
    %s30 = ssub.s32 %s17, %s24
    %s31 = sor.u32 %s29, %s30
    %p32 = scmp.eq.s32.totalorder %s31, 0
    %s34 = sadd.s32 %s33, 1
    %s35 = scalar_select %p32, %s33, %s34
    %p38 = pneg %p32
    %p39 = scmp.eq.s32.totalorder %s9, 1
    %p40 = por %p38, %p39
    %p41 = scmp.ne.s32.totalorder %s33, %s36
    %p42 = scmp.eq.s32.totalorder %s9, 0
    %p43 = por %p41, %p42
    %p44 = scmp.ne.s32.totalorder %s33, %s36
    %p45 = scmp.eq.s32.totalorder %s14, 1
    %p46 = por %p44, %p45
    %p47 = scmp.ne.s32.totalorder %s36, %s37
    %p48 = scmp.eq.s32.totalorder %s14, 0
    %p49 = por %p47, %p48
    %p50 = scmp.ne.s32.totalorder %s36, %s37
    %p51 = scmp.eq.s32.totalorder %s15, 1
    %p52 = por %p50, %p51
    %p54 = scmp.ne.s32.totalorder %s37, %s53
    %p55 = scmp.eq.s32.totalorder %s15, 0
    %p56 = por %p54, %p55
    %s57 = ssub.s32 %s17, %s24
    %p58 = scmp.eq.s32.totalorder %s57, 0
    %s60 = sadd.s32 %s59, 1
    %s61 = scalar_select %p58, %s59, %s60
    %p64 = pneg %p58
    %p65 = scmp.eq.s32.totalorder %s9, 1
    %p66 = por %p64, %p65
    %p67 = scmp.ne.s32.totalorder %s59, %s62
    %p68 = scmp.eq.s32.totalorder %s9, 0
    %p69 = por %p67, %p68
    %p70 = scmp.ne.s32.totalorder %s59, %s62
    %p71 = scmp.eq.s32.totalorder %s14, 1
    %p72 = por %p70, %p71
    %p73 = scmp.ne.s32.totalorder %s62, %s63
    %p74 = scmp.eq.s32.totalorder %s14, 0
    %p75 = por %p73, %p74
    %p76 = scmp.ne.s32.totalorder %s62, %s63
    %p77 = scmp.eq.s32.totalorder %s15, 1
    %p78 = por %p76, %p77
    %p80 = scmp.ne.s32.totalorder %s63, %s79
    %p81 = scmp.eq.s32.totalorder %s15, 0
    %p82 = por %p80, %p81
    %s84 = sadd.s32 %s83, 1
    %p87 = scmp.eq.s32.totalorder %s9, 1
    %p88 = scmp.ne.s32.totalorder %s83, %s85
    %p89 = scmp.eq.s32.totalorder %s9, 0
    %p90 = por %p88, %p89
    %p91 = scmp.ne.s32.totalorder %s83, %s85
    %p92 = scmp.eq.s32.totalorder %s14, 1
    %p93 = por %p91, %p92
    %p94 = scmp.ne.s32.totalorder %s85, %s86
    %p95 = scmp.eq.s32.totalorder %s14, 0
    %p96 = por %p94, %p95
    %p97 = scmp.ne.s32.totalorder %s85, %s86
    %p98 = scmp.eq.s32.totalorder %s15, 1
    %p99 = por %p97, %p98
    %p101 = scmp.ne.s32.totalorder %s86, %s100
    %p102 = scmp.eq.s32.totalorder %s15, 0
    %p103 = por %p101, %p102
    %s104 = ssub.s32 %s16, %s28
    %p105 = scmp.eq.s32.totalorder %s104, 0
    %s107 = sadd.s32 %s106, 1
    %s108 = scalar_select %p105, %s106, %s107
    %p111 = pneg %p105
    %p112 = scmp.eq.s32.totalorder %s9, 1
    %p113 = por %p111, %p112
    %p114 = scmp.ne.s32.totalorder %s106, %s109
    %p115 = scmp.eq.s32.totalorder %s9, 0
    %p116 = por %p114, %p115
    %p117 = scmp.ne.s32.totalorder %s106, %s109
    %p118 = scmp.eq.s32.totalorder %s14, 1
    %p119 = por %p117, %p118
    %p120 = scmp.ne.s32.totalorder %s109, %s110
    %p121 = scmp.eq.s32.totalorder %s14, 0
    %p122 = por %p120, %p121
    %p123 = scmp.ne.s32.totalorder %s109, %s110
    %p124 = scmp.eq.s32.totalorder %s15, 1
    %p125 = por %p123, %p124
    %p127 = scmp.ne.s32.totalorder %s110, %s126
    %p128 = scmp.eq.s32.totalorder %s15, 0
    %p129 = por %p127, %p128
    %p130 = scmp.le.s32.totalorder 1, %s9
    %p131 = scmp.lt.s32.totalorder %s9, 3
    %p132 = pnand %p130, %p131
    %p133 = pneg %p132
    // Predicated region
    $region9: #{atari_a2c_forward.4} parent=5 // pred_check
      _
    $region10: #{atari_a2c_forward.4} parent=5 // pred_check_branch
      %135 = sbr.rel (%p132) target = $region12
    $region11: #{atari_a2c_forward.4} parent=5 // pred_region
      %s136 = ssub.s32 %s9, 1
      // Predicated region
      $region13: #{atari_a2c_forward.4} parent=11 // pred_check
        %p137 = pneg %p75
      $region14: #{atari_a2c_forward.4} parent=11 // pred_check_branch
        %139 = sbr.rel (%p137) target = $region16
      $region15: #{atari_a2c_forward.4} parent=11 // pred_region
        %s140 = smul.u32 64, %s19
        %p141 = scmp.lt.s32.totalorder %s140, 63
        %s142 = scalar_select %p141, %s140, 63
        %s143 = smul.addr %s142, 4
        %s144 = scalar_lea.vmem %s1, %s143
        %s145 = smul.u32 64, %s19
      $region16: #{atari_a2c_forward.4} parent=11 // pred_fallthru
        _
      // Predicated region
      $region17: #{atari_a2c_forward.4} parent=11 // pred_check
        %p146 = pneg %p96
      $region18: #{atari_a2c_forward.4} parent=11 // pred_check_branch
        %148 = sbr.rel (%p146) target = $region20
      $region19: #{atari_a2c_forward.4} parent=11 // pred_region
        _
      $region20: #{atari_a2c_forward.4} parent=11 // pred_fallthru
        _
    $region12: #{atari_a2c_forward.4} parent=5 // pred_fallthru
      _
    %p149 = scmp.lt.s32.totalorder %s9, 2
    // Predicated region
    $region21: #{atari_a2c_forward.4} parent=5 // pred_check
      %p150 = pneg %p149
    $region22: #{atari_a2c_forward.4} parent=5 // pred_check_branch
      %152 = sbr.rel (%p150) target = $region24
    $region23: #{atari_a2c_forward.4} parent=5 // pred_region
      // Predicated region
      $region25: #{atari_a2c_forward.4} parent=23 // pred_check
        %p153 = pneg %p43
      $region26: #{atari_a2c_forward.4} parent=23 // pred_check_branch
        %155 = sbr.rel (%p153) target = $region28
      $region27: #{atari_a2c_forward.4} parent=23 // pred_region
        %s156 = smul.u32 2, %s16
        %s157 = smul.u32 4, %s17
        %p158 = scmp.lt.s32.totalorder %s156, 3
        %s159 = scalar_select %p158, %s156, 3
        %p160 = scmp.lt.s32.totalorder %s157, 3
        %s161 = scalar_select %p160, %s157, 3
        %s162 = smul.addr %s159, 4
        %s163 = sadd.s32 %s161, %s162
        %s164 = smul.addr %s163, 4
        %s165 = scalar_lea.vmem %s0, %s164
        %s166 = smul.u32 2, %s16
        %s167 = smul.u32 4, %s17
      $region28: #{atari_a2c_forward.4} parent=23 // pred_fallthru
        _
    $region24: #{atari_a2c_forward.4} parent=5 // pred_fallthru
      _
    %p168 = scmp.le.s32.totalorder 1, %s9
    %p169 = scmp.lt.s32.totalorder %s9, 3
    %p170 = pnand %p168, %p169
    %p171 = pneg %p170
    // Predicated region
    $region29: #{atari_a2c_forward.4} parent=5 // pred_check
      _
    $region30: #{atari_a2c_forward.4} parent=5 // pred_check_branch
      %173 = sbr.rel (%p170) target = $region32
    $region31: #{atari_a2c_forward.4} parent=5 // pred_region
      %s174 = ssub.s32 %s9, 1
      %s175 = smul.u32 2, %s18
      %s176 = smul.u32 4, %s19
      %p177 = scmp.lt.s32.totalorder %s175, 3
      %s178 = scalar_select %p177, %s175, 3
      %p179 = scmp.lt.s32.totalorder %s176, 3
      %s180 = scalar_select %p179, %s176, 3
      %s181 = smul.addr %s178, 4
      %s182 = sadd.s32 %s180, %s181
      %s183 = smul.addr %s182, 4
      %s184 = scalar_lea.vmem %s0, %s183
      %p185 = pneg %p49
      %p186 = pneg %p46
      %s187 = smul.u32 64, %s19
      %p188 = scmp.lt.s32.totalorder %s187, 63
      %s189 = scalar_select %p188, %s187, 63
      %s190 = smul.addr %s189, 4
      %s191 = scalar_lea.vmem %s1, %s190
      %p192 = pneg %p75
      %p193 = pneg %p72
      %p194 = pneg %p96
      %p195 = pneg %p93
      %p196 = pneg %p122
      %p197 = pneg %p119
      %s198 = smul.u32 2, %s18
      %p199 = scmp.lt.s32.totalorder %s198, 3
      %s200 = scalar_select %p199, %s198, 3
      %s201 = smul.addr %s200, 4
      %s202 = scalar_lea.vmem %s3, %s201
      %s203 = smul.u32 2, %s18
      %s204 = smul.u32 4, %s19
      %p205 = scmp.lt.s32.totalorder %s203, 3
      %s206 = scalar_select %p205, %s203, 3
      %p207 = scmp.lt.s32.totalorder %s204, 3
      %s208 = scalar_select %p207, %s204, 3
      %s209 = smul.addr %s206, 4
      %s210 = sadd.s32 %s208, %s209
      %s211 = smul.addr %s210, 4
      %s212 = scalar_lea.vmem %s0, %s211
      %s213 = smul.u32 2, %s18
      %s214 = smul.u32 4, %s19
      %s215 = smul.u32 64, %s19
      %p216 = scmp.lt.s32.totalorder %s215, 63
      %s217 = scalar_select %p216, %s215, 63
      %s218 = smul.addr %s217, 4
      %s219 = scalar_lea.vmem %s1, %s218
      %s220 = smul.u32 64, %s19
      %s221 = smul.u32 2, %s18
      %p222 = scmp.lt.s32.totalorder %s221, 3
      %s223 = scalar_select %p222, %s221, 3
      %s224 = smul.addr %s223, 4
      %s225 = scalar_lea.vmem %s3, %s224
      %s226 = smul.u32 2, %s18
      %p228 = scmp.eq.s32.totalorder %s19, 0
      // Predicated region
      $region33: #{atari_a2c_forward.4} parent=31 // pred_check
        %p229 = pneg %p228
      $region34: #{atari_a2c_forward.4} parent=31 // pred_check_branch
        %231 = sbr.rel (%p229) target = $region36
      $region35: #{atari_a2c_forward.4} parent=31 // pred_region
        %232 = vst [vmem:[#allocation2] sm:$0xff] 0.0
        %233 = vst [vmem:[#allocation2 + $0x8] sm:$0xff] 0.0
      $region36: #{atari_a2c_forward.4} parent=31 // pred_fallthru
        _
      %v234 = vld [vmem:[#allocation2] sm:$0xff]
      %v235 = vld [vmem:[#allocation2 + $0x8] sm:$0xff]
      %v236 = vld [vmem:[%s212] sm:$0xff]
      %v237 = vld [vmem:[%s212 + $0x8] sm:$0xff]
      %v238 = vld [vmem:[%s212 + $0x10] sm:$0xff]
      %v239 = vld [vmem:[%s212 + $0x18] sm:$0xff]
      %v240 = vld [vmem:[%s219] sm:$0xf]
      %v241 = vld [vmem:[%s219 + $0x4] sm:$0xf]
      %v242 = vld [vmem:[%s219 + $0x8] sm:$0xf]
      %v243 = vld [vmem:[%s219 + $0xc] sm:$0xf]
      %v244 = vld [vmem:[%s219 + $0x10] sm:$0xf]
      %v245 = vld [vmem:[%s219 + $0x14] sm:$0xf]
      %v246 = vld [vmem:[%s219 + $0x18] sm:$0xf]
      %v247 = vld [vmem:[%s219 + $0x1c] sm:$0xf]
      %v248 = vld [vmem:[%s219 + $0x20] sm:$0xf]
      %v249 = vld [vmem:[%s219 + $0x24] sm:$0xf]
      %v250 = vld [vmem:[%s219 + $0x28] sm:$0xf]
      %v251 = vld [vmem:[%s219 + $0x2c] sm:$0xf]
      %v252 = vld [vmem:[%s219 + $0x30] sm:$0xf]
      %v253 = vld [vmem:[%s219 + $0x34] sm:$0xf]
      %v254 = vld [vmem:[%s219 + $0x38] sm:$0xf]
      %v255 = vld [vmem:[%s219 + $0x3c] sm:$0xf]
      %v256 = vld [vmem:[%s219 + $0x40] sm:$0xf]
      %v257 = vld [vmem:[%s219 + $0x44] sm:$0xf]
      %v258 = vld [vmem:[%s219 + $0x48] sm:$0xf]
      %v259 = vld [vmem:[%s219 + $0x4c] sm:$0xf]
      %v260 = vld [vmem:[%s219 + $0x50] sm:$0xf]
      %v261 = vld [vmem:[%s219 + $0x54] sm:$0xf]
      %v262 = vld [vmem:[%s219 + $0x58] sm:$0xf]
      %v263 = vld [vmem:[%s219 + $0x5c] sm:$0xf]
      %v264 = vld [vmem:[%s219 + $0x60] sm:$0xf]
      %v265 = vld [vmem:[%s219 + $0x64] sm:$0xf]
      %v266 = vld [vmem:[%s219 + $0x68] sm:$0xf]
      %v267 = vld [vmem:[%s219 + $0x6c] sm:$0xf]
      %v268 = vld [vmem:[%s219 + $0x70] sm:$0xf]
      %v269 = vld [vmem:[%s219 + $0x74] sm:$0xf]
      %v270 = vld [vmem:[%s219 + $0x78] sm:$0xf]
      %v271 = vld [vmem:[%s219 + $0x7c] sm:$0xf]
      %v272 = vld [vmem:[%s219 + $0x80] sm:$0xf]
      %v273 = vld [vmem:[%s219 + $0x84] sm:$0xf]
      %v274 = vld [vmem:[%s219 + $0x88] sm:$0xf]
      %v275 = vld [vmem:[%s219 + $0x8c] sm:$0xf]
      %v276 = vld [vmem:[%s219 + $0x90] sm:$0xf]
      %v277 = vld [vmem:[%s219 + $0x94] sm:$0xf]
      %v278 = vld [vmem:[%s219 + $0x98] sm:$0xf]
      %v279 = vld [vmem:[%s219 + $0x9c] sm:$0xf]
      %v280 = vld [vmem:[%s219 + $0xa0] sm:$0xf]
      %v281 = vld [vmem:[%s219 + $0xa4] sm:$0xf]
      %v282 = vld [vmem:[%s219 + $0xa8] sm:$0xf]
      %v283 = vld [vmem:[%s219 + $0xac] sm:$0xf]
      %v284 = vld [vmem:[%s219 + $0xb0] sm:$0xf]
      %v285 = vld [vmem:[%s219 + $0xb4] sm:$0xf]
      %v286 = vld [vmem:[%s219 + $0xb8] sm:$0xf]
      %v287 = vld [vmem:[%s219 + $0xbc] sm:$0xf]
      %v288 = vld [vmem:[%s219 + $0xc0] sm:$0xf]
      %v289 = vld [vmem:[%s219 + $0xc4] sm:$0xf]
      %v290 = vld [vmem:[%s219 + $0xc8] sm:$0xf]
      %v291 = vld [vmem:[%s219 + $0xcc] sm:$0xf]
      %v292 = vld [vmem:[%s219 + $0xd0] sm:$0xf]
      %v293 = vld [vmem:[%s219 + $0xd4] sm:$0xf]
      %v294 = vld [vmem:[%s219 + $0xd8] sm:$0xf]
      %v295 = vld [vmem:[%s219 + $0xdc] sm:$0xf]
      %v296 = vld [vmem:[%s219 + $0xe0] sm:$0xf]
      %v297 = vld [vmem:[%s219 + $0xe4] sm:$0xf]
      %v298 = vld [vmem:[%s219 + $0xe8] sm:$0xf]
      %v299 = vld [vmem:[%s219 + $0xec] sm:$0xf]
      %v300 = vld [vmem:[%s219 + $0xf0] sm:$0xf]
      %v301 = vld [vmem:[%s219 + $0xf4] sm:$0xf]
      %v302 = vld [vmem:[%s219 + $0xf8] sm:$0xf]
      %v303 = vld [vmem:[%s219 + $0xfc] sm:$0xf]
      %v308 = vunpack.c.l.b16 %v236
      %v309 = vunpack.c.h.b16 %v236
      %v310 = vunpack.c.l.b16 %v237
      %v311 = vunpack.c.h.b16 %v237
      %v312 = vunpack.c.l.b16 %v238
      %v313 = vunpack.c.h.b16 %v238
      %v314 = vunpack.c.l.b16 %v239
      %v315 = vunpack.c.h.b16 %v239
      %v316 = vpack.c.b16 %v312, %v308
      %v317 = vpack.c.b16 %v313, %v309
      %v318 = vpack.c.b16 %v314, %v310
      %v319 = vpack.c.b16 %v315, %v311
      %v388 = vunpack.c.l.b16 %v240
      %v389 = vunpack.c.l.b16 %v241
      %v390 = vunpack.c.l.b16 %v242
      %v391 = vunpack.c.l.b16 %v243
      %v392 = vunpack.c.l.b16 %v244
      %v393 = vunpack.c.l.b16 %v245
      %v394 = vunpack.c.l.b16 %v246
      %v395 = vunpack.c.l.b16 %v247
      %v396 = vunpack.c.l.b16 %v248
      %v397 = vunpack.c.l.b16 %v249
      %v398 = vunpack.c.l.b16 %v250
      %v399 = vunpack.c.l.b16 %v251
      %v400 = vunpack.c.l.b16 %v252
      %v401 = vunpack.c.l.b16 %v253
      %v402 = vunpack.c.l.b16 %v254
      %v403 = vunpack.c.l.b16 %v255
      %v404 = vunpack.c.l.b16 %v256
      %v405 = vunpack.c.l.b16 %v257
      %v406 = vunpack.c.l.b16 %v258
      %v407 = vunpack.c.l.b16 %v259
      %v408 = vunpack.c.l.b16 %v260
      %v409 = vunpack.c.l.b16 %v261
      %v410 = vunpack.c.l.b16 %v262
      %v411 = vunpack.c.l.b16 %v263
      %v412 = vunpack.c.l.b16 %v264
      %v413 = vunpack.c.l.b16 %v265
      %v414 = vunpack.c.l.b16 %v266
      %v415 = vunpack.c.l.b16 %v267
      %v416 = vunpack.c.l.b16 %v268
      %v417 = vunpack.c.l.b16 %v269
      %v418 = vunpack.c.l.b16 %v270
      %v419 = vunpack.c.l.b16 %v271
      %v420 = vunpack.c.l.b16 %v272
      %v421 = vunpack.c.l.b16 %v273
      %v422 = vunpack.c.l.b16 %v274
      %v423 = vunpack.c.l.b16 %v275
      %v424 = vunpack.c.l.b16 %v276
      %v425 = vunpack.c.l.b16 %v277
      %v426 = vunpack.c.l.b16 %v278
      %v427 = vunpack.c.l.b16 %v279
      %v428 = vunpack.c.l.b16 %v280
      %v429 = vunpack.c.l.b16 %v281
      %v430 = vunpack.c.l.b16 %v282
      %v431 = vunpack.c.l.b16 %v283
      %v432 = vunpack.c.l.b16 %v284
      %v433 = vunpack.c.l.b16 %v285
      %v434 = vunpack.c.l.b16 %v286
      %v435 = vunpack.c.l.b16 %v287
      %v436 = vunpack.c.l.b16 %v288
      %v437 = vunpack.c.l.b16 %v289
      %v438 = vunpack.c.l.b16 %v290
      %v439 = vunpack.c.l.b16 %v291
      %v440 = vunpack.c.l.b16 %v292
      %v441 = vunpack.c.l.b16 %v293
      %v442 = vunpack.c.l.b16 %v294
      %v443 = vunpack.c.l.b16 %v295
      %v444 = vunpack.c.l.b16 %v296
      %v445 = vunpack.c.l.b16 %v297
      %v446 = vunpack.c.l.b16 %v298
      %v447 = vunpack.c.l.b16 %v299
      %v448 = vunpack.c.l.b16 %v300
      %v449 = vunpack.c.l.b16 %v301
      %v450 = vunpack.c.l.b16 %v302
      %v451 = vunpack.c.l.b16 %v303
      %v452 = vpack.c.b16 %v389, %v388
      %v453 = vpack.c.b16 %v391, %v390
      %v454 = vpack.c.b16 %v393, %v392
      %v455 = vpack.c.b16 %v395, %v394
      %v456 = vpack.c.b16 %v397, %v396
      %v457 = vpack.c.b16 %v399, %v398
      %v458 = vpack.c.b16 %v401, %v400
      %v459 = vpack.c.b16 %v403, %v402
      %v460 = vpack.c.b16 %v405, %v404
      %v461 = vpack.c.b16 %v407, %v406
      %v462 = vpack.c.b16 %v409, %v408
      %v463 = vpack.c.b16 %v411, %v410
      %v464 = vpack.c.b16 %v413, %v412
      %v465 = vpack.c.b16 %v415, %v414
      %v466 = vpack.c.b16 %v417, %v416
      %v467 = vpack.c.b16 %v419, %v418
      %v468 = vpack.c.b16 %v421, %v420
      %v469 = vpack.c.b16 %v423, %v422
      %v470 = vpack.c.b16 %v425, %v424
      %v471 = vpack.c.b16 %v427, %v426
      %v472 = vpack.c.b16 %v429, %v428
      %v473 = vpack.c.b16 %v431, %v430
      %v474 = vpack.c.b16 %v433, %v432
      %v475 = vpack.c.b16 %v435, %v434
      %v476 = vpack.c.b16 %v437, %v436
      %v477 = vpack.c.b16 %v439, %v438
      %v478 = vpack.c.b16 %v441, %v440
      %v479 = vpack.c.b16 %v443, %v442
      %v480 = vpack.c.b16 %v445, %v444
      %v481 = vpack.c.b16 %v447, %v446
      %v482 = vpack.c.b16 %v449, %v448
      %v483 = vpack.c.b16 %v451, %v450
      %516 = vmatprep.subr.bf16.mxu0 0
      %517 = vmatpush1.bf16.msra.mxu0 %v452
      %518 = vmatprep.subr.bf16.mxu0 0
      %519 = vmatpush1.bf16.msra.mxu0 %v453
      %520 = vmatprep.subr.bf16.mxu0 0
      %521 = vmatpush1.bf16.msra.mxu0 %v454
      %522 = vmatprep.subr.bf16.mxu0 0
      %523 = vmatpush1.bf16.msra.mxu0 %v455
      %524 = vmatprep.subr.bf16.mxu0 0
      %525 = vmatpush1.bf16.msra.mxu0 %v456
      %526 = vmatprep.subr.bf16.mxu0 0
      %527 = vmatpush1.bf16.msra.mxu0 %v457
      %528 = vmatprep.subr.bf16.mxu0 0
      %529 = vmatpush1.bf16.msra.mxu0 %v458
      %530 = vmatprep.subr.bf16.mxu0 0
      %531 = vmatpush1.bf16.msra.mxu0 %v459
      %532 = vmatprep.subr.bf16.mxu0 0
      %533 = vmatpush1.bf16.msra.mxu0 %v460
      %534 = vmatprep.subr.bf16.mxu0 0
      %535 = vmatpush1.bf16.msra.mxu0 %v461
      %536 = vmatprep.subr.bf16.mxu0 0
      %537 = vmatpush1.bf16.msra.mxu0 %v462
      %538 = vmatprep.subr.bf16.mxu0 0
      %539 = vmatpush1.bf16.msra.mxu0 %v463
      %540 = vmatprep.subr.bf16.mxu0 0
      %541 = vmatpush1.bf16.msra.mxu0 %v464
      %542 = vmatprep.subr.bf16.mxu0 0
      %543 = vmatpush1.bf16.msra.mxu0 %v465
      %544 = vmatprep.subr.bf16.mxu0 0
      %545 = vmatpush1.bf16.msra.mxu0 %v466
      %546 = vmatprep.subr.bf16.mxu0 0
      %547 = vmatpush1.bf16.msra.mxu0 %v467
      %548 = vmatprep.mubr.bf16.mxu0 %v317
      %549 = vmatmul.mubr.bf16.gmra.mrb[0].mxu0 %v316
      %v550 = vpop.f32.mrb[0].mxu0
      %v551 = vadd.f32 0.0, %v550
      %v552 = vpop.f32.mrb[0].mxu0
      %v553 = vpop.f32.mrb[0].mxu0
      %v554 = vadd.f32 0.0, %v553
      %v555 = vpop.f32.mrb[0].mxu0
      %556 = vdwg.mxu0
      %557 = vmatprep.subr.bf16.mxu0 0
      %558 = vmatpush1.bf16.msra.mxu0 %v468
      %559 = vmatprep.subr.bf16.mxu0 0
      %560 = vmatpush1.bf16.msra.mxu0 %v469
      %561 = vmatprep.subr.bf16.mxu0 0
      %562 = vmatpush1.bf16.msra.mxu0 %v470
      %563 = vmatprep.subr.bf16.mxu0 0
      %564 = vmatpush1.bf16.msra.mxu0 %v471
      %565 = vmatprep.subr.bf16.mxu0 0
      %566 = vmatpush1.bf16.msra.mxu0 %v472
      %567 = vmatprep.subr.bf16.mxu0 0
      %568 = vmatpush1.bf16.msra.mxu0 %v473
      %569 = vmatprep.subr.bf16.mxu0 0
      %570 = vmatpush1.bf16.msra.mxu0 %v474
      %571 = vmatprep.subr.bf16.mxu0 0
      %572 = vmatpush1.bf16.msra.mxu0 %v475
      %573 = vmatprep.subr.bf16.mxu0 0
      %574 = vmatpush1.bf16.msra.mxu0 %v476
      %575 = vmatprep.subr.bf16.mxu0 0
      %576 = vmatpush1.bf16.msra.mxu0 %v477
      %577 = vmatprep.subr.bf16.mxu0 0
      %578 = vmatpush1.bf16.msra.mxu0 %v478
      %579 = vmatprep.subr.bf16.mxu0 0
      %580 = vmatpush1.bf16.msra.mxu0 %v479
      %581 = vmatprep.subr.bf16.mxu0 0
      %582 = vmatpush1.bf16.msra.mxu0 %v480
      %583 = vmatprep.subr.bf16.mxu0 0
      %584 = vmatpush1.bf16.msra.mxu0 %v481
      %585 = vmatprep.subr.bf16.mxu0 0
      %586 = vmatpush1.bf16.msra.mxu0 %v482
      %587 = vmatprep.subr.bf16.mxu0 0
      %588 = vmatpush1.bf16.msra.mxu0 %v483
      %589 = vmatprep.mubr.bf16.mxu0 %v319
      %590 = vmatmul.mubr.bf16.gmra.mrb[0].mxu0 %v318
      %v591 = vpop.f32.mrb[0].mxu0
      %v592 = vadd.f32 %v551, %v591
      %v593 = vpop.f32.mrb[0].mxu0
      %v594 = vpop.f32.mrb[0].mxu0
      %v595 = vadd.f32 %v554, %v594
      %v596 = vpop.f32.mrb[0].mxu0
      %597 = vdwg.mxu0
      %v598 = vadd.f32 %v234, %v592
      %v599 = vadd.f32 %v235, %v595
      %600 = vst [vmem:[#allocation2] sm:$0xff] %v598
      %601 = vst [vmem:[#allocation2 + $0x8] sm:$0xff] %v599
      // Predicated region
      $region37: #{atari_a2c_forward.4} parent=31 // pred_check
        %p602 = pneg %p228
      $region38: #{atari_a2c_forward.4} parent=31 // pred_check_branch
        %604 = sbr.rel (%p602) target = $region40
      $region39: #{atari_a2c_forward.4} parent=31 // pred_region
        %v605 = vld [vmem:[#allocation2] sm:$0xff]
        %v606 = vld [vmem:[#allocation2 + $0x8] sm:$0xff]
        %v607 = vld [vmem:[%s2] sm:$0x1]
        %v609 = vlaneseq
        %v610 = vshrl.u32 %v609, 7
        %v611 = vsub.s32 0, %v610
        %v612 = vrot.slane %v607, %v611
        %v614 = vadd.f32 %v605, %v612
        %v615 = vadd.f32 %v606, %v612
        %v616 = vmax.f32 %v614, 0.0
        %v617 = vmax.f32 %v615, 0.0
        %v618 = vpack.c.bf16 %v617, %v616
        %v620 = vunpack.c.l.b16 %v618
        %v621 = vunpack.c.h.b16 %v618
        %v622 = vpack.c.b16 %v620, %v620
        %v623 = vpack.c.b16 %v621, %v621
        %626 = vst [vmem:[%s225] sm:$0xf] %v622
        %627 = vst [vmem:[%s225 + $0x4] sm:$0xf] %v623
      $region40: #{atari_a2c_forward.4} parent=31 // pred_fallthru
        _
      %s628 = smul.u32 2, %s18
      %p629 = scmp.lt.s32.totalorder %s628, 3
      %s630 = scalar_select %p629, %s628, 3
      %s631 = smul.addr %s630, 4
      %s632 = scalar_lea.vmem %s3, %s631
      // Predicated region
      $region41: #{atari_a2c_forward.4} parent=31 // pred_check
        %p633 = pneg %p119
      $region42: #{atari_a2c_forward.4} parent=31 // pred_check_branch
        %635 = sbr.rel (%p633) target = $region44
      $region43: #{atari_a2c_forward.4} parent=31 // pred_region
        %s636 = smul.u32 2, %s18
      $region44: #{atari_a2c_forward.4} parent=31 // pred_fallthru
        _
    $region32: #{atari_a2c_forward.4} parent=5 // pred_fallthru
      _
    %p637 = scmp.le.s32.totalorder 2, %s9
    // Predicated region
    $region45: #{atari_a2c_forward.4} parent=5 // pred_check
      %p638 = pneg %p637
    $region46: #{atari_a2c_forward.4} parent=5 // pred_check_branch
      %640 = sbr.rel (%p638) target = $region48
    $region47: #{atari_a2c_forward.4} parent=5 // pred_region
      %s641 = ssub.s32 %s9, 2
      // Predicated region
      $region49: #{atari_a2c_forward.4} parent=47 // pred_check
        %p642 = pneg %p125
      $region50: #{atari_a2c_forward.4} parent=47 // pred_check_branch
        %644 = sbr.rel (%p642) target = $region52
      $region51: #{atari_a2c_forward.4} parent=47 // pred_region
        %s645 = smul.u32 2, %s20
        %p646 = scmp.lt.s32.totalorder %s645, 3
        %s647 = scalar_select %p646, %s645, 3
        %s648 = smul.addr %s647, 4
        %s649 = scalar_lea.vmem %s3, %s648
      $region52: #{atari_a2c_forward.4} parent=47 // pred_fallthru
        _
    $region48: #{atari_a2c_forward.4} parent=5 // pred_fallthru
      _
  $region6: #{atari_a2c_forward.4} parent=0 // loop_footer
    %s13 = sadd.s32 1, %s9
  $region7: #{atari_a2c_forward.4} parent=0 // loop_footer_branch
    %8 = sbr.rel target = $region3
  $region8: #{atari_a2c_forward.4} parent=0 // loop_exit
    _

// kernel: atari_a2c_forward.5
$region0: #{atari_a2c_forward.5}
  #allocation0 [shape = 'u32[]', space=smem, size = 0x4, offset = 0x4, fixed_abs, tag = 'smem constant byte address 0x4 - core index']
  #allocation1 [shape = 'u32[144,128]{1,0:T(1,128)}', space=vmem, size = 0x12000, scoped, tag = 'internal scratch']
  #allocation2 [shape = 'f32[16,1024]{1,0:T(8,128)}', space=vmem, size = 0x10000, scoped, tag = 'scratch operand']
  %s0 = inlined_call_operand.vmem [shape: bf16[1,16,640], index: 0, kind: input, shape index: {}]
  %s1 = inlined_call_operand.vmem [shape: bf16[640,64], index: 1, kind: input, shape index: {}]
  %s2 = inlined_call_operand.vmem [shape: f32[1,64], index: 2, kind: input, shape index: {}]
  %s3 = inlined_call_operand.vmem [shape: bf16[1,64,1024], index: 3, kind: input, shape index: {}]
  %s4 = inlined_call_operand.vmem [shape: f32[1,1024], index: 4, kind: input, shape index: {}]
  %s5 = inlined_call_operand.vmem [shape: bf16[1024,128], index: 5, kind: input, shape index: {}]
  %s6 = inlined_call_operand.vmem [shape: f32[1,128], index: 6, kind: input, shape index: {}]
  %s7 = inlined_call_operand.vmem [shape: f32[16,128], index: 7, kind: output, shape index: {}]
  %s8 = sld [smem:[#allocation0]]
  $region46: #{atari_a2c_forward.5} parent=0
    _
  %s10 = ssub.s32 1, %s8
  %s11 = scalar_select 0, %s10, %s8
  // Predicated region
  $region2: #{atari_a2c_forward.5} parent=0 // pred_check
    _
  $region3: #{atari_a2c_forward.5} parent=0 // pred_check_branch
    %13 = sbr.rel (0) target = $region5
  $region4: #{atari_a2c_forward.5} parent=0 // pred_region
    _
  $region5: #{atari_a2c_forward.5} parent=0 // pred_fallthru
    _
  // Predicated region
  $region6: #{atari_a2c_forward.5} parent=0 // pred_check
    _
  $region7: #{atari_a2c_forward.5} parent=0 // pred_check_branch
    %15 = sbr.rel (0) target = $region9
  $region8: #{atari_a2c_forward.5} parent=0 // pred_region
    _
  $region9: #{atari_a2c_forward.5} parent=0 // pred_fallthru
    _
  // Predicated region
  $region10: #{atari_a2c_forward.5} parent=0 // pred_check
    _
  $region11: #{atari_a2c_forward.5} parent=0 // pred_check_branch
    %17 = sbr.rel (0) target = $region13
  $region12: #{atari_a2c_forward.5} parent=0 // pred_region
    _
  $region13: #{atari_a2c_forward.5} parent=0 // pred_fallthru
    _
  // Predicated region
  $region14: #{atari_a2c_forward.5} parent=0 // pred_check
    _
  $region15: #{atari_a2c_forward.5} parent=0 // pred_check_branch
    %19 = sbr.rel (0) target = $region17
  $region16: #{atari_a2c_forward.5} parent=0 // pred_region
    _
  $region17: #{atari_a2c_forward.5} parent=0 // pred_fallthru
    _
  // Predicated region
  $region18: #{atari_a2c_forward.5} parent=0 // pred_check
    _
  $region19: #{atari_a2c_forward.5} parent=0 // pred_check_branch
    %21 = sbr.rel (0) target = $region21
  $region20: #{atari_a2c_forward.5} parent=0 // pred_region
    _
  $region21: #{atari_a2c_forward.5} parent=0 // pred_fallthru
    _
  // Predicated region
  $region22: #{atari_a2c_forward.5} parent=0 // pred_check
    _
  $region23: #{atari_a2c_forward.5} parent=0 // pred_check_branch
    %23 = sbr.rel (0) target = $region25
  $region24: #{atari_a2c_forward.5} parent=0 // pred_region
    _
  $region25: #{atari_a2c_forward.5} parent=0 // pred_fallthru
    _
  // Predicated region
  $region26: #{atari_a2c_forward.5} parent=0 // pred_check
    _
  $region27: #{atari_a2c_forward.5} parent=0 // pred_check_branch
    %25 = sbr.rel (0) target = $region29
  $region28: #{atari_a2c_forward.5} parent=0 // pred_region
    _
  $region29: #{atari_a2c_forward.5} parent=0 // pred_fallthru
    _
  %p27 = scmp.eq.s32.totalorder 0, 0
  // Predicated region
  $region30: #{atari_a2c_forward.5} parent=0 // pred_check
    %p28 = pneg %p27
  $region31: #{atari_a2c_forward.5} parent=0 // pred_check_branch
    %30 = sbr.rel (%p28) target = $region33
  $region32: #{atari_a2c_forward.5} parent=0 // pred_region
    %31 = vst [vmem:[#allocation2] sm:$0xff] 0.0
    %32 = vst [vmem:[#allocation2 + $0x8] sm:$0xff] 0.0
    %33 = vst [vmem:[#allocation2 + $0x10] sm:$0xff] 0.0
    %34 = vst [vmem:[#allocation2 + $0x18] sm:$0xff] 0.0
    %35 = vst [vmem:[#allocation2 + $0x20] sm:$0xff] 0.0
    %36 = vst [vmem:[#allocation2 + $0x28] sm:$0xff] 0.0
    %37 = vst [vmem:[#allocation2 + $0x30] sm:$0xff] 0.0
    %38 = vst [vmem:[#allocation2 + $0x38] sm:$0xff] 0.0
    %39 = vst [vmem:[#allocation2 + $0x40] sm:$0xff] 0.0
    %40 = vst [vmem:[#allocation2 + $0x48] sm:$0xff] 0.0
    %41 = vst [vmem:[#allocation2 + $0x50] sm:$0xff] 0.0
    %42 = vst [vmem:[#allocation2 + $0x58] sm:$0xff] 0.0
    %43 = vst [vmem:[#allocation2 + $0x60] sm:$0xff] 0.0
    %44 = vst [vmem:[#allocation2 + $0x68] sm:$0xff] 0.0
    %45 = vst [vmem:[#allocation2 + $0x70] sm:$0xff] 0.0
    %46 = vst [vmem:[#allocation2 + $0x78] sm:$0xff] 0.0
  $region33: #{atari_a2c_forward.5} parent=0 // pred_fallthru
    _
  %v47 = vld [vmem:[%s0] sm:$0xff]
  %v48 = vld [vmem:[%s0 + $0x8] sm:$0xff]
  %v49 = vld [vmem:[%s0 + $0x10] sm:$0xf]
  %v50 = vld [vmem:[%s0 + $0x14] sm:$0xff]
  %v51 = vld [vmem:[%s0 + $0x1c] sm:$0xff]
  %v52 = vld [vmem:[%s0 + $0x24] sm:$0xf]
  %v53 = vld [vmem:[%s1] sm:$0xf]
  %v54 = vld [vmem:[%s1 + $0x4] sm:$0xf]
  %v55 = vld [vmem:[%s1 + $0x8] sm:$0xf]
  %v56 = vld [vmem:[%s1 + $0xc] sm:$0xf]
  %v57 = vld [vmem:[%s1 + $0x10] sm:$0xf]
  %v58 = vld [vmem:[%s1 + $0x14] sm:$0xf]
  %v59 = vld [vmem:[%s1 + $0x18] sm:$0xf]
  %v60 = vld [vmem:[%s1 + $0x1c] sm:$0xf]
  %v61 = vld [vmem:[%s1 + $0x20] sm:$0xf]
  %v62 = vld [vmem:[%s1 + $0x24] sm:$0xf]
  %v63 = vld [vmem:[%s1 + $0x28] sm:$0xf]
  %v64 = vld [vmem:[%s1 + $0x2c] sm:$0xf]
  %v65 = vld [vmem:[%s1 + $0x30] sm:$0xf]
  %v66 = vld [vmem:[%s1 + $0x34] sm:$0xf]
  %v67 = vld [vmem:[%s1 + $0x38] sm:$0xf]
  %v68 = vld [vmem:[%s1 + $0x3c] sm:$0xf]
  %v69 = vld [vmem:[%s1 + $0x40] sm:$0xf]
  %v70 = vld [vmem:[%s1 + $0x44] sm:$0xf]
  %v71 = vld [vmem:[%s1 + $0x48] sm:$0xf]
  %v72 = vld [vmem:[%s1 + $0x4c] sm:$0xf]
  %v73 = vld [vmem:[%s1 + $0x50] sm:$0xf]
  %v74 = vld [vmem:[%s1 + $0x54] sm:$0xf]
  %v75 = vld [vmem:[%s1 + $0x58] sm:$0xf]
  %v76 = vld [vmem:[%s1 + $0x5c] sm:$0xf]
  %v77 = vld [vmem:[%s1 + $0x60] sm:$0xf]
  %v78 = vld [vmem:[%s1 + $0x64] sm:$0xf]
  %v79 = vld [vmem:[%s1 + $0x68] sm:$0xf]
  %v80 = vld [vmem:[%s1 + $0x6c] sm:$0xf]
  %v81 = vld [vmem:[%s1 + $0x70] sm:$0xf]
  %v82 = vld [vmem:[%s1 + $0x74] sm:$0xf]
  %v83 = vld [vmem:[%s1 + $0x78] sm:$0xf]
  %v84 = vld [vmem:[%s1 + $0x7c] sm:$0xf]
  %v85 = vld [vmem:[%s1 + $0x80] sm:$0xf]
  %v86 = vld [vmem:[%s1 + $0x84] sm:$0xf]
  %v87 = vld [vmem:[%s1 + $0x88] sm:$0xf]
  %v88 = vld [vmem:[%s1 + $0x8c] sm:$0xf]
  %v89 = vld [vmem:[%s1 + $0x90] sm:$0xf]
  %v90 = vld [vmem:[%s1 + $0x94] sm:$0xf]
  %v91 = vld [vmem:[%s1 + $0x98] sm:$0xf]
  %v92 = vld [vmem:[%s1 + $0x9c] sm:$0xf]
  %v93 = vld [vmem:[%s1 + $0xa0] sm:$0xf]
  %v94 = vld [vmem:[%s1 + $0xa4] sm:$0xf]
  %v95 = vld [vmem:[%s1 + $0xa8] sm:$0xf]
  %v96 = vld [vmem:[%s1 + $0xac] sm:$0xf]
  %v97 = vld [vmem:[%s1 + $0xb0] sm:$0xf]
  %v98 = vld [vmem:[%s1 + $0xb4] sm:$0xf]
  %v99 = vld [vmem:[%s1 + $0xb8] sm:$0xf]
  %v100 = vld [vmem:[%s1 + $0xbc] sm:$0xf]
  %v101 = vld [vmem:[%s1 + $0xc0] sm:$0xf]
  %v102 = vld [vmem:[%s1 + $0xc4] sm:$0xf]
  %v103 = vld [vmem:[%s1 + $0xc8] sm:$0xf]
  %v104 = vld [vmem:[%s1 + $0xcc] sm:$0xf]
  %v105 = vld [vmem:[%s1 + $0xd0] sm:$0xf]
  %v106 = vld [vmem:[%s1 + $0xd4] sm:$0xf]
  %v107 = vld [vmem:[%s1 + $0xd8] sm:$0xf]
  %v108 = vld [vmem:[%s1 + $0xdc] sm:$0xf]
  %v109 = vld [vmem:[%s1 + $0xe0] sm:$0xf]
  %v110 = vld [vmem:[%s1 + $0xe4] sm:$0xf]
  %v111 = vld [vmem:[%s1 + $0xe8] sm:$0xf]
  %v112 = vld [vmem:[%s1 + $0xec] sm:$0xf]
  %v113 = vld [vmem:[%s1 + $0xf0] sm:$0xf]
  %v114 = vld [vmem:[%s1 + $0xf4] sm:$0xf]
  %v115 = vld [vmem:[%s1 + $0xf8] sm:$0xf]
  %v116 = vld [vmem:[%s1 + $0xfc] sm:$0xf]
  %v117 = vld [vmem:[%s1 + $0x100] sm:$0xf]
  %v118 = vld [vmem:[%s1 + $0x104] sm:$0xf]
  %v119 = vld [vmem:[%s1 + $0x108] sm:$0xf]
  %v120 = vld [vmem:[%s1 + $0x10c] sm:$0xf]
  %v121 = vld [vmem:[%s1 + $0x110] sm:$0xf]
  %v122 = vld [vmem:[%s1 + $0x114] sm:$0xf]
  %v123 = vld [vmem:[%s1 + $0x118] sm:$0xf]
  %v124 = vld [vmem:[%s1 + $0x11c] sm:$0xf]
  %v125 = vld [vmem:[%s1 + $0x120] sm:$0xf]
  %v126 = vld [vmem:[%s1 + $0x124] sm:$0xf]
  %v127 = vld [vmem:[%s1 + $0x128] sm:$0xf]
  %v128 = vld [vmem:[%s1 + $0x12c] sm:$0xf]
  %v129 = vld [vmem:[%s1 + $0x130] sm:$0xf]
  %v130 = vld [vmem:[%s1 + $0x134] sm:$0xf]
  %v131 = vld [vmem:[%s1 + $0x138] sm:$0xf]
  %v132 = vld [vmem:[%s1 + $0x13c] sm:$0xf]
  %v133 = vld [vmem:[%s2] sm:$0x1]
  %v135 = vlaneseq
  %v136 = vshrl.u32 %v135, 7
  %v137 = vsub.s32 0, %v136
  %v138 = vrot.slane %v133, %v137
  %v146 = vunpack.c.l.b16 %v47
  %v147 = vunpack.c.h.b16 %v47
  %v148 = vunpack.c.l.b16 %v48
  %v149 = vunpack.c.h.b16 %v48
  %v150 = vunpack.c.l.b16 %v49
  %v151 = vunpack.c.l.b16 %v50
  %v152 = vunpack.c.h.b16 %v50
  %v153 = vunpack.c.l.b16 %v51
  %v154 = vunpack.c.h.b16 %v51
  %v155 = vunpack.c.l.b16 %v52
  %v156 = vpack.c.b16 %v151, %v146
  %v157 = vpack.c.b16 %v152, %v147
  %v158 = vpack.c.b16 %v153, %v148
  %v159 = vpack.c.b16 %v154, %v149
  %v160 = vpack.c.b16 %v155, %v150
  %v246 = vunpack.c.l.b16 %v53
  %v247 = vunpack.c.l.b16 %v54
  %v248 = vunpack.c.l.b16 %v55
  %v249 = vunpack.c.l.b16 %v56
  %v250 = vunpack.c.l.b16 %v57
  %v251 = vunpack.c.l.b16 %v58
  %v252 = vunpack.c.l.b16 %v59
  %v253 = vunpack.c.l.b16 %v60
  %v254 = vunpack.c.l.b16 %v61
  %v255 = vunpack.c.l.b16 %v62
  %v256 = vunpack.c.l.b16 %v63
  %v257 = vunpack.c.l.b16 %v64
  %v258 = vunpack.c.l.b16 %v65
  %v259 = vunpack.c.l.b16 %v66
  %v260 = vunpack.c.l.b16 %v67
  %v261 = vunpack.c.l.b16 %v68
  %v262 = vunpack.c.l.b16 %v69
  %v263 = vunpack.c.l.b16 %v70
  %v264 = vunpack.c.l.b16 %v71
  %v265 = vunpack.c.l.b16 %v72
  %v266 = vunpack.c.l.b16 %v73
  %v267 = vunpack.c.l.b16 %v74
  %v268 = vunpack.c.l.b16 %v75
  %v269 = vunpack.c.l.b16 %v76
  %v270 = vunpack.c.l.b16 %v77
  %v271 = vunpack.c.l.b16 %v78
  %v272 = vunpack.c.l.b16 %v79
  %v273 = vunpack.c.l.b16 %v80
  %v274 = vunpack.c.l.b16 %v81
  %v275 = vunpack.c.l.b16 %v82
  %v276 = vunpack.c.l.b16 %v83
  %v277 = vunpack.c.l.b16 %v84
  %v278 = vunpack.c.l.b16 %v85
  %v279 = vunpack.c.l.b16 %v86
  %v280 = vunpack.c.l.b16 %v87
  %v281 = vunpack.c.l.b16 %v88
  %v282 = vunpack.c.l.b16 %v89
  %v283 = vunpack.c.l.b16 %v90
  %v284 = vunpack.c.l.b16 %v91
  %v285 = vunpack.c.l.b16 %v92
  %v286 = vunpack.c.l.b16 %v93
  %v287 = vunpack.c.l.b16 %v94
  %v288 = vunpack.c.l.b16 %v95
  %v289 = vunpack.c.l.b16 %v96
  %v290 = vunpack.c.l.b16 %v97
  %v291 = vunpack.c.l.b16 %v98
  %v292 = vunpack.c.l.b16 %v99
  %v293 = vunpack.c.l.b16 %v100
  %v294 = vunpack.c.l.b16 %v101
  %v295 = vunpack.c.l.b16 %v102
  %v296 = vunpack.c.l.b16 %v103
  %v297 = vunpack.c.l.b16 %v104
  %v298 = vunpack.c.l.b16 %v105
  %v299 = vunpack.c.l.b16 %v106
  %v300 = vunpack.c.l.b16 %v107
  %v301 = vunpack.c.l.b16 %v108
  %v302 = vunpack.c.l.b16 %v109
  %v303 = vunpack.c.l.b16 %v110
  %v304 = vunpack.c.l.b16 %v111
  %v305 = vunpack.c.l.b16 %v112
  %v306 = vunpack.c.l.b16 %v113
  %v307 = vunpack.c.l.b16 %v114
  %v308 = vunpack.c.l.b16 %v115
  %v309 = vunpack.c.l.b16 %v116
  %v310 = vunpack.c.l.b16 %v117
  %v311 = vunpack.c.l.b16 %v118
  %v312 = vunpack.c.l.b16 %v119
  %v313 = vunpack.c.l.b16 %v120
  %v314 = vunpack.c.l.b16 %v121
  %v315 = vunpack.c.l.b16 %v122
  %v316 = vunpack.c.l.b16 %v123
  %v317 = vunpack.c.l.b16 %v124
  %v318 = vunpack.c.l.b16 %v125
  %v319 = vunpack.c.l.b16 %v126
  %v320 = vunpack.c.l.b16 %v127
  %v321 = vunpack.c.l.b16 %v128
  %v322 = vunpack.c.l.b16 %v129
  %v323 = vunpack.c.l.b16 %v130
  %v324 = vunpack.c.l.b16 %v131
  %v325 = vunpack.c.l.b16 %v132
  %v326 = vpack.c.b16 %v247, %v246
  %v327 = vpack.c.b16 %v249, %v248
  %v328 = vpack.c.b16 %v251, %v250
  %v329 = vpack.c.b16 %v253, %v252
  %v330 = vpack.c.b16 %v255, %v254
  %v331 = vpack.c.b16 %v257, %v256
  %v332 = vpack.c.b16 %v259, %v258
  %v333 = vpack.c.b16 %v261, %v260
  %v334 = vpack.c.b16 %v263, %v262
  %v335 = vpack.c.b16 %v265, %v264
  %v336 = vpack.c.b16 %v267, %v266
  %v337 = vpack.c.b16 %v269, %v268
  %v338 = vpack.c.b16 %v271, %v270
  %v339 = vpack.c.b16 %v273, %v272
  %v340 = vpack.c.b16 %v275, %v274
  %v341 = vpack.c.b16 %v277, %v276
  %v342 = vpack.c.b16 %v279, %v278
  %v343 = vpack.c.b16 %v281, %v280
  %v344 = vpack.c.b16 %v283, %v282
  %v345 = vpack.c.b16 %v285, %v284
  %v346 = vpack.c.b16 %v287, %v286
  %v347 = vpack.c.b16 %v289, %v288
  %v348 = vpack.c.b16 %v291, %v290
  %v349 = vpack.c.b16 %v293, %v292
  %v350 = vpack.c.b16 %v295, %v294
  %v351 = vpack.c.b16 %v297, %v296
  %v352 = vpack.c.b16 %v299, %v298
  %v353 = vpack.c.b16 %v301, %v300
  %v354 = vpack.c.b16 %v303, %v302
  %v355 = vpack.c.b16 %v305, %v304
  %v356 = vpack.c.b16 %v307, %v306
  %v357 = vpack.c.b16 %v309, %v308
  %v358 = vpack.c.b16 %v311, %v310
  %v359 = vpack.c.b16 %v313, %v312
  %v360 = vpack.c.b16 %v315, %v314
  %v361 = vpack.c.b16 %v317, %v316
  %v362 = vpack.c.b16 %v319, %v318
  %v363 = vpack.c.b16 %v321, %v320
  %v364 = vpack.c.b16 %v323, %v322
  %v365 = vpack.c.b16 %v325, %v324
  %406 = vmatprep.subr.bf16.mxu0 0
  %407 = vmatpush1.bf16.msra.mxu0 %v326
  %408 = vmatprep.subr.bf16.mxu0 0
  %409 = vmatpush1.bf16.msra.mxu0 %v327
  %410 = vmatprep.subr.bf16.mxu0 0
  %411 = vmatpush1.bf16.msra.mxu0 %v328
  %412 = vmatprep.subr.bf16.mxu0 0
  %413 = vmatpush1.bf16.msra.mxu0 %v329
  %414 = vmatprep.subr.bf16.mxu0 0
  %415 = vmatpush1.bf16.msra.mxu0 %v330
  %416 = vmatprep.subr.bf16.mxu0 0
  %417 = vmatpush1.bf16.msra.mxu0 %v331
  %418 = vmatprep.subr.bf16.mxu0 0
  %419 = vmatpush1.bf16.msra.mxu0 %v332
  %420 = vmatprep.subr.bf16.mxu0 0
  %421 = vmatpush1.bf16.msra.mxu0 %v333
  %422 = vmatprep.subr.bf16.mxu0 0
  %423 = vmatpush1.bf16.msra.mxu0 %v334
  %424 = vmatprep.subr.bf16.mxu0 0
  %425 = vmatpush1.bf16.msra.mxu0 %v335
  %426 = vmatprep.subr.bf16.mxu0 0
  %427 = vmatpush1.bf16.msra.mxu0 %v336
  %428 = vmatprep.subr.bf16.mxu0 0
  %429 = vmatpush1.bf16.msra.mxu0 %v337
  %430 = vmatprep.subr.bf16.mxu0 0
  %431 = vmatpush1.bf16.msra.mxu0 %v338
  %432 = vmatprep.subr.bf16.mxu0 0
  %433 = vmatpush1.bf16.msra.mxu0 %v339
  %434 = vmatprep.subr.bf16.mxu0 0
  %435 = vmatpush1.bf16.msra.mxu0 %v340
  %436 = vmatprep.subr.bf16.mxu0 0
  %437 = vmatpush1.bf16.msra.mxu0 %v341
  %438 = vmatprep.mubr.bf16.mxu0 %v157
  %439 = vmatmul.mubr.bf16.gmra.mrb[0].mxu0 %v156
  %v440 = vpop.f32.mrb[0].mxu0
  %v441 = vadd.f32 %v138, %v440
  %v442 = vpop.f32.mrb[0].mxu0
  %v443 = vpop.f32.mrb[0].mxu0
  %v444 = vadd.f32 %v138, %v443
  %v445 = vpop.f32.mrb[0].mxu0
  %446 = vdwg.mxu0
  %447 = vmatprep.subr.bf16.mxu0 0
  %448 = vmatpush1.bf16.msra.mxu0 %v342
  %449 = vmatprep.subr.bf16.mxu0 0
  %450 = vmatpush1.bf16.msra.mxu0 %v343
  %451 = vmatprep.subr.bf16.mxu0 0
  %452 = vmatpush1.bf16.msra.mxu0 %v344
  %453 = vmatprep.subr.bf16.mxu0 0
  %454 = vmatpush1.bf16.msra.mxu0 %v345
  %455 = vmatprep.subr.bf16.mxu0 0
  %456 = vmatpush1.bf16.msra.mxu0 %v346
  %457 = vmatprep.subr.bf16.mxu0 0
  %458 = vmatpush1.bf16.msra.mxu0 %v347
  %459 = vmatprep.subr.bf16.mxu0 0
  %460 = vmatpush1.bf16.msra.mxu0 %v348
  %461 = vmatprep.subr.bf16.mxu0 0
  %462 = vmatpush1.bf16.msra.mxu0 %v349
  %463 = vmatprep.subr.bf16.mxu0 0
  %464 = vmatpush1.bf16.msra.mxu0 %v350
  %465 = vmatprep.subr.bf16.mxu0 0
  %466 = vmatpush1.bf16.msra.mxu0 %v351
  %467 = vmatprep.subr.bf16.mxu0 0
  %468 = vmatpush1.bf16.msra.mxu0 %v352
  %469 = vmatprep.subr.bf16.mxu0 0
  %470 = vmatpush1.bf16.msra.mxu0 %v353
  %471 = vmatprep.subr.bf16.mxu0 0
  %472 = vmatpush1.bf16.msra.mxu0 %v354
  %473 = vmatprep.subr.bf16.mxu0 0
  %474 = vmatpush1.bf16.msra.mxu0 %v355
  %475 = vmatprep.subr.bf16.mxu0 0
  %476 = vmatpush1.bf16.msra.mxu0 %v356
  %477 = vmatprep.subr.bf16.mxu0 0
  %478 = vmatpush1.bf16.msra.mxu0 %v357
  %479 = vmatprep.mubr.bf16.mxu0 %v159
  %480 = vmatmul.mubr.bf16.gmra.mrb[0].mxu0 %v158
  %v481 = vpop.f32.mrb[0].mxu0
  %v482 = vadd.f32 %v441, %v481
  %v483 = vpop.f32.mrb[0].mxu0
  %v484 = vpop.f32.mrb[0].mxu0
  %v485 = vadd.f32 %v444, %v484
  %v486 = vpop.f32.mrb[0].mxu0
  %487 = vdwg.mxu0
  %488 = vmatprep.subr.bf16.mxu0 0
  %489 = vmatpush1.bf16.msra.mxu0 %v358
  %490 = vmatprep.subr.bf16.mxu0 0
  %491 = vmatpush1.bf16.msra.mxu0 %v359
  %492 = vmatprep.subr.bf16.mxu0 0
  %493 = vmatpush1.bf16.msra.mxu0 %v360
  %494 = vmatprep.subr.bf16.mxu0 0
  %495 = vmatpush1.bf16.msra.mxu0 %v361
  %496 = vmatprep.subr.bf16.mxu0 0
  %497 = vmatpush1.bf16.msra.mxu0 %v362
  %498 = vmatprep.subr.bf16.mxu0 0
  %499 = vmatpush1.bf16.msra.mxu0 %v363
  %500 = vmatprep.subr.bf16.mxu0 0
  %501 = vmatpush1.bf16.msra.mxu0 %v364
  %502 = vmatprep.subr.bf16.mxu0 0
  %503 = vmatpush1.bf16.msra.mxu0 %v365
  %504 = vmatprep.subr.bf16.mxu0 0
  %505 = vmatpush1.bf16.msra.mxu0 0
  %506 = vmatprep.subr.bf16.mxu0 0
  %507 = vmatpush1.bf16.msra.mxu0 0
  %508 = vmatprep.subr.bf16.mxu0 0
  %509 = vmatpush1.bf16.msra.mxu0 0
  %510 = vmatprep.subr.bf16.mxu0 0
  %511 = vmatpush1.bf16.msra.mxu0 0
  %512 = vmatprep.subr.bf16.mxu0 0
  %513 = vmatpush1.bf16.msra.mxu0 0
  %514 = vmatprep.subr.bf16.mxu0 0
  %515 = vmatpush1.bf16.msra.mxu0 0
  %516 = vmatprep.subr.bf16.mxu0 0
  %517 = vmatpush1.bf16.msra.mxu0 0
  %518 = vmatprep.subr.bf16.mxu0 0
  %519 = vmatpush1.bf16.msra.mxu0 0
  %520 = vmatprep.mubr.bf16.mxu0 0
  %521 = vmatmul.mubr.bf16.gmra.mrb[0].mxu0 %v160
  %v522 = vpop.f32.mrb[0].mxu0
  %v523 = vadd.f32 %v482, %v522
  %v524 = vpop.f32.mrb[0].mxu0
  %v525 = vpop.f32.mrb[0].mxu0
  %v526 = vadd.f32 %v485, %v525
  %v527 = vpop.f32.mrb[0].mxu0
  %528 = vdwg.mxu0
  %v529 = vmax.f32 %v523, 0.0
  %v530 = vmax.f32 %v526, 0.0
  %v531 = vld [vmem:[#allocation2] sm:$0xff]
  %v532 = vld [vmem:[#allocation2 + $0x8] sm:$0xff]
  %v533 = vld [vmem:[#allocation2 + $0x10] sm:$0xff]
  %v534 = vld [vmem:[#allocation2 + $0x18] sm:$0xff]
  %v535 = vld [vmem:[#allocation2 + $0x20] sm:$0xff]
  %v536 = vld [vmem:[#allocation2 + $0x28] sm:$0xff]
  %v537 = vld [vmem:[#allocation2 + $0x30] sm:$0xff]
  %v538 = vld [vmem:[#allocation2 + $0x38] sm:$0xff]
  %v539 = vld [vmem:[#allocation2 + $0x40] sm:$0xff]
  %v540 = vld [vmem:[#allocation2 + $0x48] sm:$0xff]
  %v541 = vld [vmem:[#allocation2 + $0x50] sm:$0xff]
  %v542 = vld [vmem:[#allocation2 + $0x58] sm:$0xff]
  %v543 = vld [vmem:[#allocation2 + $0x60] sm:$0xff]
  %v544 = vld [vmem:[#allocation2 + $0x68] sm:$0xff]
  %v545 = vld [vmem:[#allocation2 + $0x70] sm:$0xff]
  %v546 = vld [vmem:[#allocation2 + $0x78] sm:$0xff]
  %v547 = vpack.c.bf16 %v530, %v529
  %v548 = vld [vmem:[%s3] sm:$0xff]
  %v549 = vld [vmem:[%s3 + $0x8] sm:$0xff]
  %v550 = vld [vmem:[%s3 + $0x10] sm:$0xff]
  %v551 = vld [vmem:[%s3 + $0x18] sm:$0xff]
  %v552 = vld [vmem:[%s3 + $0x20] sm:$0xff]
  %v553 = vld [vmem:[%s3 + $0x28] sm:$0xff]
  %v554 = vld [vmem:[%s3 + $0x30] sm:$0xff]
  %v555 = vld [vmem:[%s3 + $0x38] sm:$0xff]
  %v556 = vld [vmem:[%s3 + $0x40] sm:$0xff]
  %v557 = vld [vmem:[%s3 + $0x48] sm:$0xff]
  %v558 = vld [vmem:[%s3 + $0x50] sm:$0xff]
  %v559 = vld [vmem:[%s3 + $0x58] sm:$0xff]
  %v560 = vld [vmem:[%s3 + $0x60] sm:$0xff]
  %v561 = vld [vmem:[%s3 + $0x68] sm:$0xff]
  %v562 = vld [vmem:[%s3 + $0x70] sm:$0xff]
  %v563 = vld [vmem:[%s3 + $0x78] sm:$0xff]
  %v564 = vld [vmem:[%s3 + $0x80] sm:$0xff]
  %v565 = vld [vmem:[%s3 + $0x88] sm:$0xff]
  %v566 = vld [vmem:[%s3 + $0x90] sm:$0xff]
  %v567 = vld [vmem:[%s3 + $0x98] sm:$0xff]
  %v568 = vld [vmem:[%s3 + $0xa0] sm:$0xff]
  %v569 = vld [vmem:[%s3 + $0xa8] sm:$0xff]
  %v570 = vld [vmem:[%s3 + $0xb0] sm:$0xff]
  %v571 = vld [vmem:[%s3 + $0xb8] sm:$0xff]
  %v572 = vld [vmem:[%s3 + $0xc0] sm:$0xff]
  %v573 = vld [vmem:[%s3 + $0xc8] sm:$0xff]
  %v574 = vld [vmem:[%s3 + $0xd0] sm:$0xff]
  %v575 = vld [vmem:[%s3 + $0xd8] sm:$0xff]
  %v576 = vld [vmem:[%s3 + $0xe0] sm:$0xff]
  %v577 = vld [vmem:[%s3 + $0xe8] sm:$0xff]
  %v578 = vld [vmem:[%s3 + $0xf0] sm:$0xff]
  %v579 = vld [vmem:[%s3 + $0xf8] sm:$0xff]
  %v612 = vunpack.c.l.b16 %v548
  %v613 = vunpack.c.h.b16 %v548
  %v614 = vunpack.c.l.b16 %v549
  %v615 = vunpack.c.h.b16 %v549
  %v616 = vunpack.c.l.b16 %v550
  %v617 = vunpack.c.h.b16 %v550
  %v618 = vunpack.c.l.b16 %v551
  %v619 = vunpack.c.h.b16 %v551
  %v620 = vunpack.c.l.b16 %v552
  %v621 = vunpack.c.h.b16 %v552
  %v622 = vunpack.c.l.b16 %v553
  %v623 = vunpack.c.h.b16 %v553
  %v624 = vunpack.c.l.b16 %v554
  %v625 = vunpack.c.h.b16 %v554
  %v626 = vunpack.c.l.b16 %v555
  %v627 = vunpack.c.h.b16 %v555
  %v628 = vunpack.c.l.b16 %v556
  %v629 = vunpack.c.h.b16 %v556
  %v630 = vunpack.c.l.b16 %v557
  %v631 = vunpack.c.h.b16 %v557
  %v632 = vunpack.c.l.b16 %v558
  %v633 = vunpack.c.h.b16 %v558
  %v634 = vunpack.c.l.b16 %v559
  %v635 = vunpack.c.h.b16 %v559
  %v636 = vunpack.c.l.b16 %v560
  %v637 = vunpack.c.h.b16 %v560
  %v638 = vunpack.c.l.b16 %v561
  %v639 = vunpack.c.h.b16 %v561
  %v640 = vunpack.c.l.b16 %v562
  %v641 = vunpack.c.h.b16 %v562
  %v642 = vunpack.c.l.b16 %v563
  %v643 = vunpack.c.h.b16 %v563
  %v644 = vunpack.c.l.b16 %v564
  %v645 = vunpack.c.h.b16 %v564
  %v646 = vunpack.c.l.b16 %v565
  %v647 = vunpack.c.h.b16 %v565
  %v648 = vunpack.c.l.b16 %v566
  %v649 = vunpack.c.h.b16 %v566
  %v650 = vunpack.c.l.b16 %v567
  %v651 = vunpack.c.h.b16 %v567
  %v652 = vunpack.c.l.b16 %v568
  %v653 = vunpack.c.h.b16 %v568
  %v654 = vunpack.c.l.b16 %v569
  %v655 = vunpack.c.h.b16 %v569
  %v656 = vunpack.c.l.b16 %v570
  %v657 = vunpack.c.h.b16 %v570
  %v658 = vunpack.c.l.b16 %v571
  %v659 = vunpack.c.h.b16 %v571
  %v660 = vunpack.c.l.b16 %v572
  %v661 = vunpack.c.h.b16 %v572
  %v662 = vunpack.c.l.b16 %v573
  %v663 = vunpack.c.h.b16 %v573
  %v664 = vunpack.c.l.b16 %v574
  %v665 = vunpack.c.h.b16 %v574
  %v666 = vunpack.c.l.b16 %v575
  %v667 = vunpack.c.h.b16 %v575
  %v668 = vunpack.c.l.b16 %v576
  %v669 = vunpack.c.h.b16 %v576
  %v670 = vunpack.c.l.b16 %v577
  %v671 = vunpack.c.h.b16 %v577
  %v672 = vunpack.c.l.b16 %v578
  %v673 = vunpack.c.h.b16 %v578
  %v674 = vunpack.c.l.b16 %v579
  %v675 = vunpack.c.h.b16 %v579
  %v676 = vpack.c.b16 %v620, %v612
  %v677 = vpack.c.b16 %v621, %v613
  %v678 = vpack.c.b16 %v622, %v614
  %v679 = vpack.c.b16 %v623, %v615
  %v680 = vpack.c.b16 %v624, %v616
  %v681 = vpack.c.b16 %v625, %v617
  %v682 = vpack.c.b16 %v626, %v618
  %v683 = vpack.c.b16 %v627, %v619
  %v684 = vpack.c.b16 %v636, %v628
  %v685 = vpack.c.b16 %v637, %v629
  %v686 = vpack.c.b16 %v638, %v630
  %v687 = vpack.c.b16 %v639, %v631
  %v688 = vpack.c.b16 %v640, %v632
  %v689 = vpack.c.b16 %v641, %v633
  %v690 = vpack.c.b16 %v642, %v634
  %v691 = vpack.c.b16 %v643, %v635
  %v692 = vpack.c.b16 %v652, %v644
  %v693 = vpack.c.b16 %v653, %v645
  %v694 = vpack.c.b16 %v654, %v646
  %v695 = vpack.c.b16 %v655, %v647
  %v696 = vpack.c.b16 %v656, %v648
  %v697 = vpack.c.b16 %v657, %v649
  %v698 = vpack.c.b16 %v658, %v650
  %v699 = vpack.c.b16 %v659, %v651
  %v700 = vpack.c.b16 %v668, %v660
  %v701 = vpack.c.b16 %v669, %v661
  %v702 = vpack.c.b16 %v670, %v662
  %v703 = vpack.c.b16 %v671, %v663
  %v704 = vpack.c.b16 %v672, %v664
  %v705 = vpack.c.b16 %v673, %v665
  %v706 = vpack.c.b16 %v674, %v666
  %v707 = vpack.c.b16 %v675, %v667
  %vm740 = vcmask 523264
  %v742 = vsel %vm740, %v547, 0
  %744 = vmatprep.subr.bf16.mxu0 %v677
  %745 = vmatpush1.bf16.msra.mxu0 %v676
  %746 = vmatprep.subr.bf16.mxu0 %v685
  %747 = vmatpush1.bf16.msra.mxu0 %v684
  %748 = vmatprep.subr.bf16.mxu0 %v693
  %749 = vmatpush1.bf16.msra.mxu0 %v692
  %750 = vmatprep.subr.bf16.mxu0 %v701
  %751 = vmatpush1.bf16.msra.mxu0 %v700
  %752 = vmatprep.subr.bf16.mxu0 0
  %753 = vmatpush1.bf16.msra.mxu0 0
  %754 = vmatprep.subr.bf16.mxu0 0
  %755 = vmatpush1.bf16.msra.mxu0 0
  %756 = vmatprep.subr.bf16.mxu0 0
  %757 = vmatpush1.bf16.msra.mxu0 0
  %758 = vmatprep.subr.bf16.mxu0 0
  %759 = vmatpush1.bf16.msra.mxu0 0
  %760 = vmatprep.subr.bf16.mxu0 0
  %761 = vmatpush1.bf16.msra.mxu0 0
  %762 = vmatprep.subr.bf16.mxu0 0
  %763 = vmatpush1.bf16.msra.mxu0 0
  %764 = vmatprep.subr.bf16.mxu0 0
  %765 = vmatpush1.bf16.msra.mxu0 0
  %766 = vmatprep.subr.bf16.mxu0 0
  %767 = vmatpush1.bf16.msra.mxu0 0
  %768 = vmatprep.subr.bf16.mxu0 0
  %769 = vmatpush1.bf16.msra.mxu0 0
  %770 = vmatprep.subr.bf16.mxu0 0
  %771 = vmatpush1.bf16.msra.mxu0 0
  %772 = vmatprep.subr.bf16.mxu0 0
  %773 = vmatpush1.bf16.msra.mxu0 0
  %774 = vmatprep.subr.bf16.mxu0 0
  %775 = vmatpush1.bf16.msra.mxu0 0
  %776 = vmatprep.mubr.bf16.mxu0 0
  %777 = vmatmul.mubr.bf16.gmra.mrb[0].mxu0 %v742
  %v778 = vpop.f32.mrb[0].mxu0
  %v779 = vadd.f32 0.0, %v778
  %v780 = vpop.f32.mrb[0].mxu0
  %v781 = vadd.f32 0.0, %v780
  %v782 = vpop.f32.mrb[0].mxu0
  %v783 = vadd.f32 0.0, %v782
  %v784 = vpop.f32.mrb[0].mxu0
  %v785 = vadd.f32 0.0, %v784
  %786 = vdwg.mxu0
  %787 = vmatprep.subr.bf16.mxu0 %v679
  %788 = vmatpush1.bf16.msra.mxu0 %v678
  %789 = vmatprep.subr.bf16.mxu0 %v687
  %790 = vmatpush1.bf16.msra.mxu0 %v686
  %791 = vmatprep.subr.bf16.mxu0 %v695
  %792 = vmatpush1.bf16.msra.mxu0 %v694
  %793 = vmatprep.subr.bf16.mxu0 %v703
  %794 = vmatpush1.bf16.msra.mxu0 %v702
  %795 = vmatprep.subr.bf16.mxu0 0
  %796 = vmatpush1.bf16.msra.mxu0 0
  %797 = vmatprep.subr.bf16.mxu0 0
  %798 = vmatpush1.bf16.msra.mxu0 0
  %799 = vmatprep.subr.bf16.mxu0 0
  %800 = vmatpush1.bf16.msra.mxu0 0
  %801 = vmatprep.subr.bf16.mxu0 0
  %802 = vmatpush1.bf16.msra.mxu0 0
  %803 = vmatprep.subr.bf16.mxu0 0
  %804 = vmatpush1.bf16.msra.mxu0 0
  %805 = vmatprep.subr.bf16.mxu0 0
  %806 = vmatpush1.bf16.msra.mxu0 0
  %807 = vmatprep.subr.bf16.mxu0 0
  %808 = vmatpush1.bf16.msra.mxu0 0
  %809 = vmatprep.subr.bf16.mxu0 0
  %810 = vmatpush1.bf16.msra.mxu0 0
  %811 = vmatprep.subr.bf16.mxu0 0
  %812 = vmatpush1.bf16.msra.mxu0 0
  %813 = vmatprep.subr.bf16.mxu0 0
  %814 = vmatpush1.bf16.msra.mxu0 0
  %815 = vmatprep.subr.bf16.mxu0 0
  %816 = vmatpush1.bf16.msra.mxu0 0
  %817 = vmatprep.subr.bf16.mxu0 0
  %818 = vmatpush1.bf16.msra.mxu0 0
  %819 = vmatprep.mubr.bf16.mxu0 0
  %820 = vmatmul.mubr.bf16.gmra.mrb[0].mxu0 %v742
  %v821 = vpop.f32.mrb[0].mxu0
  %v822 = vadd.f32 0.0, %v821
  %v823 = vpop.f32.mrb[0].mxu0
  %v824 = vadd.f32 0.0, %v823
  %v825 = vpop.f32.mrb[0].mxu0
  %v826 = vadd.f32 0.0, %v825
  %v827 = vpop.f32.mrb[0].mxu0
  %v828 = vadd.f32 0.0, %v827
  %829 = vdwg.mxu0
  %830 = vmatprep.subr.bf16.mxu0 %v681
  %831 = vmatpush1.bf16.msra.mxu0 %v680
  %832 = vmatprep.subr.bf16.mxu0 %v689
  %833 = vmatpush1.bf16.msra.mxu0 %v688
  %834 = vmatprep.subr.bf16.mxu0 %v697
  %835 = vmatpush1.bf16.msra.mxu0 %v696
  %836 = vmatprep.subr.bf16.mxu0 %v705
  %837 = vmatpush1.bf16.msra.mxu0 %v704
  %838 = vmatprep.subr.bf16.mxu0 0
  %839 = vmatpush1.bf16.msra.mxu0 0
  %840 = vmatprep.subr.bf16.mxu0 0
  %841 = vmatpush1.bf16.msra.mxu0 0
  %842 = vmatprep.subr.bf16.mxu0 0
  %843 = vmatpush1.bf16.msra.mxu0 0
  %844 = vmatprep.subr.bf16.mxu0 0
  %845 = vmatpush1.bf16.msra.mxu0 0
  %846 = vmatprep.subr.bf16.mxu0 0
  %847 = vmatpush1.bf16.msra.mxu0 0
  %848 = vmatprep.subr.bf16.mxu0 0
  %849 = vmatpush1.bf16.msra.mxu0 0
  %850 = vmatprep.subr.bf16.mxu0 0
  %851 = vmatpush1.bf16.msra.mxu0 0
  %852 = vmatprep.subr.bf16.mxu0 0
  %853 = vmatpush1.bf16.msra.mxu0 0
  %854 = vmatprep.subr.bf16.mxu0 0
  %855 = vmatpush1.bf16.msra.mxu0 0
  %856 = vmatprep.subr.bf16.mxu0 0
  %857 = vmatpush1.bf16.msra.mxu0 0
  %858 = vmatprep.subr.bf16.mxu0 0
  %859 = vmatpush1.bf16.msra.mxu0 0
  %860 = vmatprep.subr.bf16.mxu0 0
  %861 = vmatpush1.bf16.msra.mxu0 0
  %862 = vmatprep.mubr.bf16.mxu0 0
  %863 = vmatmul.mubr.bf16.gmra.mrb[0].mxu0 %v742
  %v864 = vpop.f32.mrb[0].mxu0
  %v865 = vadd.f32 0.0, %v864
  %v866 = vpop.f32.mrb[0].mxu0
  %v867 = vadd.f32 0.0, %v866
  %v868 = vpop.f32.mrb[0].mxu0
  %v869 = vadd.f32 0.0, %v868
  %v870 = vpop.f32.mrb[0].mxu0
  %v871 = vadd.f32 0.0, %v870
  %872 = vdwg.mxu0
  %873 = vmatprep.subr.bf16.mxu0 %v683
  %874 = vmatpush1.bf16.msra.mxu0 %v682
  %875 = vmatprep.subr.bf16.mxu0 %v691
  %876 = vmatpush1.bf16.msra.mxu0 %v690
  %877 = vmatprep.subr.bf16.mxu0 %v699
  %878 = vmatpush1.bf16.msra.mxu0 %v698
  %879 = vmatprep.subr.bf16.mxu0 %v707
  %880 = vmatpush1.bf16.msra.mxu0 %v706
  %881 = vmatprep.subr.bf16.mxu0 0
  %882 = vmatpush1.bf16.msra.mxu0 0
  %883 = vmatprep.subr.bf16.mxu0 0
  %884 = vmatpush1.bf16.msra.mxu0 0
  %885 = vmatprep.subr.bf16.mxu0 0
  %886 = vmatpush1.bf16.msra.mxu0 0
  %887 = vmatprep.subr.bf16.mxu0 0
  %888 = vmatpush1.bf16.msra.mxu0 0
  %889 = vmatprep.subr.bf16.mxu0 0
  %890 = vmatpush1.bf16.msra.mxu0 0
  %891 = vmatprep.subr.bf16.mxu0 0
  %892 = vmatpush1.bf16.msra.mxu0 0
  %893 = vmatprep.subr.bf16.mxu0 0
  %894 = vmatpush1.bf16.msra.mxu0 0
  %895 = vmatprep.subr.bf16.mxu0 0
  %896 = vmatpush1.bf16.msra.mxu0 0
  %897 = vmatprep.subr.bf16.mxu0 0
  %898 = vmatpush1.bf16.msra.mxu0 0
  %899 = vmatprep.subr.bf16.mxu0 0
  %900 = vmatpush1.bf16.msra.mxu0 0
  %901 = vmatprep.subr.bf16.mxu0 0
  %902 = vmatpush1.bf16.msra.mxu0 0
  %903 = vmatprep.subr.bf16.mxu0 0
  %904 = vmatpush1.bf16.msra.mxu0 0
  %905 = vmatprep.mubr.bf16.mxu0 0
  %906 = vmatmul.mubr.bf16.gmra.mrb[0].mxu0 %v742
  %v907 = vpop.f32.mrb[0].mxu0
  %v908 = vadd.f32 0.0, %v907
  %v909 = vpop.f32.mrb[0].mxu0
  %v910 = vadd.f32 0.0, %v909
  %v911 = vpop.f32.mrb[0].mxu0
  %v912 = vadd.f32 0.0, %v911
  %v913 = vpop.f32.mrb[0].mxu0
  %v914 = vadd.f32 0.0, %v913
  %915 = vdwg.mxu0
  %v916 = vadd.f32 %v531, %v779
  %v917 = vadd.f32 %v532, %v781
  %v918 = vadd.f32 %v533, %v822
  %v919 = vadd.f32 %v534, %v824
  %v920 = vadd.f32 %v535, %v865
  %v921 = vadd.f32 %v536, %v867
  %v922 = vadd.f32 %v537, %v908
  %v923 = vadd.f32 %v538, %v910
  %v924 = vadd.f32 %v539, %v783
  %v925 = vadd.f32 %v540, %v785
  %v926 = vadd.f32 %v541, %v826
  %v927 = vadd.f32 %v542, %v828
  %v928 = vadd.f32 %v543, %v869
  %v929 = vadd.f32 %v544, %v871
  %v930 = vadd.f32 %v545, %v912
  %v931 = vadd.f32 %v546, %v914
  %932 = vst [vmem:[#allocation2] sm:$0xff] %v916
  %933 = vst [vmem:[#allocation2 + $0x8] sm:$0xff] %v917
  %934 = vst [vmem:[#allocation2 + $0x10] sm:$0xff] %v918
  %935 = vst [vmem:[#allocation2 + $0x18] sm:$0xff] %v919
  %936 = vst [vmem:[#allocation2 + $0x20] sm:$0xff] %v920
  %937 = vst [vmem:[#allocation2 + $0x28] sm:$0xff] %v921
  %938 = vst [vmem:[#allocation2 + $0x30] sm:$0xff] %v922
  %939 = vst [vmem:[#allocation2 + $0x38] sm:$0xff] %v923
  %940 = vst [vmem:[#allocation2 + $0x40] sm:$0xff] %v924
  %941 = vst [vmem:[#allocation2 + $0x48] sm:$0xff] %v925
  %942 = vst [vmem:[#allocation2 + $0x50] sm:$0xff] %v926
  %943 = vst [vmem:[#allocation2 + $0x58] sm:$0xff] %v927
  %944 = vst [vmem:[#allocation2 + $0x60] sm:$0xff] %v928
  %945 = vst [vmem:[#allocation2 + $0x68] sm:$0xff] %v929
  %946 = vst [vmem:[#allocation2 + $0x70] sm:$0xff] %v930
  %947 = vst [vmem:[#allocation2 + $0x78] sm:$0xff] %v931
  // Predicated region
  $region34: #{atari_a2c_forward.5} parent=0 // pred_check
    %p948 = pneg %p27
  $region35: #{atari_a2c_forward.5} parent=0 // pred_check_branch
    %950 = sbr.rel (%p948) target = $region37
  $region36: #{atari_a2c_forward.5} parent=0 // pred_region
    %v951 = vld [vmem:[#allocation2] sm:$0xff]
    %v952 = vld [vmem:[#allocation2 + $0x8] sm:$0xff]
    %v953 = vld [vmem:[#allocation2 + $0x10] sm:$0xff]
    %v954 = vld [vmem:[#allocation2 + $0x18] sm:$0xff]
    %v955 = vld [vmem:[#allocation2 + $0x20] sm:$0xff]
    %v956 = vld [vmem:[#allocation2 + $0x28] sm:$0xff]
    %v957 = vld [vmem:[#allocation2 + $0x30] sm:$0xff]
    %v958 = vld [vmem:[#allocation2 + $0x38] sm:$0xff]
    %v959 = vld [vmem:[#allocation2 + $0x40] sm:$0xff]
    %v960 = vld [vmem:[#allocation2 + $0x48] sm:$0xff]
    %v961 = vld [vmem:[#allocation2 + $0x50] sm:$0xff]
    %v962 = vld [vmem:[#allocation2 + $0x58] sm:$0xff]
    %v963 = vld [vmem:[#allocation2 + $0x60] sm:$0xff]
    %v964 = vld [vmem:[#allocation2 + $0x68] sm:$0xff]
    %v965 = vld [vmem:[#allocation2 + $0x70] sm:$0xff]
    %v966 = vld [vmem:[#allocation2 + $0x78] sm:$0xff]
    %v967 = vld [vmem:[%s4] sm:$0xff]
    %v969 = vlaneseq
    %v970 = vshrl.u32 %v969, 7
    %v971 = vsub.s32 0, %v970
    %v972 = vrot.slane %v967, %v971
    %v973 = vlaneseq
    %v974 = vshrl.u32 %v973, 7
    %v975 = vsub.s32 1, %v974
    %v976 = vrot.slane %v967, %v975
    %v977 = vlaneseq
    %v978 = vshrl.u32 %v977, 7
    %v979 = vsub.s32 2, %v978
    %v980 = vrot.slane %v967, %v979
    %v981 = vlaneseq
    %v982 = vshrl.u32 %v981, 7
    %v983 = vsub.s32 3, %v982
    %v984 = vrot.slane %v967, %v983
    %v985 = vlaneseq
    %v986 = vshrl.u32 %v985, 7
    %v987 = vsub.s32 4, %v986
    %v988 = vrot.slane %v967, %v987
    %v989 = vlaneseq
    %v990 = vshrl.u32 %v989, 7
    %v991 = vsub.s32 5, %v990
    %v992 = vrot.slane %v967, %v991
    %v993 = vlaneseq
    %v994 = vshrl.u32 %v993, 7
    %v995 = vsub.s32 6, %v994
    %v996 = vrot.slane %v967, %v995
    %v997 = vlaneseq
    %v998 = vshrl.u32 %v997, 7
    %v999 = vsub.s32 7, %v998
    %v1000 = vrot.slane %v967, %v999
    %v1009 = vadd.f32 %v951, %v972
    %v1010 = vadd.f32 %v952, %v976
    %v1011 = vadd.f32 %v953, %v980
    %v1012 = vadd.f32 %v954, %v984
    %v1013 = vadd.f32 %v955, %v988
    %v1014 = vadd.f32 %v956, %v992
    %v1015 = vadd.f32 %v957, %v996
    %v1016 = vadd.f32 %v958, %v1000
    %v1017 = vadd.f32 %v959, %v972
    %v1018 = vadd.f32 %v960, %v976
    %v1019 = vadd.f32 %v961, %v980
    %v1020 = vadd.f32 %v962, %v984
    %v1021 = vadd.f32 %v963, %v988
    %v1022 = vadd.f32 %v964, %v992
    %v1023 = vadd.f32 %v965, %v996
    %v1024 = vadd.f32 %v966, %v1000
    %v1025 = vmax.f32 %v1009, 0.0
    %v1026 = vmax.f32 %v1010, 0.0
    %v1027 = vmax.f32 %v1011, 0.0
    %v1028 = vmax.f32 %v1012, 0.0
    %v1029 = vmax.f32 %v1013, 0.0
    %v1030 = vmax.f32 %v1014, 0.0
    %v1031 = vmax.f32 %v1015, 0.0
    %v1032 = vmax.f32 %v1016, 0.0
    %v1033 = vmax.f32 %v1017, 0.0
    %v1034 = vmax.f32 %v1018, 0.0
    %v1035 = vmax.f32 %v1019, 0.0
    %v1036 = vmax.f32 %v1020, 0.0
    %v1037 = vmax.f32 %v1021, 0.0
    %v1038 = vmax.f32 %v1022, 0.0
    %v1039 = vmax.f32 %v1023, 0.0
    %v1040 = vmax.f32 %v1024, 0.0
    %v1041 = vpack.c.bf16 %v1033, %v1025
    %v1042 = vpack.c.bf16 %v1034, %v1026
    %v1043 = vpack.c.bf16 %v1035, %v1027
    %v1044 = vpack.c.bf16 %v1036, %v1028
    %v1045 = vpack.c.bf16 %v1037, %v1029
    %v1046 = vpack.c.bf16 %v1038, %v1030
    %v1047 = vpack.c.bf16 %v1039, %v1031
    %v1048 = vpack.c.bf16 %v1040, %v1032
    %v1049 = vld [vmem:[%s5] sm:$0xf]
    %v1050 = vld [vmem:[%s5 + $0x4] sm:$0xf]
    %v1051 = vld [vmem:[%s5 + $0x8] sm:$0xf]
    %v1052 = vld [vmem:[%s5 + $0xc] sm:$0xf]
    %v1053 = vld [vmem:[%s5 + $0x10] sm:$0xf]
    %v1054 = vld [vmem:[%s5 + $0x14] sm:$0xf]
    %v1055 = vld [vmem:[%s5 + $0x18] sm:$0xf]
    %v1056 = vld [vmem:[%s5 + $0x1c] sm:$0xf]
    %v1057 = vld [vmem:[%s5 + $0x20] sm:$0xf]
    %v1058 = vld [vmem:[%s5 + $0x24] sm:$0xf]
    %v1059 = vld [vmem:[%s5 + $0x28] sm:$0xf]
    %v1060 = vld [vmem:[%s5 + $0x2c] sm:$0xf]
    %v1061 = vld [vmem:[%s5 + $0x30] sm:$0xf]
    %v1062 = vld [vmem:[%s5 + $0x34] sm:$0xf]
    %v1063 = vld [vmem:[%s5 + $0x38] sm:$0xf]
    %v1064 = vld [vmem:[%s5 + $0x3c] sm:$0xf]
    %v1065 = vld [vmem:[%s5 + $0x40] sm:$0xf]
    %v1066 = vld [vmem:[%s5 + $0x44] sm:$0xf]
    %v1067 = vld [vmem:[%s5 + $0x48] sm:$0xf]
    %v1068 = vld [vmem:[%s5 + $0x4c] sm:$0xf]
    %v1069 = vld [vmem:[%s5 + $0x50] sm:$0xf]
    %v1070 = vld [vmem:[%s5 + $0x54] sm:$0xf]
    %v1071 = vld [vmem:[%s5 + $0x58] sm:$0xf]
    %v1072 = vld [vmem:[%s5 + $0x5c] sm:$0xf]
    %v1073 = vld [vmem:[%s5 + $0x60] sm:$0xf]
    %v1074 = vld [vmem:[%s5 + $0x64] sm:$0xf]
    %v1075 = vld [vmem:[%s5 + $0x68] sm:$0xf]
    %v1076 = vld [vmem:[%s5 + $0x6c] sm:$0xf]
    %v1077 = vld [vmem:[%s5 + $0x70] sm:$0xf]
    %v1078 = vld [vmem:[%s5 + $0x74] sm:$0xf]
    %v1079 = vld [vmem:[%s5 + $0x78] sm:$0xf]
    %v1080 = vld [vmem:[%s5 + $0x7c] sm:$0xf]
    %v1081 = vld [vmem:[%s5 + $0x80] sm:$0xf]
    %v1082 = vld [vmem:[%s5 + $0x84] sm:$0xf]
    %v1083 = vld [vmem:[%s5 + $0x88] sm:$0xf]
    %v1084 = vld [vmem:[%s5 + $0x8c] sm:$0xf]
    %v1085 = vld [vmem:[%s5 + $0x90] sm:$0xf]
    %v1086 = vld [vmem:[%s5 + $0x94] sm:$0xf]
    %v1087 = vld [vmem:[%s5 + $0x98] sm:$0xf]
    %v1088 = vld [vmem:[%s5 + $0x9c] sm:$0xf]
    %v1089 = vld [vmem:[%s5 + $0xa0] sm:$0xf]
    %v1090 = vld [vmem:[%s5 + $0xa4] sm:$0xf]
    %v1091 = vld [vmem:[%s5 + $0xa8] sm:$0xf]
    %v1092 = vld [vmem:[%s5 + $0xac] sm:$0xf]
    %v1093 = vld [vmem:[%s5 + $0xb0] sm:$0xf]
    %v1094 = vld [vmem:[%s5 + $0xb4] sm:$0xf]
    %v1095 = vld [vmem:[%s5 + $0xb8] sm:$0xf]
    %v1096 = vld [vmem:[%s5 + $0xbc] sm:$0xf]
    %v1097 = vld [vmem:[%s5 + $0xc0] sm:$0xf]
    %v1098 = vld [vmem:[%s5 + $0xc4] sm:$0xf]
    %v1099 = vld [vmem:[%s5 + $0xc8] sm:$0xf]
    %v1100 = vld [vmem:[%s5 + $0xcc] sm:$0xf]
    %v1101 = vld [vmem:[%s5 + $0xd0] sm:$0xf]
    %v1102 = vld [vmem:[%s5 + $0xd4] sm:$0xf]
    %v1103 = vld [vmem:[%s5 + $0xd8] sm:$0xf]
    %v1104 = vld [vmem:[%s5 + $0xdc] sm:$0xf]
    %v1105 = vld [vmem:[%s5 + $0xe0] sm:$0xf]
    %v1106 = vld [vmem:[%s5 + $0xe4] sm:$0xf]
    %v1107 = vld [vmem:[%s5 + $0xe8] sm:$0xf]
    %v1108 = vld [vmem:[%s5 + $0xec] sm:$0xf]
    %v1109 = vld [vmem:[%s5 + $0xf0] sm:$0xf]
    %v1110 = vld [vmem:[%s5 + $0xf4] sm:$0xf]
    %v1111 = vld [vmem:[%s5 + $0xf8] sm:$0xf]
    %v1112 = vld [vmem:[%s5 + $0xfc] sm:$0xf]
    %v1113 = vld [vmem:[%s5 + $0x100] sm:$0xf]
    %v1114 = vld [vmem:[%s5 + $0x104] sm:$0xf]
    %v1115 = vld [vmem:[%s5 + $0x108] sm:$0xf]
    %v1116 = vld [vmem:[%s5 + $0x10c] sm:$0xf]
    %v1117 = vld [vmem:[%s5 + $0x110] sm:$0xf]
    %v1118 = vld [vmem:[%s5 + $0x114] sm:$0xf]
    %v1119 = vld [vmem:[%s5 + $0x118] sm:$0xf]
    %v1120 = vld [vmem:[%s5 + $0x11c] sm:$0xf]
    %v1121 = vld [vmem:[%s5 + $0x120] sm:$0xf]
    %v1122 = vld [vmem:[%s5 + $0x124] sm:$0xf]
    %v1123 = vld [vmem:[%s5 + $0x128] sm:$0xf]
    %v1124 = vld [vmem:[%s5 + $0x12c] sm:$0xf]
    %v1125 = vld [vmem:[%s5 + $0x130] sm:$0xf]
    %v1126 = vld [vmem:[%s5 + $0x134] sm:$0xf]
    %v1127 = vld [vmem:[%s5 + $0x138] sm:$0xf]
    %v1128 = vld [vmem:[%s5 + $0x13c] sm:$0xf]
    %v1129 = vld [vmem:[%s5 + $0x140] sm:$0xf]
    %v1130 = vld [vmem:[%s5 + $0x144] sm:$0xf]
    %v1131 = vld [vmem:[%s5 + $0x148] sm:$0xf]
    %v1132 = vld [vmem:[%s5 + $0x14c] sm:$0xf]
    %v1133 = vld [vmem:[%s5 + $0x150] sm:$0xf]
    %v1134 = vld [vmem:[%s5 + $0x154] sm:$0xf]
    %v1135 = vld [vmem:[%s5 + $0x158] sm:$0xf]
    %v1136 = vld [vmem:[%s5 + $0x15c] sm:$0xf]
    %v1137 = vld [vmem:[%s5 + $0x160] sm:$0xf]
    %v1138 = vld [vmem:[%s5 + $0x164] sm:$0xf]
    %v1139 = vld [vmem:[%s5 + $0x168] sm:$0xf]
    %v1140 = vld [vmem:[%s5 + $0x16c] sm:$0xf]
    %v1141 = vld [vmem:[%s5 + $0x170] sm:$0xf]
    %v1142 = vld [vmem:[%s5 + $0x174] sm:$0xf]
    %v1143 = vld [vmem:[%s5 + $0x178] sm:$0xf]
    %v1144 = vld [vmem:[%s5 + $0x17c] sm:$0xf]
    %v1145 = vld [vmem:[%s5 + $0x180] sm:$0xf]
    %v1146 = vld [vmem:[%s5 + $0x184] sm:$0xf]
    %v1147 = vld [vmem:[%s5 + $0x188] sm:$0xf]
    %v1148 = vld [vmem:[%s5 + $0x18c] sm:$0xf]
    %v1149 = vld [vmem:[%s5 + $0x190] sm:$0xf]
    %v1150 = vld [vmem:[%s5 + $0x194] sm:$0xf]
    %v1151 = vld [vmem:[%s5 + $0x198] sm:$0xf]
    %v1152 = vld [vmem:[%s5 + $0x19c] sm:$0xf]
    %v1153 = vld [vmem:[%s5 + $0x1a0] sm:$0xf]
    %v1154 = vld [vmem:[%s5 + $0x1a4] sm:$0xf]
    %v1155 = vld [vmem:[%s5 + $0x1a8] sm:$0xf]
    %v1156 = vld [vmem:[%s5 + $0x1ac] sm:$0xf]
    %v1157 = vld [vmem:[%s5 + $0x1b0] sm:$0xf]
    %v1158 = vld [vmem:[%s5 + $0x1b4] sm:$0xf]
    %v1159 = vld [vmem:[%s5 + $0x1b8] sm:$0xf]
    %v1160 = vld [vmem:[%s5 + $0x1bc] sm:$0xf]
    %v1161 = vld [vmem:[%s5 + $0x1c0] sm:$0xf]
    %v1162 = vld [vmem:[%s5 + $0x1c4] sm:$0xf]
    %v1163 = vld [vmem:[%s5 + $0x1c8] sm:$0xf]
    %v1164 = vld [vmem:[%s5 + $0x1cc] sm:$0xf]
    %v1165 = vld [vmem:[%s5 + $0x1d0] sm:$0xf]
    %v1166 = vld [vmem:[%s5 + $0x1d4] sm:$0xf]
    %v1167 = vld [vmem:[%s5 + $0x1d8] sm:$0xf]
    %v1168 = vld [vmem:[%s5 + $0x1dc] sm:$0xf]
    %v1169 = vld [vmem:[%s5 + $0x1e0] sm:$0xf]
    %v1170 = vld [vmem:[%s5 + $0x1e4] sm:$0xf]
    %v1171 = vld [vmem:[%s5 + $0x1e8] sm:$0xf]
    %v1172 = vld [vmem:[%s5 + $0x1ec] sm:$0xf]
    %v1173 = vld [vmem:[%s5 + $0x1f0] sm:$0xf]
    %v1174 = vld [vmem:[%s5 + $0x1f4] sm:$0xf]
    %v1175 = vld [vmem:[%s5 + $0x1f8] sm:$0xf]
    %v1176 = vld [vmem:[%s5 + $0x1fc] sm:$0xf]
    %v1177 = vld [vmem:[%s6] sm:$0x1]
    %v1179 = vlaneseq
    %v1180 = vshrl.u32 %v1179, 7
    %v1181 = vsub.s32 0, %v1180
    %v1182 = vrot.slane %v1177, %v1181
    %v1312 = vunpack.c.l.b16 %v1049
    %v1313 = vunpack.c.l.b16 %v1050
    %v1314 = vunpack.c.l.b16 %v1051
    %v1315 = vunpack.c.l.b16 %v1052
    %v1316 = vunpack.c.l.b16 %v1053
    %v1317 = vunpack.c.l.b16 %v1054
    %v1318 = vunpack.c.l.b16 %v1055
    %v1319 = vunpack.c.l.b16 %v1056
    %v1320 = vunpack.c.l.b16 %v1057
    %v1321 = vunpack.c.l.b16 %v1058
    %v1322 = vunpack.c.l.b16 %v1059
    %v1323 = vunpack.c.l.b16 %v1060
    %v1324 = vunpack.c.l.b16 %v1061
    %v1325 = vunpack.c.l.b16 %v1062
    %v1326 = vunpack.c.l.b16 %v1063
    %v1327 = vunpack.c.l.b16 %v1064
    %v1328 = vunpack.c.l.b16 %v1065
    %v1329 = vunpack.c.l.b16 %v1066
    %v1330 = vunpack.c.l.b16 %v1067
    %v1331 = vunpack.c.l.b16 %v1068
    %v1332 = vunpack.c.l.b16 %v1069
    %v1333 = vunpack.c.l.b16 %v1070
    %v1334 = vunpack.c.l.b16 %v1071
    %v1335 = vunpack.c.l.b16 %v1072
    %v1336 = vunpack.c.l.b16 %v1073
    %v1337 = vunpack.c.l.b16 %v1074
    %v1338 = vunpack.c.l.b16 %v1075
    %v1339 = vunpack.c.l.b16 %v1076
    %v1340 = vunpack.c.l.b16 %v1077
    %v1341 = vunpack.c.l.b16 %v1078
    %v1342 = vunpack.c.l.b16 %v1079
    %v1343 = vunpack.c.l.b16 %v1080
    %v1344 = vunpack.c.l.b16 %v1081
    %v1345 = vunpack.c.l.b16 %v1082
    %v1346 = vunpack.c.l.b16 %v1083
    %v1347 = vunpack.c.l.b16 %v1084
    %v1348 = vunpack.c.l.b16 %v1085
    %v1349 = vunpack.c.l.b16 %v1086
    %v1350 = vunpack.c.l.b16 %v1087
    %v1351 = vunpack.c.l.b16 %v1088
    %v1352 = vunpack.c.l.b16 %v1089
    %v1353 = vunpack.c.l.b16 %v1090
    %v1354 = vunpack.c.l.b16 %v1091
    %v1355 = vunpack.c.l.b16 %v1092
    %v1356 = vunpack.c.l.b16 %v1093
    %v1357 = vunpack.c.l.b16 %v1094
    %v1358 = vunpack.c.l.b16 %v1095
    %v1359 = vunpack.c.l.b16 %v1096
    %v1360 = vunpack.c.l.b16 %v1097
    %v1361 = vunpack.c.l.b16 %v1098
    %v1362 = vunpack.c.l.b16 %v1099
    %v1363 = vunpack.c.l.b16 %v1100
    %v1364 = vunpack.c.l.b16 %v1101
    %v1365 = vunpack.c.l.b16 %v1102
    %v1366 = vunpack.c.l.b16 %v1103
    %v1367 = vunpack.c.l.b16 %v1104
    %v1368 = vunpack.c.l.b16 %v1105
    %v1369 = vunpack.c.l.b16 %v1106
    %v1370 = vunpack.c.l.b16 %v1107
    %v1371 = vunpack.c.l.b16 %v1108
    %v1372 = vunpack.c.l.b16 %v1109
    %v1373 = vunpack.c.l.b16 %v1110
    %v1374 = vunpack.c.l.b16 %v1111
    %v1375 = vunpack.c.l.b16 %v1112
    %v1376 = vunpack.c.l.b16 %v1113
    %v1377 = vunpack.c.l.b16 %v1114
    %v1378 = vunpack.c.l.b16 %v1115
    %v1379 = vunpack.c.l.b16 %v1116
    %v1380 = vunpack.c.l.b16 %v1117
    %v1381 = vunpack.c.l.b16 %v1118
    %v1382 = vunpack.c.l.b16 %v1119
    %v1383 = vunpack.c.l.b16 %v1120
    %v1384 = vunpack.c.l.b16 %v1121
    %v1385 = vunpack.c.l.b16 %v1122
    %v1386 = vunpack.c.l.b16 %v1123
    %v1387 = vunpack.c.l.b16 %v1124
    %v1388 = vunpack.c.l.b16 %v1125
    %v1389 = vunpack.c.l.b16 %v1126
    %v1390 = vunpack.c.l.b16 %v1127
    %v1391 = vunpack.c.l.b16 %v1128
    %v1392 = vunpack.c.l.b16 %v1129
    %v1393 = vunpack.c.l.b16 %v1130
    %v1394 = vunpack.c.l.b16 %v1131
    %v1395 = vunpack.c.l.b16 %v1132
    %v1396 = vunpack.c.l.b16 %v1133
    %v1397 = vunpack.c.l.b16 %v1134
    %v1398 = vunpack.c.l.b16 %v1135
    %v1399 = vunpack.c.l.b16 %v1136
    %v1400 = vunpack.c.l.b16 %v1137
    %v1401 = vunpack.c.l.b16 %v1138
    %v1402 = vunpack.c.l.b16 %v1139
    %v1403 = vunpack.c.l.b16 %v1140
    %v1404 = vunpack.c.l.b16 %v1141
    %v1405 = vunpack.c.l.b16 %v1142
    %v1406 = vunpack.c.l.b16 %v1143
    %v1407 = vunpack.c.l.b16 %v1144
    %v1408 = vunpack.c.l.b16 %v1145
    %v1409 = vunpack.c.l.b16 %v1146
    %v1410 = vunpack.c.l.b16 %v1147
    %v1411 = vunpack.c.l.b16 %v1148
    %v1412 = vunpack.c.l.b16 %v1149
    %v1413 = vunpack.c.l.b16 %v1150
    %v1414 = vunpack.c.l.b16 %v1151
    %v1415 = vunpack.c.l.b16 %v1152
    %v1416 = vunpack.c.l.b16 %v1153
    %v1417 = vunpack.c.l.b16 %v1154
    %v1418 = vunpack.c.l.b16 %v1155
    %v1419 = vunpack.c.l.b16 %v1156
    %v1420 = vunpack.c.l.b16 %v1157
    %v1421 = vunpack.c.l.b16 %v1158
    %v1422 = vunpack.c.l.b16 %v1159
    %v1423 = vunpack.c.l.b16 %v1160
    %v1424 = vunpack.c.l.b16 %v1161
    %v1425 = vunpack.c.l.b16 %v1162
    %v1426 = vunpack.c.l.b16 %v1163
    %v1427 = vunpack.c.l.b16 %v1164
    %v1428 = vunpack.c.l.b16 %v1165
    %v1429 = vunpack.c.l.b16 %v1166
    %v1430 = vunpack.c.l.b16 %v1167
    %v1431 = vunpack.c.l.b16 %v1168
    %v1432 = vunpack.c.l.b16 %v1169
    %v1433 = vunpack.c.l.b16 %v1170
    %v1434 = vunpack.c.l.b16 %v1171
    %v1435 = vunpack.c.l.b16 %v1172
    %v1436 = vunpack.c.l.b16 %v1173
    %v1437 = vunpack.c.l.b16 %v1174
    %v1438 = vunpack.c.l.b16 %v1175
    %v1439 = vunpack.c.l.b16 %v1176
    %v1440 = vpack.c.b16 %v1313, %v1312
    %v1441 = vpack.c.b16 %v1315, %v1314
    %v1442 = vpack.c.b16 %v1317, %v1316
    %v1443 = vpack.c.b16 %v1319, %v1318
    %v1444 = vpack.c.b16 %v1321, %v1320
    %v1445 = vpack.c.b16 %v1323, %v1322
    %v1446 = vpack.c.b16 %v1325, %v1324
    %v1447 = vpack.c.b16 %v1327, %v1326
    %v1448 = vpack.c.b16 %v1329, %v1328
    %v1449 = vpack.c.b16 %v1331, %v1330
    %v1450 = vpack.c.b16 %v1333, %v1332
    %v1451 = vpack.c.b16 %v1335, %v1334
    %v1452 = vpack.c.b16 %v1337, %v1336
    %v1453 = vpack.c.b16 %v1339, %v1338
    %v1454 = vpack.c.b16 %v1341, %v1340
    %v1455 = vpack.c.b16 %v1343, %v1342
    %v1456 = vpack.c.b16 %v1345, %v1344
    %v1457 = vpack.c.b16 %v1347, %v1346
    %v1458 = vpack.c.b16 %v1349, %v1348
    %v1459 = vpack.c.b16 %v1351, %v1350
    %v1460 = vpack.c.b16 %v1353, %v1352
    %v1461 = vpack.c.b16 %v1355, %v1354
    %v1462 = vpack.c.b16 %v1357, %v1356
    %v1463 = vpack.c.b16 %v1359, %v1358
    %v1464 = vpack.c.b16 %v1361, %v1360
    %v1465 = vpack.c.b16 %v1363, %v1362
    %v1466 = vpack.c.b16 %v1365, %v1364
    %v1467 = vpack.c.b16 %v1367, %v1366
    %v1468 = vpack.c.b16 %v1369, %v1368
    %v1469 = vpack.c.b16 %v1371, %v1370
    %v1470 = vpack.c.b16 %v1373, %v1372
    %v1471 = vpack.c.b16 %v1375, %v1374
    %v1472 = vpack.c.b16 %v1377, %v1376
    %v1473 = vpack.c.b16 %v1379, %v1378
    %v1474 = vpack.c.b16 %v1381, %v1380
    %v1475 = vpack.c.b16 %v1383, %v1382
    %v1476 = vpack.c.b16 %v1385, %v1384
    %v1477 = vpack.c.b16 %v1387, %v1386
    %v1478 = vpack.c.b16 %v1389, %v1388
    %v1479 = vpack.c.b16 %v1391, %v1390
    %v1480 = vpack.c.b16 %v1393, %v1392
    %v1481 = vpack.c.b16 %v1395, %v1394
    %v1482 = vpack.c.b16 %v1397, %v1396
    %v1483 = vpack.c.b16 %v1399, %v1398
    %v1484 = vpack.c.b16 %v1401, %v1400
    %v1485 = vpack.c.b16 %v1403, %v1402
    %v1486 = vpack.c.b16 %v1405, %v1404
    %v1487 = vpack.c.b16 %v1407, %v1406
    %v1488 = vpack.c.b16 %v1409, %v1408
    %v1489 = vpack.c.b16 %v1411, %v1410
    %v1490 = vpack.c.b16 %v1413, %v1412
    %v1491 = vpack.c.b16 %v1415, %v1414
    %v1492 = vpack.c.b16 %v1417, %v1416
    %v1493 = vpack.c.b16 %v1419, %v1418
    %v1494 = vpack.c.b16 %v1421, %v1420
    %v1495 = vpack.c.b16 %v1423, %v1422
    %v1496 = vpack.c.b16 %v1425, %v1424
    %v1497 = vpack.c.b16 %v1427, %v1426
    %v1498 = vpack.c.b16 %v1429, %v1428
    %v1499 = vpack.c.b16 %v1431, %v1430
    %v1500 = vpack.c.b16 %v1433, %v1432
    %v1501 = vpack.c.b16 %v1435, %v1434
    %v1502 = vpack.c.b16 %v1437, %v1436
    %v1503 = vpack.c.b16 %v1439, %v1438
    %1568 = vmatprep.subr.bf16.mxu0 0
    %1569 = vmatpush1.bf16.msra.mxu0 %v1440
    %1570 = vmatprep.subr.bf16.mxu0 0
    %1571 = vmatpush1.bf16.msra.mxu0 %v1441
    %1572 = vmatprep.subr.bf16.mxu0 0
    %1573 = vmatpush1.bf16.msra.mxu0 %v1442
    %1574 = vmatprep.subr.bf16.mxu0 0
    %1575 = vmatpush1.bf16.msra.mxu0 %v1443
    %1576 = vmatprep.subr.bf16.mxu0 0
    %1577 = vmatpush1.bf16.msra.mxu0 %v1444
    %1578 = vmatprep.subr.bf16.mxu0 0
    %1579 = vmatpush1.bf16.msra.mxu0 %v1445
    %1580 = vmatprep.subr.bf16.mxu0 0
    %1581 = vmatpush1.bf16.msra.mxu0 %v1446
    %1582 = vmatprep.subr.bf16.mxu0 0
    %1583 = vmatpush1.bf16.msra.mxu0 %v1447
    %1584 = vmatprep.subr.bf16.mxu0 0
    %1585 = vmatpush1.bf16.msra.mxu0 %v1448
    %1586 = vmatprep.subr.bf16.mxu0 0
    %1587 = vmatpush1.bf16.msra.mxu0 %v1449
    %1588 = vmatprep.subr.bf16.mxu0 0
    %1589 = vmatpush1.bf16.msra.mxu0 %v1450
    %1590 = vmatprep.subr.bf16.mxu0 0
    %1591 = vmatpush1.bf16.msra.mxu0 %v1451
    %1592 = vmatprep.subr.bf16.mxu0 0
    %1593 = vmatpush1.bf16.msra.mxu0 %v1452
    %1594 = vmatprep.subr.bf16.mxu0 0
    %1595 = vmatpush1.bf16.msra.mxu0 %v1453
    %1596 = vmatprep.subr.bf16.mxu0 0
    %1597 = vmatpush1.bf16.msra.mxu0 %v1454
    %1598 = vmatprep.subr.bf16.mxu0 0
    %1599 = vmatpush1.bf16.msra.mxu0 %v1455
    %1600 = vmatprep.mubr.bf16.mxu0 %v1042
    %1601 = vmatmul.mubr.bf16.gmra.mrb[0].mxu0 %v1041
    %v1602 = vpop.f32.mrb[0].mxu0
    %v1603 = vadd.f32 %v1182, %v1602
    %v1604 = vpop.f32.mrb[0].mxu0
    %v1605 = vpop.f32.mrb[0].mxu0
    %v1606 = vadd.f32 %v1182, %v1605
    %v1607 = vpop.f32.mrb[0].mxu0
    %1608 = vdwg.mxu0
    %1609 = vmatprep.subr.bf16.mxu0 0
    %1610 = vmatpush1.bf16.msra.mxu0 %v1456
    %1611 = vmatprep.subr.bf16.mxu0 0
    %1612 = vmatpush1.bf16.msra.mxu0 %v1457
    %1613 = vmatprep.subr.bf16.mxu0 0
    %1614 = vmatpush1.bf16.msra.mxu0 %v1458
    %1615 = vmatprep.subr.bf16.mxu0 0
    %1616 = vmatpush1.bf16.msra.mxu0 %v1459
    %1617 = vmatprep.subr.bf16.mxu0 0
    %1618 = vmatpush1.bf16.msra.mxu0 %v1460
    %1619 = vmatprep.subr.bf16.mxu0 0
    %1620 = vmatpush1.bf16.msra.mxu0 %v1461
    %1621 = vmatprep.subr.bf16.mxu0 0
    %1622 = vmatpush1.bf16.msra.mxu0 %v1462
    %1623 = vmatprep.subr.bf16.mxu0 0
    %1624 = vmatpush1.bf16.msra.mxu0 %v1463
    %1625 = vmatprep.subr.bf16.mxu0 0
    %1626 = vmatpush1.bf16.msra.mxu0 %v1464
    %1627 = vmatprep.subr.bf16.mxu0 0
    %1628 = vmatpush1.bf16.msra.mxu0 %v1465
    %1629 = vmatprep.subr.bf16.mxu0 0
    %1630 = vmatpush1.bf16.msra.mxu0 %v1466
    %1631 = vmatprep.subr.bf16.mxu0 0
    %1632 = vmatpush1.bf16.msra.mxu0 %v1467
    %1633 = vmatprep.subr.bf16.mxu0 0
    %1634 = vmatpush1.bf16.msra.mxu0 %v1468
    %1635 = vmatprep.subr.bf16.mxu0 0
    %1636 = vmatpush1.bf16.msra.mxu0 %v1469
    %1637 = vmatprep.subr.bf16.mxu0 0
    %1638 = vmatpush1.bf16.msra.mxu0 %v1470
    %1639 = vmatprep.subr.bf16.mxu0 0
    %1640 = vmatpush1.bf16.msra.mxu0 %v1471
    %1641 = vmatprep.mubr.bf16.mxu0 %v1044
    %1642 = vmatmul.mubr.bf16.gmra.mrb[0].mxu0 %v1043
    %v1643 = vpop.f32.mrb[0].mxu0
    %v1644 = vadd.f32 %v1603, %v1643
    %v1645 = vpop.f32.mrb[0].mxu0
    %v1646 = vpop.f32.mrb[0].mxu0
    %v1647 = vadd.f32 %v1606, %v1646
    %v1648 = vpop.f32.mrb[0].mxu0
    %1649 = vdwg.mxu0
    %1650 = vmatprep.subr.bf16.mxu0 0
    %1651 = vmatpush1.bf16.msra.mxu0 %v1472
    %1652 = vmatprep.subr.bf16.mxu0 0
    %1653 = vmatpush1.bf16.msra.mxu0 %v1473
    %1654 = vmatprep.subr.bf16.mxu0 0
    %1655 = vmatpush1.bf16.msra.mxu0 %v1474
    %1656 = vmatprep.subr.bf16.mxu0 0
    %1657 = vmatpush1.bf16.msra.mxu0 %v1475
    %1658 = vmatprep.subr.bf16.mxu0 0
    %1659 = vmatpush1.bf16.msra.mxu0 %v1476
    %1660 = vmatprep.subr.bf16.mxu0 0
    %1661 = vmatpush1.bf16.msra.mxu0 %v1477
    %1662 = vmatprep.subr.bf16.mxu0 0
    %1663 = vmatpush1.bf16.msra.mxu0 %v1478
    %1664 = vmatprep.subr.bf16.mxu0 0
    %1665 = vmatpush1.bf16.msra.mxu0 %v1479
    %1666 = vmatprep.subr.bf16.mxu0 0
    %1667 = vmatpush1.bf16.msra.mxu0 %v1480
    %1668 = vmatprep.subr.bf16.mxu0 0
    %1669 = vmatpush1.bf16.msra.mxu0 %v1481
    %1670 = vmatprep.subr.bf16.mxu0 0
    %1671 = vmatpush1.bf16.msra.mxu0 %v1482
    %1672 = vmatprep.subr.bf16.mxu0 0
    %1673 = vmatpush1.bf16.msra.mxu0 %v1483
    %1674 = vmatprep.subr.bf16.mxu0 0
    %1675 = vmatpush1.bf16.msra.mxu0 %v1484
    %1676 = vmatprep.subr.bf16.mxu0 0
    %1677 = vmatpush1.bf16.msra.mxu0 %v1485
    %1678 = vmatprep.subr.bf16.mxu0 0
    %1679 = vmatpush1.bf16.msra.mxu0 %v1486
    %1680 = vmatprep.subr.bf16.mxu0 0
    %1681 = vmatpush1.bf16.msra.mxu0 %v1487
    %1682 = vmatprep.mubr.bf16.mxu0 %v1046
    %1683 = vmatmul.mubr.bf16.gmra.mrb[0].mxu0 %v1045
    %v1684 = vpop.f32.mrb[0].mxu0
    %v1685 = vadd.f32 %v1644, %v1684
    %v1686 = vpop.f32.mrb[0].mxu0
    %v1687 = vpop.f32.mrb[0].mxu0
    %v1688 = vadd.f32 %v1647, %v1687
    %v1689 = vpop.f32.mrb[0].mxu0
    %1690 = vdwg.mxu0
    %1691 = vmatprep.subr.bf16.mxu0 0
    %1692 = vmatpush1.bf16.msra.mxu0 %v1488
    %1693 = vmatprep.subr.bf16.mxu0 0
    %1694 = vmatpush1.bf16.msra.mxu0 %v1489
    %1695 = vmatprep.subr.bf16.mxu0 0
    %1696 = vmatpush1.bf16.msra.mxu0 %v1490
    %1697 = vmatprep.subr.bf16.mxu0 0
    %1698 = vmatpush1.bf16.msra.mxu0 %v1491
    %1699 = vmatprep.subr.bf16.mxu0 0
    %1700 = vmatpush1.bf16.msra.mxu0 %v1492
    %1701 = vmatprep.subr.bf16.mxu0 0
    %1702 = vmatpush1.bf16.msra.mxu0 %v1493
    %1703 = vmatprep.subr.bf16.mxu0 0
    %1704 = vmatpush1.bf16.msra.mxu0 %v1494
    %1705 = vmatprep.subr.bf16.mxu0 0
    %1706 = vmatpush1.bf16.msra.mxu0 %v1495
    %1707 = vmatprep.subr.bf16.mxu0 0
    %1708 = vmatpush1.bf16.msra.mxu0 %v1496
    %1709 = vmatprep.subr.bf16.mxu0 0
    %1710 = vmatpush1.bf16.msra.mxu0 %v1497
    %1711 = vmatprep.subr.bf16.mxu0 0
    %1712 = vmatpush1.bf16.msra.mxu0 %v1498
    %1713 = vmatprep.subr.bf16.mxu0 0
    %1714 = vmatpush1.bf16.msra.mxu0 %v1499
    %1715 = vmatprep.subr.bf16.mxu0 0
    %1716 = vmatpush1.bf16.msra.mxu0 %v1500
    %1717 = vmatprep.subr.bf16.mxu0 0
    %1718 = vmatpush1.bf16.msra.mxu0 %v1501
    %1719 = vmatprep.subr.bf16.mxu0 0
    %1720 = vmatpush1.bf16.msra.mxu0 %v1502
    %1721 = vmatprep.subr.bf16.mxu0 0
    %1722 = vmatpush1.bf16.msra.mxu0 %v1503
    %1723 = vmatprep.mubr.bf16.mxu0 %v1048
    %1724 = vmatmul.mubr.bf16.gmra.mrb[0].mxu0 %v1047
    %v1725 = vpop.f32.mrb[0].mxu0
    %v1726 = vadd.f32 %v1685, %v1725
    %v1727 = vpop.f32.mrb[0].mxu0
    %v1728 = vpop.f32.mrb[0].mxu0
    %v1729 = vadd.f32 %v1688, %v1728
    %v1730 = vpop.f32.mrb[0].mxu0
    %1731 = vdwg.mxu0
    %1732 = vst [vmem:[%s7] sm:$0xff] %v1726
    %1733 = vst [vmem:[%s7 + $0x8] sm:$0xff] %v1729
  $region37: #{atari_a2c_forward.5} parent=0 // pred_fallthru
    _
  // Predicated region
  $region38: #{atari_a2c_forward.5} parent=0 // pred_check
    _
  $region39: #{atari_a2c_forward.5} parent=0 // pred_check_branch
    %1735 = sbr.rel (0) target = $region41
  $region40: #{atari_a2c_forward.5} parent=0 // pred_region
    _
  $region41: #{atari_a2c_forward.5} parent=0 // pred_fallthru
    _
  // Predicated region
  $region42: #{atari_a2c_forward.5} parent=0 // pred_check
    _
  $region43: #{atari_a2c_forward.5} parent=0 // pred_check_branch
    %1737 = sbr.rel (0) target = $region45
  $region44: #{atari_a2c_forward.5} parent=0 // pred_region
    _
  $region45: #{atari_a2c_forward.5} parent=0 // pred_fallthru
    _

</llo_original>
